<compile_context>
chip_gen: v6e
topology: v6e:2x2x1
jax: 0.10.0
libtpu: 0.0.40
codegen_flags: <defaults>
</compile_context>

<pallas_src>
import jax
import jax.numpy as jnp
from jax.experimental import pallas as pl
from jax.experimental.pallas import tpu as pltpu

INPUT_LEN = 300
DIMS = [INPUT_LEN, 256, 128, 64, 128, 256, INPUT_LEN]
COMPUTE_DTYPE = jnp.bfloat16          # MXU operand + activation I/O dtype
ACCUM_DTYPE = jnp.float32             # matmul accumulation / VPU dtype


def _autoencoder_kernel(x_ref,
                        w1, b1, w2, b2, w34, b34, w5, b5, w6, b6,
                        o_ref):
    """Whole MLP for one (TB, 300) batch tile; intermediates never leave VMEM."""
    h = x_ref[...]                                           # (TB, 300) bf16

    # encoder layer 1: 300 -> 256, ReLU
    h = jnp.dot(h, w1[...], preferred_element_type=ACCUM_DTYPE) + b1[...]
    h = jnp.maximum(h, 0.0)

    # encoder layer 2: 256 -> 128, ReLU
    h = jnp.dot(h.astype(COMPUTE_DTYPE), w2[...],
                preferred_element_type=ACCUM_DTYPE) + b2[...]
    h = jnp.maximum(h, 0.0)

    # fused encoder layer 3 + decoder layer 1: 128 -> (64) -> 128
    # (no activation between them, so one 128x128 matmul), then ReLU
    h = jnp.dot(h.astype(COMPUTE_DTYPE), w34[...],
                preferred_element_type=ACCUM_DTYPE) + b34[...]
    h = jnp.maximum(h, 0.0)

    # decoder layer 2: 128 -> 256, ReLU
    h = jnp.dot(h.astype(COMPUTE_DTYPE), w5[...],
                preferred_element_type=ACCUM_DTYPE) + b5[...]
    h = jnp.maximum(h, 0.0)

    # decoder layer 3: 256 -> 300, Tanh
    h = jnp.dot(h.astype(COMPUTE_DTYPE), w6[...],
                preferred_element_type=ACCUM_DTYPE) + b6[...]
    o_ref[...] = jnp.tanh(h).astype(o_ref.dtype)


def _prepare_params(params):
    """Fuse W3@W4 (in f32), cast weights to bf16, keep biases f32."""
    (w1, b1), (w2, b2), (w3, b3), (w4, b4), (w5, b5), (w6, b6) = params

    # algebraic fusion of the activation-free 128->64->128 pair (in f32)
    w34 = w3 @ w4                              # (128, 128)
    b34 = b3 @ w4 + b4                         # (1, 128)

    weights = [w1, w2, w34, w5, w6]
    biases = [b1, b2, b34, b5, b6]

    flat = []
    for w, b in zip(weights, biases):
        flat.append(w.astype(COMPUTE_DTYPE))
        flat.append(b.astype(ACCUM_DTYPE))
    return flat


def simple_autoencoder_forward(x, params, *, tb=1024):
    """x: (B, 300) float; params: [(W, b)] with W:(in,out) f32, b:(1,out) f32.

    Returns (B, 300) bf16 (tanh output, |v| <= 1, bf16 rel err ~3e-3).
    tb: max batch tile; the wrapper shrinks it so the parallel grid always has
    >= 2 steps (megacore on v7x, DMA/compute overlap everywhere).
    """
    B, F = x.shape
    assert F == INPUT_LEN
    flat_params = _prepare_params(params)

    # bf16 activation I/O.  Ideally the upstream producer already emits bf16
    # so this cast fuses away instead of being a standalone HBM pass.
    if x.dtype != COMPUTE_DTYPE:
        x = x.astype(COMPUTE_DTYPE)

    # Batch tile: multiple of 16 (bf16 sublane packing), large enough to
    # amortize per-step overhead, but keep >= 2 grid steps when B permits.
    tb_eff = max(16, (min(tb, B) // 16) * 16)
    if pl.cdiv(B, tb_eff) < 2 and B >= 32:
        tb_eff = max(16, ((-(-B // 2) + 15) // 16) * 16)
    grid = (pl.cdiv(B, tb_eff),)
    # NOTE: if B is not a multiple of tb_eff the trailing block is ragged;
    # rows are independent, so out-of-bounds rows are just masked on store.

    x_spec = pl.BlockSpec((tb_eff, INPUT_LEN), lambda i: (i, 0))
    out_spec = pl.BlockSpec((tb_eff, INPUT_LEN), lambda i: (i, 0))
    # Weights/biases: full-array blocks with a constant index_map -> DMA'd
    # once and VMEM-resident across the whole grid.
    param_specs = [pl.BlockSpec(p.shape, lambda i: (0, 0)) for p in flat_params]

    out = pl.pallas_call(
        _autoencoder_kernel,
        out_shape=jax.ShapeDtypeStruct((B, INPUT_LEN), COMPUTE_DTYPE),
        grid_spec=pl.GridSpec(
            grid=grid,
            in_specs=[x_spec] + param_specs,
            out_specs=out_spec,
        ),
        compiler_params=pltpu.CompilerParams(
            dimension_semantics=("parallel",),
            # explicit scoped-VMEM budget: covers v5e's 16 MiB default while
            # staying well under every generation's physical VMEM.
            vmem_limit_bytes=32 * 1024 * 1024),
    )(x, *flat_params)

    return out


def init_params(key):
    """Deterministic init mimicking nn.Linear's U(-1/sqrt(fan_in), 1/sqrt(fan_in))."""
    params = []
    for i in range(len(DIMS) - 1):
        fan_in, fan_out = DIMS[i], DIMS[i + 1]
        key, kw, kb = jax.random.split(key, 3)
        bound = 1.0 / jnp.sqrt(fan_in)
        w = jax.random.uniform(kw, (fan_in, fan_out), jnp.float32, -bound, bound)
        b = jax.random.uniform(kb, (1, fan_out), jnp.float32, -bound, bound)
        params.append((w, b))
    return params


def reference_forward(x, params):
    """Pure f32, unfused JAX reference matching the PyTorch module."""
    h = x
    for idx, (w, b) in enumerate(params):
        h = h @ w + b
        if idx in (0, 1, 3, 4):          # ReLU after layers 1, 2, 4, 5
            h = jnp.maximum(h, 0.0)
    return jnp.tanh(h)                    # final Tanh

# TODO(synk): training path (MSELoss + Adam in train_) is host-side logic, not
# part of the forward pass; only inference is implemented as a kernel.

if __name__ == "__main__":
    key = jax.random.PRNGKey(0)
    key, kx = jax.random.split(key)

    B = 512                               # wrapper splits this into a 2-step parallel grid
    x = jax.random.normal(kx, (B, INPUT_LEN), jnp.float32)
    params = init_params(key)

    out = simple_autoencoder_forward(x, params)
    out = jax.block_until_ready(out)

    ref = reference_forward(x, params)
    assert out.shape == (B, INPUT_LEN)
    assert out.dtype == COMPUTE_DTYPE
    # bf16 activations/operands + fused W3@W4 => compare to f32 reference loosely
    assert jnp.allclose(out.astype(jnp.float32), ref, atol=5e-2, rtol=5e-2), \
        "mismatch vs JAX reference"

    print("KERNEL_OK")
</pallas_src>

<mosaic_0001>
module attributes {stable_mosaic.version = 11 : i64} {
  func.func @_autoencoder_kernel(%arg0: i32, %arg1: memref<256x300xbf16, #tpu.memory_space<vmem>>, %arg2: memref<300x256xbf16, #tpu.memory_space<vmem>>, %arg3: memref<1x256xf32, #tpu.memory_space<vmem>>, %arg4: memref<256x128xbf16, #tpu.memory_space<vmem>>, %arg5: memref<1x128xf32, #tpu.memory_space<vmem>>, %arg6: memref<128x128xbf16, #tpu.memory_space<vmem>>, %arg7: memref<1x128xf32, #tpu.memory_space<vmem>>, %arg8: memref<128x256xbf16, #tpu.memory_space<vmem>>, %arg9: memref<1x256xf32, #tpu.memory_space<vmem>>, %arg10: memref<256x300xbf16, #tpu.memory_space<vmem>>, %arg11: memref<1x300xf32, #tpu.memory_space<vmem>>, %arg12: memref<256x300xbf16, #tpu.memory_space<vmem>>) attributes {dimension_semantics = [#tpu.dimension_semantics<parallel>], iteration_bounds = array<i64: 2>, scalar_prefetch = 0 : i64, scratch_operands = 0 : i64, tpu.core_type = #tpu.core_type<tc>, window_params = [{transform_indices = @transform_0, window_bounds = array<i64: 256, 300>}, {pipeline_mode = #tpu.pipeline_mode<synchronous>, transform_indices = @transform_1, window_bounds = array<i64: 300, 256>}, {pipeline_mode = #tpu.pipeline_mode<synchronous>, transform_indices = @transform_2, window_bounds = array<i64: 1, 256>}, {pipeline_mode = #tpu.pipeline_mode<synchronous>, transform_indices = @transform_3, window_bounds = array<i64: 256, 128>}, {pipeline_mode = #tpu.pipeline_mode<synchronous>, transform_indices = @transform_4, window_bounds = array<i64: 1, 128>}, {pipeline_mode = #tpu.pipeline_mode<synchronous>, transform_indices = @transform_5, window_bounds = array<i64: 128, 128>}, {pipeline_mode = #tpu.pipeline_mode<synchronous>, transform_indices = @transform_6, window_bounds = array<i64: 1, 128>}, {pipeline_mode = #tpu.pipeline_mode<synchronous>, transform_indices = @transform_7, window_bounds = array<i64: 128, 256>}, {pipeline_mode = #tpu.pipeline_mode<synchronous>, transform_indices = @transform_8, window_bounds = array<i64: 1, 256>}, {pipeline_mode = #tpu.pipeline_mode<synchronous>, transform_indices = @transform_9, window_bounds = array<i64: 256, 300>}, {pipeline_mode = #tpu.pipeline_mode<synchronous>, transform_indices = @transform_10, window_bounds = array<i64: 1, 300>}, {transform_indices = @transform_11, window_bounds = array<i64: 256, 300>}]} {
    %c0 = arith.constant 0 : index
    %c0_0 = arith.constant 0 : index
    %0 = vector.load %arg1[%c0, %c0_0] : memref<256x300xbf16, #tpu.memory_space<vmem>>, vector<256x300xbf16>
    %c0_1 = arith.constant 0 : index
    %c0_2 = arith.constant 0 : index
    %1 = vector.load %arg2[%c0_1, %c0_2] : memref<300x256xbf16, #tpu.memory_space<vmem>>, vector<300x256xbf16>
    %cst = arith.constant dense<0.000000e+00> : vector<256x256xf32>
    %2 = tpu.matmul %0, %1, %cst {dimension_numbers = #tpu.dot_dimension_numbers<[1], [0], [0], [1], [0, 0, 1, 1], [], []>} : vector<256x300xbf16>, vector<300x256xbf16>, vector<256x256xf32> -> vector<256x256xf32>
    %c0_3 = arith.constant 0 : index
    %c0_4 = arith.constant 0 : index
    %3 = vector.load %arg3[%c0_3, %c0_4] : memref<1x256xf32, #tpu.memory_space<vmem>>, vector<1x256xf32>
    %4 = vector.broadcast %3 : vector<1x256xf32> to vector<256x256xf32>
    %5 = arith.addf %2, %4 : vector<256x256xf32>
    %cst_5 = arith.constant 0.000000e+00 : f32
    %6 = vector.broadcast %cst_5 : f32 to vector<256x256xf32>
    %7 = arith.maximumf %5, %6 : vector<256x256xf32>
    %8 = arith.truncf %7 : vector<256x256xf32> to vector<256x256xbf16>
    %c0_6 = arith.constant 0 : index
    %c0_7 = arith.constant 0 : index
    %9 = vector.load %arg4[%c0_6, %c0_7] : memref<256x128xbf16, #tpu.memory_space<vmem>>, vector<256x128xbf16>
    %cst_8 = arith.constant dense<0.000000e+00> : vector<256x128xf32>
    %10 = tpu.matmul %8, %9, %cst_8 {dimension_numbers = #tpu.dot_dimension_numbers<[1], [0], [0], [1], [0, 0, 1, 1], [], []>} : vector<256x256xbf16>, vector<256x128xbf16>, vector<256x128xf32> -> vector<256x128xf32>
    %c0_9 = arith.constant 0 : index
    %c0_10 = arith.constant 0 : index
    %11 = vector.load %arg5[%c0_9, %c0_10] : memref<1x128xf32, #tpu.memory_space<vmem>>, vector<1x128xf32>
    %12 = vector.broadcast %11 : vector<1x128xf32> to vector<256x128xf32>
    %13 = arith.addf %10, %12 : vector<256x128xf32>
    %cst_11 = arith.constant 0.000000e+00 : f32
    %14 = vector.broadcast %cst_11 : f32 to vector<256x128xf32>
    %15 = arith.maximumf %13, %14 : vector<256x128xf32>
    %16 = arith.truncf %15 : vector<256x128xf32> to vector<256x128xbf16>
    %c0_12 = arith.constant 0 : index
    %c0_13 = arith.constant 0 : index
    %17 = vector.load %arg6[%c0_12, %c0_13] : memref<128x128xbf16, #tpu.memory_space<vmem>>, vector<128x128xbf16>
    %cst_14 = arith.constant dense<0.000000e+00> : vector<256x128xf32>
    %18 = tpu.matmul %16, %17, %cst_14 {dimension_numbers = #tpu.dot_dimension_numbers<[1], [0], [0], [1], [0, 0, 1, 1], [], []>} : vector<256x128xbf16>, vector<128x128xbf16>, vector<256x128xf32> -> vector<256x128xf32>
    %c0_15 = arith.constant 0 : index
    %c0_16 = arith.constant 0 : index
    %19 = vector.load %arg7[%c0_15, %c0_16] : memref<1x128xf32, #tpu.memory_space<vmem>>, vector<1x128xf32>
    %20 = vector.broadcast %19 : vector<1x128xf32> to vector<256x128xf32>
    %21 = arith.addf %18, %20 : vector<256x128xf32>
    %cst_17 = arith.constant 0.000000e+00 : f32
    %22 = vector.broadcast %cst_17 : f32 to vector<256x128xf32>
    %23 = arith.maximumf %21, %22 : vector<256x128xf32>
    %24 = arith.truncf %23 : vector<256x128xf32> to vector<256x128xbf16>
    %c0_18 = arith.constant 0 : index
    %c0_19 = arith.constant 0 : index
    %25 = vector.load %arg8[%c0_18, %c0_19] : memref<128x256xbf16, #tpu.memory_space<vmem>>, vector<128x256xbf16>
    %cst_20 = arith.constant dense<0.000000e+00> : vector<256x256xf32>
    %26 = tpu.matmul %24, %25, %cst_20 {dimension_numbers = #tpu.dot_dimension_numbers<[1], [0], [0], [1], [0, 0, 1, 1], [], []>} : vector<256x128xbf16>, vector<128x256xbf16>, vector<256x256xf32> -> vector<256x256xf32>
    %c0_21 = arith.constant 0 : index
    %c0_22 = arith.constant 0 : index
    %27 = vector.load %arg9[%c0_21, %c0_22] : memref<1x256xf32, #tpu.memory_space<vmem>>, vector<1x256xf32>
    %28 = vector.broadcast %27 : vector<1x256xf32> to vector<256x256xf32>
    %29 = arith.addf %26, %28 : vector<256x256xf32>
    %cst_23 = arith.constant 0.000000e+00 : f32
    %30 = vector.broadcast %cst_23 : f32 to vector<256x256xf32>
    %31 = arith.maximumf %29, %30 : vector<256x256xf32>
    %32 = arith.truncf %31 : vector<256x256xf32> to vector<256x256xbf16>
    %c0_24 = arith.constant 0 : index
    %c0_25 = arith.constant 0 : index
    %33 = vector.load %arg10[%c0_24, %c0_25] : memref<256x300xbf16, #tpu.memory_space<vmem>>, vector<256x300xbf16>
    %cst_26 = arith.constant dense<0.000000e+00> : vector<256x300xf32>
    %34 = tpu.matmul %32, %33, %cst_26 {dimension_numbers = #tpu.dot_dimension_numbers<[1], [0], [0], [1], [0, 0, 1, 1], [], []>} : vector<256x256xbf16>, vector<256x300xbf16>, vector<256x300xf32> -> vector<256x300xf32>
    %c0_27 = arith.constant 0 : index
    %c0_28 = arith.constant 0 : index
    %35 = vector.load %arg11[%c0_27, %c0_28] : memref<1x300xf32, #tpu.memory_space<vmem>>, vector<1x300xf32>
    %36 = vector.broadcast %35 : vector<1x300xf32> to vector<256x300xf32>
    %37 = arith.addf %34, %36 : vector<256x300xf32>
    %38 = math.tanh %37 : vector<256x300xf32>
    %39 = arith.truncf %38 : vector<256x300xf32> to vector<256x300xbf16>
    %c0_29 = arith.constant 0 : index
    %c0_30 = arith.constant 0 : index
    %40 = vector.load %arg12[%c0_29, %c0_30] : memref<256x300xbf16, #tpu.memory_space<vmem>>, vector<256x300xbf16>
    tpu.vector_store %arg12[%c0_29, %c0_30], %39 {strides = array<i32>} : memref<256x300xbf16, #tpu.memory_space<vmem>>, vector<256x300xbf16>,
    return
  }
  func.func @transform_0(%arg0: i32) -> (i32, i32) {
    %c0_i32 = arith.constant 0 : i32
    %c0_i32_0 = arith.constant 0 : i32
    return %arg0, %c0_i32 : i32, i32
  }
  func.func @transform_1(%arg0: i32) -> (i32, i32) {
    %c0_i32 = arith.constant 0 : i32
    %c0_i32_0 = arith.constant 0 : i32
    %c0_i32_1 = arith.constant 0 : i32
    return %c0_i32, %c0_i32_0 : i32, i32
  }
  func.func @transform_2(%arg0: i32) -> (i32, i32) {
    %c0_i32 = arith.constant 0 : i32
    %c0_i32_0 = arith.constant 0 : i32
    %c0_i32_1 = arith.constant 0 : i32
    return %c0_i32, %c0_i32_0 : i32, i32
  }
  func.func @transform_3(%arg0: i32) -> (i32, i32) {
    %c0_i32 = arith.constant 0 : i32
    %c0_i32_0 = arith.constant 0 : i32
    %c0_i32_1 = arith.constant 0 : i32
    return %c0_i32, %c0_i32_0 : i32, i32
  }
  func.func @transform_4(%arg0: i32) -> (i32, i32) {
    %c0_i32 = arith.constant 0 : i32
    %c0_i32_0 = arith.constant 0 : i32
    %c0_i32_1 = arith.constant 0 : i32
    return %c0_i32, %c0_i32_0 : i32, i32
  }
  func.func @transform_5(%arg0: i32) -> (i32, i32) {
    %c0_i32 = arith.constant 0 : i32
    %c0_i32_0 = arith.constant 0 : i32
    %c0_i32_1 = arith.constant 0 : i32
    return %c0_i32, %c0_i32_0 : i32, i32
  }
  func.func @transform_6(%arg0: i32) -> (i32, i32) {
    %c0_i32 = arith.constant 0 : i32
    %c0_i32_0 = arith.constant 0 : i32
    %c0_i32_1 = arith.constant 0 : i32
    return %c0_i32, %c0_i32_0 : i32, i32
  }
  func.func @transform_7(%arg0: i32) -> (i32, i32) {
    %c0_i32 = arith.constant 0 : i32
    %c0_i32_0 = arith.constant 0 : i32
    %c0_i32_1 = arith.constant 0 : i32
    return %c0_i32, %c0_i32_0 : i32, i32
  }
  func.func @transform_8(%arg0: i32) -> (i32, i32) {
    %c0_i32 = arith.constant 0 : i32
    %c0_i32_0 = arith.constant 0 : i32
    %c0_i32_1 = arith.constant 0 : i32
    return %c0_i32, %c0_i32_0 : i32, i32
  }
  func.func @transform_9(%arg0: i32) -> (i32, i32) {
    %c0_i32 = arith.constant 0 : i32
    %c0_i32_0 = arith.constant 0 : i32
    %c0_i32_1 = arith.constant 0 : i32
    return %c0_i32, %c0_i32_0 : i32, i32
  }
  func.func @transform_10(%arg0: i32) -> (i32, i32) {
    %c0_i32 = arith.constant 0 : i32
    %c0_i32_0 = arith.constant 0 : i32
    %c0_i32_1 = arith.constant 0 : i32
    return %c0_i32, %c0_i32_0 : i32, i32
  }
  func.func @transform_11(%arg0: i32) -> (i32, i32) {
    %c0_i32 = arith.constant 0 : i32
    %c0_i32_0 = arith.constant 0 : i32
    return %arg0, %c0_i32 : i32, i32
  }
}

</mosaic_0001>

<llo_original>
// kernel: tpu_custom_call.1
$region0: #{tpu_custom_call.1}
  #allocation0 [shape = 'u32[]', space=smem, size = 0x4, offset = 0x4, fixed_abs, tag = 'smem constant byte address 0x4 - core index']
  #allocation1 [shape = 'u32[144,128]{1,0:T(1,128)}', space=vmem, size = 0x12000, scoped, tag = 'internal scratch']
  %s0 = inlined_call_operand.vmem [shape: bf16[512,300], index: 0, kind: input, shape index: {}]
  %s1 = inlined_call_operand.vmem [shape: bf16[300,256], index: 1, kind: input, shape index: {}]
  %s2 = inlined_call_operand.vmem [shape: f32[1,256], index: 2, kind: input, shape index: {}]
  %s3 = inlined_call_operand.vmem [shape: bf16[256,128], index: 3, kind: input, shape index: {}]
  %s4 = inlined_call_operand.vmem [shape: f32[1,128], index: 4, kind: input, shape index: {}]
  %s5 = inlined_call_operand.vmem [shape: bf16[128,128], index: 5, kind: input, shape index: {}]
  %s6 = inlined_call_operand.vmem [shape: f32[1,128], index: 6, kind: input, shape index: {}]
  %s7 = inlined_call_operand.vmem [shape: bf16[128,256], index: 7, kind: input, shape index: {}]
  %s8 = inlined_call_operand.vmem [shape: f32[1,256], index: 8, kind: input, shape index: {}]
  %s9 = inlined_call_operand.vmem [shape: bf16[256,300], index: 9, kind: input, shape index: {}]
  %s10 = inlined_call_operand.vmem [shape: f32[1,300], index: 10, kind: input, shape index: {}]
  %s11 = inlined_call_operand.vmem [shape: bf16[512,300], index: 11, kind: output, shape index: {}]
  %s12 = sld [smem:[#allocation0]]
  $region77: #{tpu_custom_call.1} parent=0
    _
  %s14 = ssub.s32 1, %s12
  %s15 = scalar_select 0, %s14, %s12
  loop: start=0, step=1, limit=4
  $region2: #{tpu_custom_call.1} parent=0 // loop_pre_header
    _
  $region3: #{tpu_custom_call.1} parent=0 // loop_header
    %s17 = sphi 0, %s21
    %p18 = scmp.ge.s32.totalorder %s17, 4
    %s27 = sphi 0, %s29
    %s30 = sphi 0, %s27
    %s31 = sphi 0, %s30
    %s47 = sphi 0, %s31
    %s51 = sphi 0, %s51
    %s53 = sphi 0, %s51
    %s54 = sphi 0, %s53
    %s68 = sphi 0, %s54
    %s72 = sphi 0, %s72
    %s74 = sphi 0, %s72
    %s75 = sphi 0, %s74
    %s89 = sphi 0, %s75
    %s93 = sphi 0, %s93
    %s95 = sphi 0, %s93
    %s96 = sphi 0, %s95
    %s110 = sphi 0, %s96
    %s114 = sphi 0, %s114
    %s116 = sphi 0, %s114
    %s117 = sphi 0, %s116
    %s131 = sphi 0, %s117
    %s135 = sphi 0, %s135
    %s137 = sphi 0, %s135
    %s138 = sphi 0, %s137
    %s152 = sphi 0, %s138
    %s156 = sphi 0, %s156
    %s158 = sphi 0, %s156
    %s159 = sphi 0, %s158
    %s173 = sphi 0, %s159
    %s177 = sphi 0, %s177
    %s179 = sphi 0, %s177
    %s180 = sphi 0, %s179
    %s194 = sphi 0, %s180
    %s198 = sphi 0, %s198
    %s200 = sphi 0, %s198
    %s201 = sphi 0, %s200
    %s215 = sphi 0, %s201
    %s219 = sphi 0, %s219
    %s221 = sphi 0, %s219
    %s222 = sphi 0, %s221
    %s236 = sphi 0, %s222
    %s240 = sphi 0, %s240
    %s242 = sphi 0, %s240
    %s243 = sphi 0, %s242
    %s257 = sphi 0, %s243
    %s263 = sphi 0, %s265
    %s266 = sphi 0, %s263
    %s267 = sphi 0, %s266
    %s283 = sphi 0, %s267
  $region4: #{tpu_custom_call.1} parent=0 // loop_header_branch
    %20 = sbr.rel (%p18) target = $region8
  $region5: #{tpu_custom_call.1} parent=0 // loop_body
    %s22 = ssub.s32 %s17, 1
    %s23 = ssub.s32 %s17, 2
    %s24 = sadd.s32 %s17, 1
    %s25 = ssub.s32 %s17, %s24
    %p26 = scmp.eq.s32.totalorder %s25, 0
    %s28 = sadd.s32 %s27, 1
    %s29 = scalar_select %p26, %s27, %s28
    %p32 = pneg %p26
    %p33 = scmp.eq.s32.totalorder %s17, 1
    %p34 = por %p32, %p33
    %p35 = scmp.ne.s32.totalorder %s27, %s30
    %p36 = scmp.eq.s32.totalorder %s17, 0
    %p37 = por %p35, %p36
    %p38 = scmp.ne.s32.totalorder %s27, %s30
    %p39 = scmp.eq.s32.totalorder %s22, 1
    %p40 = por %p38, %p39
    %p41 = scmp.ne.s32.totalorder %s30, %s31
    %p42 = scmp.eq.s32.totalorder %s22, 0
    %p43 = por %p41, %p42
    %p44 = scmp.ne.s32.totalorder %s30, %s31
    %p45 = scmp.eq.s32.totalorder %s23, 1
    %p46 = por %p44, %p45
    %p48 = scmp.ne.s32.totalorder %s31, %s47
    %p49 = scmp.eq.s32.totalorder %s23, 0
    %p50 = por %p48, %p49
    %s52 = sadd.s32 %s51, 1
    %p55 = scmp.eq.s32.totalorder %s17, 1
    %p56 = scmp.ne.s32.totalorder %s51, %s53
    %p57 = scmp.eq.s32.totalorder %s17, 0
    %p58 = por %p56, %p57
    %p59 = scmp.ne.s32.totalorder %s51, %s53
    %p60 = scmp.eq.s32.totalorder %s22, 1
    %p61 = por %p59, %p60
    %p62 = scmp.ne.s32.totalorder %s53, %s54
    %p63 = scmp.eq.s32.totalorder %s22, 0
    %p64 = por %p62, %p63
    %p65 = scmp.ne.s32.totalorder %s53, %s54
    %p66 = scmp.eq.s32.totalorder %s23, 1
    %p67 = por %p65, %p66
    %p69 = scmp.ne.s32.totalorder %s54, %s68
    %p70 = scmp.eq.s32.totalorder %s23, 0
    %p71 = por %p69, %p70
    %s73 = sadd.s32 %s72, 1
    %p76 = scmp.eq.s32.totalorder %s17, 1
    %p77 = scmp.ne.s32.totalorder %s72, %s74
    %p78 = scmp.eq.s32.totalorder %s17, 0
    %p79 = por %p77, %p78
    %p80 = scmp.ne.s32.totalorder %s72, %s74
    %p81 = scmp.eq.s32.totalorder %s22, 1
    %p82 = por %p80, %p81
    %p83 = scmp.ne.s32.totalorder %s74, %s75
    %p84 = scmp.eq.s32.totalorder %s22, 0
    %p85 = por %p83, %p84
    %p86 = scmp.ne.s32.totalorder %s74, %s75
    %p87 = scmp.eq.s32.totalorder %s23, 1
    %p88 = por %p86, %p87
    %p90 = scmp.ne.s32.totalorder %s75, %s89
    %p91 = scmp.eq.s32.totalorder %s23, 0
    %p92 = por %p90, %p91
    %s94 = sadd.s32 %s93, 1
    %p97 = scmp.eq.s32.totalorder %s17, 1
    %p98 = scmp.ne.s32.totalorder %s93, %s95
    %p99 = scmp.eq.s32.totalorder %s17, 0
    %p100 = por %p98, %p99
    %p101 = scmp.ne.s32.totalorder %s93, %s95
    %p102 = scmp.eq.s32.totalorder %s22, 1
    %p103 = por %p101, %p102
    %p104 = scmp.ne.s32.totalorder %s95, %s96
    %p105 = scmp.eq.s32.totalorder %s22, 0
    %p106 = por %p104, %p105
    %p107 = scmp.ne.s32.totalorder %s95, %s96
    %p108 = scmp.eq.s32.totalorder %s23, 1
    %p109 = por %p107, %p108
    %p111 = scmp.ne.s32.totalorder %s96, %s110
    %p112 = scmp.eq.s32.totalorder %s23, 0
    %p113 = por %p111, %p112
    %s115 = sadd.s32 %s114, 1
    %p118 = scmp.eq.s32.totalorder %s17, 1
    %p119 = scmp.ne.s32.totalorder %s114, %s116
    %p120 = scmp.eq.s32.totalorder %s17, 0
    %p121 = por %p119, %p120
    %p122 = scmp.ne.s32.totalorder %s114, %s116
    %p123 = scmp.eq.s32.totalorder %s22, 1
    %p124 = por %p122, %p123
    %p125 = scmp.ne.s32.totalorder %s116, %s117
    %p126 = scmp.eq.s32.totalorder %s22, 0
    %p127 = por %p125, %p126
    %p128 = scmp.ne.s32.totalorder %s116, %s117
    %p129 = scmp.eq.s32.totalorder %s23, 1
    %p130 = por %p128, %p129
    %p132 = scmp.ne.s32.totalorder %s117, %s131
    %p133 = scmp.eq.s32.totalorder %s23, 0
    %p134 = por %p132, %p133
    %s136 = sadd.s32 %s135, 1
    %p139 = scmp.eq.s32.totalorder %s17, 1
    %p140 = scmp.ne.s32.totalorder %s135, %s137
    %p141 = scmp.eq.s32.totalorder %s17, 0
    %p142 = por %p140, %p141
    %p143 = scmp.ne.s32.totalorder %s135, %s137
    %p144 = scmp.eq.s32.totalorder %s22, 1
    %p145 = por %p143, %p144
    %p146 = scmp.ne.s32.totalorder %s137, %s138
    %p147 = scmp.eq.s32.totalorder %s22, 0
    %p148 = por %p146, %p147
    %p149 = scmp.ne.s32.totalorder %s137, %s138
    %p150 = scmp.eq.s32.totalorder %s23, 1
    %p151 = por %p149, %p150
    %p153 = scmp.ne.s32.totalorder %s138, %s152
    %p154 = scmp.eq.s32.totalorder %s23, 0
    %p155 = por %p153, %p154
    %s157 = sadd.s32 %s156, 1
    %p160 = scmp.eq.s32.totalorder %s17, 1
    %p161 = scmp.ne.s32.totalorder %s156, %s158
    %p162 = scmp.eq.s32.totalorder %s17, 0
    %p163 = por %p161, %p162
    %p164 = scmp.ne.s32.totalorder %s156, %s158
    %p165 = scmp.eq.s32.totalorder %s22, 1
    %p166 = por %p164, %p165
    %p167 = scmp.ne.s32.totalorder %s158, %s159
    %p168 = scmp.eq.s32.totalorder %s22, 0
    %p169 = por %p167, %p168
    %p170 = scmp.ne.s32.totalorder %s158, %s159
    %p171 = scmp.eq.s32.totalorder %s23, 1
    %p172 = por %p170, %p171
    %p174 = scmp.ne.s32.totalorder %s159, %s173
    %p175 = scmp.eq.s32.totalorder %s23, 0
    %p176 = por %p174, %p175
    %s178 = sadd.s32 %s177, 1
    %p181 = scmp.eq.s32.totalorder %s17, 1
    %p182 = scmp.ne.s32.totalorder %s177, %s179
    %p183 = scmp.eq.s32.totalorder %s17, 0
    %p184 = por %p182, %p183
    %p185 = scmp.ne.s32.totalorder %s177, %s179
    %p186 = scmp.eq.s32.totalorder %s22, 1
    %p187 = por %p185, %p186
    %p188 = scmp.ne.s32.totalorder %s179, %s180
    %p189 = scmp.eq.s32.totalorder %s22, 0
    %p190 = por %p188, %p189
    %p191 = scmp.ne.s32.totalorder %s179, %s180
    %p192 = scmp.eq.s32.totalorder %s23, 1
    %p193 = por %p191, %p192
    %p195 = scmp.ne.s32.totalorder %s180, %s194
    %p196 = scmp.eq.s32.totalorder %s23, 0
    %p197 = por %p195, %p196
    %s199 = sadd.s32 %s198, 1
    %p202 = scmp.eq.s32.totalorder %s17, 1
    %p203 = scmp.ne.s32.totalorder %s198, %s200
    %p204 = scmp.eq.s32.totalorder %s17, 0
    %p205 = por %p203, %p204
    %p206 = scmp.ne.s32.totalorder %s198, %s200
    %p207 = scmp.eq.s32.totalorder %s22, 1
    %p208 = por %p206, %p207
    %p209 = scmp.ne.s32.totalorder %s200, %s201
    %p210 = scmp.eq.s32.totalorder %s22, 0
    %p211 = por %p209, %p210
    %p212 = scmp.ne.s32.totalorder %s200, %s201
    %p213 = scmp.eq.s32.totalorder %s23, 1
    %p214 = por %p212, %p213
    %p216 = scmp.ne.s32.totalorder %s201, %s215
    %p217 = scmp.eq.s32.totalorder %s23, 0
    %p218 = por %p216, %p217
    %s220 = sadd.s32 %s219, 1
    %p223 = scmp.eq.s32.totalorder %s17, 1
    %p224 = scmp.ne.s32.totalorder %s219, %s221
    %p225 = scmp.eq.s32.totalorder %s17, 0
    %p226 = por %p224, %p225
    %p227 = scmp.ne.s32.totalorder %s219, %s221
    %p228 = scmp.eq.s32.totalorder %s22, 1
    %p229 = por %p227, %p228
    %p230 = scmp.ne.s32.totalorder %s221, %s222
    %p231 = scmp.eq.s32.totalorder %s22, 0
    %p232 = por %p230, %p231
    %p233 = scmp.ne.s32.totalorder %s221, %s222
    %p234 = scmp.eq.s32.totalorder %s23, 1
    %p235 = por %p233, %p234
    %p237 = scmp.ne.s32.totalorder %s222, %s236
    %p238 = scmp.eq.s32.totalorder %s23, 0
    %p239 = por %p237, %p238
    %s241 = sadd.s32 %s240, 1
    %p244 = scmp.eq.s32.totalorder %s17, 1
    %p245 = scmp.ne.s32.totalorder %s240, %s242
    %p246 = scmp.eq.s32.totalorder %s17, 0
    %p247 = por %p245, %p246
    %p248 = scmp.ne.s32.totalorder %s240, %s242
    %p249 = scmp.eq.s32.totalorder %s22, 1
    %p250 = por %p248, %p249
    %p251 = scmp.ne.s32.totalorder %s242, %s243
    %p252 = scmp.eq.s32.totalorder %s22, 0
    %p253 = por %p251, %p252
    %p254 = scmp.ne.s32.totalorder %s242, %s243
    %p255 = scmp.eq.s32.totalorder %s23, 1
    %p256 = por %p254, %p255
    %p258 = scmp.ne.s32.totalorder %s243, %s257
    %p259 = scmp.eq.s32.totalorder %s23, 0
    %p260 = por %p258, %p259
    %s261 = ssub.s32 %s17, %s24
    %p262 = scmp.eq.s32.totalorder %s261, 0
    %s264 = sadd.s32 %s263, 1
    %s265 = scalar_select %p262, %s263, %s264
    %p268 = pneg %p262
    %p269 = scmp.eq.s32.totalorder %s17, 1
    %p270 = por %p268, %p269
    %p271 = scmp.ne.s32.totalorder %s263, %s266
    %p272 = scmp.eq.s32.totalorder %s17, 0
    %p273 = por %p271, %p272
    %p274 = scmp.ne.s32.totalorder %s263, %s266
    %p275 = scmp.eq.s32.totalorder %s22, 1
    %p276 = por %p274, %p275
    %p277 = scmp.ne.s32.totalorder %s266, %s267
    %p278 = scmp.eq.s32.totalorder %s22, 0
    %p279 = por %p277, %p278
    %p280 = scmp.ne.s32.totalorder %s266, %s267
    %p281 = scmp.eq.s32.totalorder %s23, 1
    %p282 = por %p280, %p281
    %p284 = scmp.ne.s32.totalorder %s267, %s283
    %p285 = scmp.eq.s32.totalorder %s23, 0
    %p286 = por %p284, %p285
    %p287 = scmp.le.s32.totalorder 1, %s17
    %p288 = scmp.lt.s32.totalorder %s17, 3
    %p289 = pnand %p287, %p288
    %p290 = pneg %p289
    // Predicated region
    $region9: #{tpu_custom_call.1} parent=5 // pred_check
      _
    $region10: #{tpu_custom_call.1} parent=5 // pred_check_branch
      %292 = sbr.rel (%p289) target = $region12
    $region11: #{tpu_custom_call.1} parent=5 // pred_region
      %s293 = ssub.s32 %s17, 1
      // Predicated region
      $region13: #{tpu_custom_call.1} parent=11 // pred_check
        %p294 = pneg %p64
      $region14: #{tpu_custom_call.1} parent=11 // pred_check_branch
        %296 = sbr.rel (%p294) target = $region16
      $region15: #{tpu_custom_call.1} parent=11 // pred_region
        _
      $region16: #{tpu_custom_call.1} parent=11 // pred_fallthru
        _
      // Predicated region
      $region17: #{tpu_custom_call.1} parent=11 // pred_check
        %p297 = pneg %p85
      $region18: #{tpu_custom_call.1} parent=11 // pred_check_branch
        %299 = sbr.rel (%p297) target = $region20
      $region19: #{tpu_custom_call.1} parent=11 // pred_region
        _
      $region20: #{tpu_custom_call.1} parent=11 // pred_fallthru
        _
      // Predicated region
      $region21: #{tpu_custom_call.1} parent=11 // pred_check
        %p300 = pneg %p106
      $region22: #{tpu_custom_call.1} parent=11 // pred_check_branch
        %302 = sbr.rel (%p300) target = $region24
      $region23: #{tpu_custom_call.1} parent=11 // pred_region
        _
      $region24: #{tpu_custom_call.1} parent=11 // pred_fallthru
        _
      // Predicated region
      $region25: #{tpu_custom_call.1} parent=11 // pred_check
        %p303 = pneg %p127
      $region26: #{tpu_custom_call.1} parent=11 // pred_check_branch
        %305 = sbr.rel (%p303) target = $region28
      $region27: #{tpu_custom_call.1} parent=11 // pred_region
        _
      $region28: #{tpu_custom_call.1} parent=11 // pred_fallthru
        _
      // Predicated region
      $region29: #{tpu_custom_call.1} parent=11 // pred_check
        %p306 = pneg %p148
      $region30: #{tpu_custom_call.1} parent=11 // pred_check_branch
        %308 = sbr.rel (%p306) target = $region32
      $region31: #{tpu_custom_call.1} parent=11 // pred_region
        _
      $region32: #{tpu_custom_call.1} parent=11 // pred_fallthru
        _
      // Predicated region
      $region33: #{tpu_custom_call.1} parent=11 // pred_check
        %p309 = pneg %p169
      $region34: #{tpu_custom_call.1} parent=11 // pred_check_branch
        %311 = sbr.rel (%p309) target = $region36
      $region35: #{tpu_custom_call.1} parent=11 // pred_region
        _
      $region36: #{tpu_custom_call.1} parent=11 // pred_fallthru
        _
      // Predicated region
      $region37: #{tpu_custom_call.1} parent=11 // pred_check
        %p312 = pneg %p190
      $region38: #{tpu_custom_call.1} parent=11 // pred_check_branch
        %314 = sbr.rel (%p312) target = $region40
      $region39: #{tpu_custom_call.1} parent=11 // pred_region
        _
      $region40: #{tpu_custom_call.1} parent=11 // pred_fallthru
        _
      // Predicated region
      $region41: #{tpu_custom_call.1} parent=11 // pred_check
        %p315 = pneg %p211
      $region42: #{tpu_custom_call.1} parent=11 // pred_check_branch
        %317 = sbr.rel (%p315) target = $region44
      $region43: #{tpu_custom_call.1} parent=11 // pred_region
        _
      $region44: #{tpu_custom_call.1} parent=11 // pred_fallthru
        _
      // Predicated region
      $region45: #{tpu_custom_call.1} parent=11 // pred_check
        %p318 = pneg %p232
      $region46: #{tpu_custom_call.1} parent=11 // pred_check_branch
        %320 = sbr.rel (%p318) target = $region48
      $region47: #{tpu_custom_call.1} parent=11 // pred_region
        _
      $region48: #{tpu_custom_call.1} parent=11 // pred_fallthru
        _
      // Predicated region
      $region49: #{tpu_custom_call.1} parent=11 // pred_check
        %p321 = pneg %p253
      $region50: #{tpu_custom_call.1} parent=11 // pred_check_branch
        %323 = sbr.rel (%p321) target = $region52
      $region51: #{tpu_custom_call.1} parent=11 // pred_region
        _
      $region52: #{tpu_custom_call.1} parent=11 // pred_fallthru
        _
    $region12: #{tpu_custom_call.1} parent=5 // pred_fallthru
      _
    %p324 = scmp.lt.s32.totalorder %s17, 2
    // Predicated region
    $region53: #{tpu_custom_call.1} parent=5 // pred_check
      %p325 = pneg %p324
    $region54: #{tpu_custom_call.1} parent=5 // pred_check_branch
      %327 = sbr.rel (%p325) target = $region56
    $region55: #{tpu_custom_call.1} parent=5 // pred_region
      // Predicated region
      $region57: #{tpu_custom_call.1} parent=55 // pred_check
        %p328 = pneg %p37
      $region58: #{tpu_custom_call.1} parent=55 // pred_check_branch
        %330 = sbr.rel (%p328) target = $region60
      $region59: #{tpu_custom_call.1} parent=55 // pred_region
        %s331 = smul.u32 32, %s17
        %p332 = scmp.lt.s32.totalorder %s331, 63
        %s333 = scalar_select %p332, %s331, 63
        %s334 = smul.addr %s333, 3
        %s335 = smul.addr %s334, 4
        %s336 = scalar_lea.vmem %s0, %s335
        %s337 = smul.u32 32, %s17
      $region60: #{tpu_custom_call.1} parent=55 // pred_fallthru
        _
    $region56: #{tpu_custom_call.1} parent=5 // pred_fallthru
      _
    %p338 = scmp.le.s32.totalorder 1, %s17
    %p339 = scmp.lt.s32.totalorder %s17, 3
    %p340 = pnand %p338, %p339
    %p341 = pneg %p340
    // Predicated region
    $region61: #{tpu_custom_call.1} parent=5 // pred_check
      _
    $region62: #{tpu_custom_call.1} parent=5 // pred_check_branch
      %343 = sbr.rel (%p340) target = $region64
    $region63: #{tpu_custom_call.1} parent=5 // pred_region
      %s344 = ssub.s32 %s17, 1
      %s345 = smul.u32 32, %s22
      %p346 = scmp.lt.s32.totalorder %s345, 63
      %s347 = scalar_select %p346, %s345, 63
      %s348 = smul.addr %s347, 3
      %s349 = smul.addr %s348, 4
      %s350 = scalar_lea.vmem %s0, %s349
      %p351 = pneg %p43
      %p352 = pneg %p40
      %p353 = pneg %p64
      %p354 = pneg %p61
      %p355 = pneg %p85
      %p356 = pneg %p82
      %p357 = pneg %p106
      %p358 = pneg %p103
      %p359 = pneg %p127
      %p360 = pneg %p124
      %p361 = pneg %p148
      %p362 = pneg %p145
      %p363 = pneg %p169
      %p364 = pneg %p166
      %p365 = pneg %p190
      %p366 = pneg %p187
      %p367 = pneg %p211
      %p368 = pneg %p208
      %p369 = pneg %p232
      %p370 = pneg %p229
      %p371 = pneg %p253
      %p372 = pneg %p250
      %p373 = pneg %p279
      %p374 = pneg %p276
      %s375 = smul.u32 32, %s22
      %p376 = scmp.lt.s32.totalorder %s375, 63
      %s377 = scalar_select %p376, %s375, 63
      %s378 = smul.addr %s377, 3
      %s379 = smul.addr %s378, 4
      %s380 = scalar_lea.vmem %s11, %s379
      %s381 = smul.u32 32, %s22
      %p382 = scmp.lt.s32.totalorder %s381, 63
      %s383 = scalar_select %p382, %s381, 63
      %s384 = smul.addr %s383, 3
      %s385 = smul.addr %s384, 4
      %s386 = scalar_lea.vmem %s0, %s385
      %s387 = smul.u32 32, %s22
      %s388 = smul.u32 32, %s22
      %p389 = scmp.lt.s32.totalorder %s388, 63
      %s390 = scalar_select %p389, %s388, 63
      %s391 = smul.addr %s390, 3
      %s392 = smul.addr %s391, 4
      %s393 = scalar_lea.vmem %s11, %s392
      %s394 = smul.u32 32, %s22
      %v396 = vld [vmem:[%s386] sm:$0xff]
      %v397 = vld [vmem:[%s386 + $0x8] sm:$0xf]
      %v398 = vld [vmem:[%s386 + $0xc] sm:$0xff]
      %v399 = vld [vmem:[%s386 + $0x14] sm:$0xf]
      %v400 = vld [vmem:[%s386 + $0x18] sm:$0xff]
      %v401 = vld [vmem:[%s386 + $0x20] sm:$0xf]
      %v402 = vld [vmem:[%s386 + $0x24] sm:$0xff]
      %v403 = vld [vmem:[%s386 + $0x2c] sm:$0xf]
      %v404 = vld [vmem:[%s386 + $0x30] sm:$0xff]
      %v405 = vld [vmem:[%s386 + $0x38] sm:$0xf]
      %v406 = vld [vmem:[%s386 + $0x3c] sm:$0xff]
      %v407 = vld [vmem:[%s386 + $0x44] sm:$0xf]
      %v408 = vld [vmem:[%s386 + $0x48] sm:$0xff]
      %v409 = vld [vmem:[%s386 + $0x50] sm:$0xf]
      %v410 = vld [vmem:[%s386 + $0x54] sm:$0xff]
      %v411 = vld [vmem:[%s386 + $0x5c] sm:$0xf]
      %v412 = vld [vmem:[%s386 + $0x60] sm:$0xff]
      %v413 = vld [vmem:[%s386 + $0x68] sm:$0xf]
      %v414 = vld [vmem:[%s386 + $0x6c] sm:$0xff]
      %v415 = vld [vmem:[%s386 + $0x74] sm:$0xf]
      %v416 = vld [vmem:[%s386 + $0x78] sm:$0xff]
      %v417 = vld [vmem:[%s386 + $0x80] sm:$0xf]
      %v418 = vld [vmem:[%s386 + $0x84] sm:$0xff]
      %v419 = vld [vmem:[%s386 + $0x8c] sm:$0xf]
      %v420 = vld [vmem:[%s386 + $0x90] sm:$0xff]
      %v421 = vld [vmem:[%s386 + $0x98] sm:$0xf]
      %v422 = vld [vmem:[%s386 + $0x9c] sm:$0xff]
      %v423 = vld [vmem:[%s386 + $0xa4] sm:$0xf]
      %v424 = vld [vmem:[%s386 + $0xa8] sm:$0xff]
      %v425 = vld [vmem:[%s386 + $0xb0] sm:$0xf]
      %v426 = vld [vmem:[%s386 + $0xb4] sm:$0xff]
      %v427 = vld [vmem:[%s386 + $0xbc] sm:$0xf]
      %v428 = vld [vmem:[%s386 + $0xc0] sm:$0xff]
      %v429 = vld [vmem:[%s386 + $0xc8] sm:$0xf]
      %v430 = vld [vmem:[%s386 + $0xcc] sm:$0xff]
      %v431 = vld [vmem:[%s386 + $0xd4] sm:$0xf]
      %v432 = vld [vmem:[%s386 + $0xd8] sm:$0xff]
      %v433 = vld [vmem:[%s386 + $0xe0] sm:$0xf]
      %v434 = vld [vmem:[%s386 + $0xe4] sm:$0xff]
      %v435 = vld [vmem:[%s386 + $0xec] sm:$0xf]
      %v436 = vld [vmem:[%s386 + $0xf0] sm:$0xff]
      %v437 = vld [vmem:[%s386 + $0xf8] sm:$0xf]
      %v438 = vld [vmem:[%s386 + $0xfc] sm:$0xff]
      %v439 = vld [vmem:[%s386 + $0x104] sm:$0xf]
      %v440 = vld [vmem:[%s386 + $0x108] sm:$0xff]
      %v441 = vld [vmem:[%s386 + $0x110] sm:$0xf]
      %v442 = vld [vmem:[%s386 + $0x114] sm:$0xff]
      %v443 = vld [vmem:[%s386 + $0x11c] sm:$0xf]
      %v444 = vld [vmem:[%s386 + $0x120] sm:$0xff]
      %v445 = vld [vmem:[%s386 + $0x128] sm:$0xf]
      %v446 = vld [vmem:[%s386 + $0x12c] sm:$0xff]
      %v447 = vld [vmem:[%s386 + $0x134] sm:$0xf]
      %v448 = vld [vmem:[%s386 + $0x138] sm:$0xff]
      %v449 = vld [vmem:[%s386 + $0x140] sm:$0xf]
      %v450 = vld [vmem:[%s386 + $0x144] sm:$0xff]
      %v451 = vld [vmem:[%s386 + $0x14c] sm:$0xf]
      %v452 = vld [vmem:[%s386 + $0x150] sm:$0xff]
      %v453 = vld [vmem:[%s386 + $0x158] sm:$0xf]
      %v454 = vld [vmem:[%s386 + $0x15c] sm:$0xff]
      %v455 = vld [vmem:[%s386 + $0x164] sm:$0xf]
      %v456 = vld [vmem:[%s386 + $0x168] sm:$0xff]
      %v457 = vld [vmem:[%s386 + $0x170] sm:$0xf]
      %v458 = vld [vmem:[%s386 + $0x174] sm:$0xff]
      %v459 = vld [vmem:[%s386 + $0x17c] sm:$0xf]
      %v460 = vld [vmem:[%s1] sm:$0xff]
      %v461 = vld [vmem:[%s1 + $0x8] sm:$0xff]
      %v462 = vld [vmem:[%s1 + $0x10] sm:$0xff]
      %v463 = vld [vmem:[%s1 + $0x18] sm:$0xff]
      %v464 = vld [vmem:[%s1 + $0x20] sm:$0xff]
      %v465 = vld [vmem:[%s1 + $0x28] sm:$0xff]
      %v466 = vld [vmem:[%s1 + $0x30] sm:$0xff]
      %v467 = vld [vmem:[%s1 + $0x38] sm:$0xff]
      %v468 = vld [vmem:[%s1 + $0x40] sm:$0xff]
      %v469 = vld [vmem:[%s1 + $0x48] sm:$0xff]
      %v470 = vld [vmem:[%s1 + $0x50] sm:$0xff]
      %v471 = vld [vmem:[%s1 + $0x58] sm:$0xff]
      %v472 = vld [vmem:[%s1 + $0x60] sm:$0xff]
      %v473 = vld [vmem:[%s1 + $0x68] sm:$0xff]
      %v474 = vld [vmem:[%s1 + $0x70] sm:$0xff]
      %v475 = vld [vmem:[%s1 + $0x78] sm:$0xff]
      %v476 = vld [vmem:[%s1 + $0x80] sm:$0xff]
      %v477 = vld [vmem:[%s1 + $0x88] sm:$0xff]
      %v478 = vld [vmem:[%s1 + $0x90] sm:$0xff]
      %v479 = vld [vmem:[%s1 + $0x98] sm:$0xff]
      %v480 = vld [vmem:[%s1 + $0xa0] sm:$0xff]
      %v481 = vld [vmem:[%s1 + $0xa8] sm:$0xff]
      %v482 = vld [vmem:[%s1 + $0xb0] sm:$0xff]
      %v483 = vld [vmem:[%s1 + $0xb8] sm:$0xff]
      %v484 = vld [vmem:[%s1 + $0xc0] sm:$0xff]
      %v485 = vld [vmem:[%s1 + $0xc8] sm:$0xff]
      %v486 = vld [vmem:[%s1 + $0xd0] sm:$0xff]
      %v487 = vld [vmem:[%s1 + $0xd8] sm:$0xff]
      %v488 = vld [vmem:[%s1 + $0xe0] sm:$0xff]
      %v489 = vld [vmem:[%s1 + $0xe8] sm:$0xff]
      %v490 = vld [vmem:[%s1 + $0xf0] sm:$0xff]
      %v491 = vld [vmem:[%s1 + $0xf8] sm:$0xff]
      %v492 = vld [vmem:[%s1 + $0x100] sm:$0xff]
      %v493 = vld [vmem:[%s1 + $0x108] sm:$0xff]
      %v494 = vld [vmem:[%s1 + $0x110] sm:$0xff]
      %v495 = vld [vmem:[%s1 + $0x118] sm:$0xff]
      %v496 = vld [vmem:[%s1 + $0x120] sm:$0xff]
      %v497 = vld [vmem:[%s1 + $0x128] sm:$0x33]
      %v498 = vld [vmem:[%s2] sm:$0x3]
      %v500 = vlaneseq
      %v501 = vshrl.u32 %v500, 7
      %v502 = vsub.s32 0, %v501
      %v503 = vrot.slane %v498, %v502
      %v504 = vlaneseq
      %v505 = vshrl.u32 %v504, 7
      %v506 = vsub.s32 1, %v505
      %v507 = vrot.slane %v498, %v506
      %v574 = vunpack.c.l.b16 %v396
      %v575 = vunpack.c.h.b16 %v396
      %v576 = vunpack.c.l.b16 %v397
      %v577 = vunpack.c.l.b16 %v398
      %v578 = vunpack.c.h.b16 %v398
      %v579 = vunpack.c.l.b16 %v399
      %v580 = vunpack.c.l.b16 %v400
      %v581 = vunpack.c.h.b16 %v400
      %v582 = vunpack.c.l.b16 %v401
      %v583 = vunpack.c.l.b16 %v402
      %v584 = vunpack.c.h.b16 %v402
      %v585 = vunpack.c.l.b16 %v403
      %v586 = vunpack.c.l.b16 %v404
      %v587 = vunpack.c.h.b16 %v404
      %v588 = vunpack.c.l.b16 %v405
      %v589 = vunpack.c.l.b16 %v406
      %v590 = vunpack.c.h.b16 %v406
      %v591 = vunpack.c.l.b16 %v407
      %v592 = vunpack.c.l.b16 %v408
      %v593 = vunpack.c.h.b16 %v408
      %v594 = vunpack.c.l.b16 %v409
      %v595 = vunpack.c.l.b16 %v410
      %v596 = vunpack.c.h.b16 %v410
      %v597 = vunpack.c.l.b16 %v411
      %v598 = vunpack.c.l.b16 %v412
      %v599 = vunpack.c.h.b16 %v412
      %v600 = vunpack.c.l.b16 %v413
      %v601 = vunpack.c.l.b16 %v414
      %v602 = vunpack.c.h.b16 %v414
      %v603 = vunpack.c.l.b16 %v415
      %v604 = vunpack.c.l.b16 %v416
      %v605 = vunpack.c.h.b16 %v416
      %v606 = vunpack.c.l.b16 %v417
      %v607 = vunpack.c.l.b16 %v418
      %v608 = vunpack.c.h.b16 %v418
      %v609 = vunpack.c.l.b16 %v419
      %v610 = vunpack.c.l.b16 %v420
      %v611 = vunpack.c.h.b16 %v420
      %v612 = vunpack.c.l.b16 %v421
      %v613 = vunpack.c.l.b16 %v422
      %v614 = vunpack.c.h.b16 %v422
      %v615 = vunpack.c.l.b16 %v423
      %v616 = vunpack.c.l.b16 %v424
      %v617 = vunpack.c.h.b16 %v424
      %v618 = vunpack.c.l.b16 %v425
      %v619 = vunpack.c.l.b16 %v426
      %v620 = vunpack.c.h.b16 %v426
      %v621 = vunpack.c.l.b16 %v427
      %v622 = vunpack.c.l.b16 %v428
      %v623 = vunpack.c.h.b16 %v428
      %v624 = vunpack.c.l.b16 %v429
      %v625 = vunpack.c.l.b16 %v430
      %v626 = vunpack.c.h.b16 %v430
      %v627 = vunpack.c.l.b16 %v431
      %v628 = vunpack.c.l.b16 %v432
      %v629 = vunpack.c.h.b16 %v432
      %v630 = vunpack.c.l.b16 %v433
      %v631 = vunpack.c.l.b16 %v434
      %v632 = vunpack.c.h.b16 %v434
      %v633 = vunpack.c.l.b16 %v435
      %v634 = vunpack.c.l.b16 %v436
      %v635 = vunpack.c.h.b16 %v436
      %v636 = vunpack.c.l.b16 %v437
      %v637 = vunpack.c.l.b16 %v438
      %v638 = vunpack.c.h.b16 %v438
      %v639 = vunpack.c.l.b16 %v439
      %v640 = vunpack.c.l.b16 %v440
      %v641 = vunpack.c.h.b16 %v440
      %v642 = vunpack.c.l.b16 %v441
      %v643 = vunpack.c.l.b16 %v442
      %v644 = vunpack.c.h.b16 %v442
      %v645 = vunpack.c.l.b16 %v443
      %v646 = vunpack.c.l.b16 %v444
      %v647 = vunpack.c.h.b16 %v444
      %v648 = vunpack.c.l.b16 %v445
      %v649 = vunpack.c.l.b16 %v446
      %v650 = vunpack.c.h.b16 %v446
      %v651 = vunpack.c.l.b16 %v447
      %v652 = vunpack.c.l.b16 %v448
      %v653 = vunpack.c.h.b16 %v448
      %v654 = vunpack.c.l.b16 %v449
      %v655 = vunpack.c.l.b16 %v450
      %v656 = vunpack.c.h.b16 %v450
      %v657 = vunpack.c.l.b16 %v451
      %v658 = vunpack.c.l.b16 %v452
      %v659 = vunpack.c.h.b16 %v452
      %v660 = vunpack.c.l.b16 %v453
      %v661 = vunpack.c.l.b16 %v454
      %v662 = vunpack.c.h.b16 %v454
      %v663 = vunpack.c.l.b16 %v455
      %v664 = vunpack.c.l.b16 %v456
      %v665 = vunpack.c.h.b16 %v456
      %v666 = vunpack.c.l.b16 %v457
      %v667 = vunpack.c.l.b16 %v458
      %v668 = vunpack.c.h.b16 %v458
      %v669 = vunpack.c.l.b16 %v459
      %v670 = vpack.c.b16 %v577, %v574
      %v671 = vpack.c.b16 %v578, %v575
      %v672 = vpack.c.b16 %v579, %v576
      %v673 = vpack.c.b16 %v583, %v580
      %v674 = vpack.c.b16 %v584, %v581
      %v675 = vpack.c.b16 %v585, %v582
      %v676 = vpack.c.b16 %v589, %v586
      %v677 = vpack.c.b16 %v590, %v587
      %v678 = vpack.c.b16 %v591, %v588
      %v679 = vpack.c.b16 %v595, %v592
      %v680 = vpack.c.b16 %v596, %v593
      %v681 = vpack.c.b16 %v597, %v594
      %v682 = vpack.c.b16 %v601, %v598
      %v683 = vpack.c.b16 %v602, %v599
      %v684 = vpack.c.b16 %v603, %v600
      %v685 = vpack.c.b16 %v607, %v604
      %v686 = vpack.c.b16 %v608, %v605
      %v687 = vpack.c.b16 %v609, %v606
      %v688 = vpack.c.b16 %v613, %v610
      %v689 = vpack.c.b16 %v614, %v611
      %v690 = vpack.c.b16 %v615, %v612
      %v691 = vpack.c.b16 %v619, %v616
      %v692 = vpack.c.b16 %v620, %v617
      %v693 = vpack.c.b16 %v621, %v618
      %v694 = vpack.c.b16 %v625, %v622
      %v695 = vpack.c.b16 %v626, %v623
      %v696 = vpack.c.b16 %v627, %v624
      %v697 = vpack.c.b16 %v631, %v628
      %v698 = vpack.c.b16 %v632, %v629
      %v699 = vpack.c.b16 %v633, %v630
      %v700 = vpack.c.b16 %v637, %v634
      %v701 = vpack.c.b16 %v638, %v635
      %v702 = vpack.c.b16 %v639, %v636
      %v703 = vpack.c.b16 %v643, %v640
      %v704 = vpack.c.b16 %v644, %v641
      %v705 = vpack.c.b16 %v645, %v642
      %v706 = vpack.c.b16 %v649, %v646
      %v707 = vpack.c.b16 %v650, %v647
      %v708 = vpack.c.b16 %v651, %v648
      %v709 = vpack.c.b16 %v655, %v652
      %v710 = vpack.c.b16 %v656, %v653
      %v711 = vpack.c.b16 %v657, %v654
      %v712 = vpack.c.b16 %v661, %v658
      %v713 = vpack.c.b16 %v662, %v659
      %v714 = vpack.c.b16 %v663, %v660
      %v715 = vpack.c.b16 %v667, %v664
      %v716 = vpack.c.b16 %v668, %v665
      %v717 = vpack.c.b16 %v669, %v666
      %v788 = vunpack.c.l.b16 %v460
      %v789 = vunpack.c.h.b16 %v460
      %v790 = vunpack.c.l.b16 %v461
      %v791 = vunpack.c.h.b16 %v461
      %v792 = vunpack.c.l.b16 %v462
      %v793 = vunpack.c.h.b16 %v462
      %v794 = vunpack.c.l.b16 %v463
      %v795 = vunpack.c.h.b16 %v463
      %v796 = vunpack.c.l.b16 %v464
      %v797 = vunpack.c.h.b16 %v464
      %v798 = vunpack.c.l.b16 %v465
      %v799 = vunpack.c.h.b16 %v465
      %v800 = vunpack.c.l.b16 %v466
      %v801 = vunpack.c.h.b16 %v466
      %v802 = vunpack.c.l.b16 %v467
      %v803 = vunpack.c.h.b16 %v467
      %v804 = vunpack.c.l.b16 %v468
      %v805 = vunpack.c.h.b16 %v468
      %v806 = vunpack.c.l.b16 %v469
      %v807 = vunpack.c.h.b16 %v469
      %v808 = vunpack.c.l.b16 %v470
      %v809 = vunpack.c.h.b16 %v470
      %v810 = vunpack.c.l.b16 %v471
      %v811 = vunpack.c.h.b16 %v471
      %v812 = vunpack.c.l.b16 %v472
      %v813 = vunpack.c.h.b16 %v472
      %v814 = vunpack.c.l.b16 %v473
      %v815 = vunpack.c.h.b16 %v473
      %v816 = vunpack.c.l.b16 %v474
      %v817 = vunpack.c.h.b16 %v474
      %v818 = vunpack.c.l.b16 %v475
      %v819 = vunpack.c.h.b16 %v475
      %v820 = vunpack.c.l.b16 %v476
      %v821 = vunpack.c.h.b16 %v476
      %v822 = vunpack.c.l.b16 %v477
      %v823 = vunpack.c.h.b16 %v477
      %v824 = vunpack.c.l.b16 %v478
      %v825 = vunpack.c.h.b16 %v478
      %v826 = vunpack.c.l.b16 %v479
      %v827 = vunpack.c.h.b16 %v479
      %v828 = vunpack.c.l.b16 %v480
      %v829 = vunpack.c.h.b16 %v480
      %v830 = vunpack.c.l.b16 %v481
      %v831 = vunpack.c.h.b16 %v481
      %v832 = vunpack.c.l.b16 %v482
      %v833 = vunpack.c.h.b16 %v482
      %v834 = vunpack.c.l.b16 %v483
      %v835 = vunpack.c.h.b16 %v483
      %v836 = vunpack.c.l.b16 %v484
      %v837 = vunpack.c.h.b16 %v484
      %v838 = vunpack.c.l.b16 %v485
      %v839 = vunpack.c.h.b16 %v485
      %v840 = vunpack.c.l.b16 %v486
      %v841 = vunpack.c.h.b16 %v486
      %v842 = vunpack.c.l.b16 %v487
      %v843 = vunpack.c.h.b16 %v487
      %v844 = vunpack.c.l.b16 %v488
      %v845 = vunpack.c.h.b16 %v488
      %v846 = vunpack.c.l.b16 %v489
      %v847 = vunpack.c.h.b16 %v489
      %v848 = vunpack.c.l.b16 %v490
      %v849 = vunpack.c.h.b16 %v490
      %v850 = vunpack.c.l.b16 %v491
      %v851 = vunpack.c.h.b16 %v491
      %v852 = vunpack.c.l.b16 %v492
      %v853 = vunpack.c.h.b16 %v492
      %v854 = vunpack.c.l.b16 %v493
      %v855 = vunpack.c.h.b16 %v493
      %v856 = vunpack.c.l.b16 %v494
      %v857 = vunpack.c.h.b16 %v494
      %v858 = vunpack.c.l.b16 %v495
      %v859 = vunpack.c.h.b16 %v495
      %v860 = vunpack.c.l.b16 %v496
      %v861 = vunpack.c.h.b16 %v496
      %v862 = vunpack.c.l.b16 %v497
      %v863 = vunpack.c.h.b16 %v497
      %v864 = vpack.c.b16 %v790, %v788
      %v865 = vpack.c.b16 %v791, %v789
      %v866 = vpack.c.b16 %v794, %v792
      %v867 = vpack.c.b16 %v795, %v793
      %v868 = vpack.c.b16 %v798, %v796
      %v869 = vpack.c.b16 %v799, %v797
      %v870 = vpack.c.b16 %v802, %v800
      %v871 = vpack.c.b16 %v803, %v801
      %v872 = vpack.c.b16 %v806, %v804
      %v873 = vpack.c.b16 %v807, %v805
      %v874 = vpack.c.b16 %v810, %v808
      %v875 = vpack.c.b16 %v811, %v809
      %v876 = vpack.c.b16 %v814, %v812
      %v877 = vpack.c.b16 %v815, %v813
      %v878 = vpack.c.b16 %v818, %v816
      %v879 = vpack.c.b16 %v819, %v817
      %v880 = vpack.c.b16 %v822, %v820
      %v881 = vpack.c.b16 %v823, %v821
      %v882 = vpack.c.b16 %v826, %v824
      %v883 = vpack.c.b16 %v827, %v825
      %v884 = vpack.c.b16 %v830, %v828
      %v885 = vpack.c.b16 %v831, %v829
      %v886 = vpack.c.b16 %v834, %v832
      %v887 = vpack.c.b16 %v835, %v833
      %v888 = vpack.c.b16 %v838, %v836
      %v889 = vpack.c.b16 %v839, %v837
      %v890 = vpack.c.b16 %v842, %v840
      %v891 = vpack.c.b16 %v843, %v841
      %v892 = vpack.c.b16 %v846, %v844
      %v893 = vpack.c.b16 %v847, %v845
      %v894 = vpack.c.b16 %v850, %v848
      %v895 = vpack.c.b16 %v851, %v849
      %v896 = vpack.c.b16 %v854, %v852
      %v897 = vpack.c.b16 %v855, %v853
      %v898 = vpack.c.b16 %v858, %v856
      %v899 = vpack.c.b16 %v859, %v857
      %v900 = vpack.c.b16 %v862, %v860
      %v901 = vpack.c.b16 %v863, %v861
      %vm938 = vcmask 359424
      %v940 = vsel %vm938, %v672, 0
      %v943 = vsel %vm938, %v675, 0
      %v946 = vsel %vm938, %v678, 0
      %v949 = vsel %vm938, %v681, 0
      %v952 = vsel %vm938, %v684, 0
      %v955 = vsel %vm938, %v687, 0
      %v958 = vsel %vm938, %v690, 0
      %v961 = vsel %vm938, %v693, 0
      %v964 = vsel %vm938, %v696, 0
      %v967 = vsel %vm938, %v699, 0
      %v970 = vsel %vm938, %v702, 0
      %v973 = vsel %vm938, %v705, 0
      %v976 = vsel %vm938, %v708, 0
      %v979 = vsel %vm938, %v711, 0
      %v982 = vsel %vm938, %v714, 0
      %v985 = vsel %vm938, %v717, 0
      %vm987 = vcmask 1045504
      %v989 = vsel %vm987, %v900, 0
      %v992 = vsel %vm987, %v901, 0
      %994 = vmatprep.subr.bf16.mxu0 %v879
      %995 = vmatpush1.bf16.msra.mxu0 %v878
      %996 = vmatprep.subr.bf16.mxu0 %v877
      %997 = vmatpush1.bf16.msra.mxu0 %v876
      %998 = vmatprep.subr.bf16.mxu0 %v875
      %999 = vmatpush1.bf16.msra.mxu0 %v874
      %1000 = vmatprep.subr.bf16.mxu0 %v873
      %1001 = vmatpush1.bf16.msra.mxu0 %v872
      %1002 = vmatprep.subr.bf16.mxu0 %v871
      %1003 = vmatpush1.bf16.msra.mxu0 %v870
      %1004 = vmatprep.subr.bf16.mxu0 %v869
      %1005 = vmatpush1.bf16.msra.mxu0 %v868
      %1006 = vmatprep.subr.bf16.mxu0 %v867
      %1007 = vmatpush1.bf16.msra.mxu0 %v866
      %1008 = vmatprep.subr.bf16.mxu0 %v865
      %1009 = vmatpush1.bf16.msra.mxu0 %v864
      %1010 = vmatprep.subr.bf16.mxu0 %v895
      %1011 = vmatpush2.bf16.msra.mxu0 %v894
      %1012 = vmatprep.subr.bf16.mxu0 %v893
      %1013 = vmatpush2.bf16.msra.mxu0 %v892
      %1014 = vmatprep.subr.bf16.mxu0 %v891
      %1015 = vmatpush2.bf16.msra.mxu0 %v890
      %1016 = vmatprep.subr.bf16.mxu0 %v889
      %1017 = vmatpush2.bf16.msra.mxu0 %v888
      %1018 = vmatprep.subr.bf16.mxu0 %v887
      %1019 = vmatpush2.bf16.msra.mxu0 %v886
      %1020 = vmatprep.subr.bf16.mxu0 %v885
      %1021 = vmatpush2.bf16.msra.mxu0 %v884
      %1022 = vmatprep.subr.bf16.mxu0 %v883
      %1023 = vmatpush2.bf16.msra.mxu0 %v882
      %1024 = vmatprep.subr.bf16.mxu0 %v881
      %1025 = vmatpush2.bf16.msra.mxu0 %v880
      %1026 = vmatprep.mubr.bf16.mxu0 %v671
      %1027 = vmatmul.mubr.bf16.gmra.mxu0 %v670
      %v1028 = vpop.f32.mrf.mxu0
      %v1029 = vadd.f32 %v503, %v1028
      %v1030 = vpop.f32.mrf.mxu0
      %v1031 = vadd.f32 %v507, %v1030
      %v1032 = vpop.f32.mrf.mxu0
      %v1033 = vadd.f32 %v503, %v1032
      %v1034 = vpop.f32.mrf.mxu0
      %v1035 = vadd.f32 %v507, %v1034
      %1036 = vmatprep.mubr.bf16.mxu0 %v674
      %1037 = vmatmul.mubr.bf16.gmra.mxu0 %v673
      %v1038 = vpop.f32.mrf.mxu0
      %v1039 = vadd.f32 %v503, %v1038
      %v1040 = vpop.f32.mrf.mxu0
      %v1041 = vadd.f32 %v507, %v1040
      %v1042 = vpop.f32.mrf.mxu0
      %v1043 = vadd.f32 %v503, %v1042
      %v1044 = vpop.f32.mrf.mxu0
      %v1045 = vadd.f32 %v507, %v1044
      %1046 = vmatprep.mubr.bf16.mxu0 %v677
      %1047 = vmatmul.mubr.bf16.gmra.mxu0 %v676
      %v1048 = vpop.f32.mrf.mxu0
      %v1049 = vadd.f32 %v503, %v1048
      %v1050 = vpop.f32.mrf.mxu0
      %v1051 = vadd.f32 %v507, %v1050
      %v1052 = vpop.f32.mrf.mxu0
      %v1053 = vadd.f32 %v503, %v1052
      %v1054 = vpop.f32.mrf.mxu0
      %v1055 = vadd.f32 %v507, %v1054
      %1056 = vmatprep.mubr.bf16.mxu0 %v680
      %1057 = vmatmul.mubr.bf16.gmra.mxu0 %v679
      %v1058 = vpop.f32.mrf.mxu0
      %v1059 = vadd.f32 %v503, %v1058
      %v1060 = vpop.f32.mrf.mxu0
      %v1061 = vadd.f32 %v507, %v1060
      %v1062 = vpop.f32.mrf.mxu0
      %v1063 = vadd.f32 %v503, %v1062
      %v1064 = vpop.f32.mrf.mxu0
      %v1065 = vadd.f32 %v507, %v1064
      %1066 = vmatprep.mubr.bf16.mxu0 %v683
      %1067 = vmatmul.mubr.bf16.gmra.mxu0 %v682
      %v1068 = vpop.f32.mrf.mxu0
      %v1069 = vadd.f32 %v503, %v1068
      %v1070 = vpop.f32.mrf.mxu0
      %v1071 = vadd.f32 %v507, %v1070
      %v1072 = vpop.f32.mrf.mxu0
      %v1073 = vadd.f32 %v503, %v1072
      %v1074 = vpop.f32.mrf.mxu0
      %v1075 = vadd.f32 %v507, %v1074
      %1076 = vmatprep.mubr.bf16.mxu0 %v686
      %1077 = vmatmul.mubr.bf16.gmra.mxu0 %v685
      %v1078 = vpop.f32.mrf.mxu0
      %v1079 = vadd.f32 %v503, %v1078
      %v1080 = vpop.f32.mrf.mxu0
      %v1081 = vadd.f32 %v507, %v1080
      %v1082 = vpop.f32.mrf.mxu0
      %v1083 = vadd.f32 %v503, %v1082
      %v1084 = vpop.f32.mrf.mxu0
      %v1085 = vadd.f32 %v507, %v1084
      %1086 = vmatprep.mubr.bf16.mxu0 %v689
      %1087 = vmatmul.mubr.bf16.gmra.mxu0 %v688
      %v1088 = vpop.f32.mrf.mxu0
      %v1089 = vadd.f32 %v503, %v1088
      %v1090 = vpop.f32.mrf.mxu0
      %v1091 = vadd.f32 %v507, %v1090
      %v1092 = vpop.f32.mrf.mxu0
      %v1093 = vadd.f32 %v503, %v1092
      %v1094 = vpop.f32.mrf.mxu0
      %v1095 = vadd.f32 %v507, %v1094
      %1096 = vmatprep.mubr.bf16.mxu0 %v692
      %1097 = vmatmul.mubr.bf16.gmra.mxu0 %v691
      %v1098 = vpop.f32.mrf.mxu0
      %v1099 = vadd.f32 %v503, %v1098
      %v1100 = vpop.f32.mrf.mxu0
      %v1101 = vadd.f32 %v507, %v1100
      %v1102 = vpop.f32.mrf.mxu0
      %v1103 = vadd.f32 %v503, %v1102
      %v1104 = vpop.f32.mrf.mxu0
      %v1105 = vadd.f32 %v507, %v1104
      %1106 = vmatprep.mubr.bf16.mxu0 %v695
      %1107 = vmatmul.mubr.bf16.gmra.mxu0 %v694
      %v1108 = vpop.f32.mrf.mxu0
      %v1109 = vadd.f32 %v503, %v1108
      %v1110 = vpop.f32.mrf.mxu0
      %v1111 = vadd.f32 %v507, %v1110
      %v1112 = vpop.f32.mrf.mxu0
      %v1113 = vadd.f32 %v503, %v1112
      %v1114 = vpop.f32.mrf.mxu0
      %v1115 = vadd.f32 %v507, %v1114
      %1116 = vmatprep.mubr.bf16.mxu0 %v698
      %1117 = vmatmul.mubr.bf16.gmra.mxu0 %v697
      %v1118 = vpop.f32.mrf.mxu0
      %v1119 = vadd.f32 %v503, %v1118
      %v1120 = vpop.f32.mrf.mxu0
      %v1121 = vadd.f32 %v507, %v1120
      %v1122 = vpop.f32.mrf.mxu0
      %v1123 = vadd.f32 %v503, %v1122
      %v1124 = vpop.f32.mrf.mxu0
      %v1125 = vadd.f32 %v507, %v1124
      %1126 = vmatprep.mubr.bf16.mxu0 %v701
      %1127 = vmatmul.mubr.bf16.gmra.mxu0 %v700
      %v1128 = vpop.f32.mrf.mxu0
      %v1129 = vadd.f32 %v503, %v1128
      %v1130 = vpop.f32.mrf.mxu0
      %v1131 = vadd.f32 %v507, %v1130
      %v1132 = vpop.f32.mrf.mxu0
      %v1133 = vadd.f32 %v503, %v1132
      %v1134 = vpop.f32.mrf.mxu0
      %v1135 = vadd.f32 %v507, %v1134
      %1136 = vmatprep.mubr.bf16.mxu0 %v704
      %1137 = vmatmul.mubr.bf16.gmra.mxu0 %v703
      %v1138 = vpop.f32.mrf.mxu0
      %v1139 = vadd.f32 %v503, %v1138
      %v1140 = vpop.f32.mrf.mxu0
      %v1141 = vadd.f32 %v507, %v1140
      %v1142 = vpop.f32.mrf.mxu0
      %v1143 = vadd.f32 %v503, %v1142
      %v1144 = vpop.f32.mrf.mxu0
      %v1145 = vadd.f32 %v507, %v1144
      %1146 = vmatprep.mubr.bf16.mxu0 %v707
      %1147 = vmatmul.mubr.bf16.gmra.mxu0 %v706
      %v1148 = vpop.f32.mrf.mxu0
      %v1149 = vadd.f32 %v503, %v1148
      %v1150 = vpop.f32.mrf.mxu0
      %v1151 = vadd.f32 %v507, %v1150
      %v1152 = vpop.f32.mrf.mxu0
      %v1153 = vadd.f32 %v503, %v1152
      %v1154 = vpop.f32.mrf.mxu0
      %v1155 = vadd.f32 %v507, %v1154
      %1156 = vmatprep.mubr.bf16.mxu0 %v710
      %1157 = vmatmul.mubr.bf16.gmra.mxu0 %v709
      %v1158 = vpop.f32.mrf.mxu0
      %v1159 = vadd.f32 %v503, %v1158
      %v1160 = vpop.f32.mrf.mxu0
      %v1161 = vadd.f32 %v507, %v1160
      %v1162 = vpop.f32.mrf.mxu0
      %v1163 = vadd.f32 %v503, %v1162
      %v1164 = vpop.f32.mrf.mxu0
      %v1165 = vadd.f32 %v507, %v1164
      %1166 = vmatprep.mubr.bf16.mxu0 %v713
      %1167 = vmatmul.mubr.bf16.gmra.mxu0 %v712
      %v1168 = vpop.f32.mrf.mxu0
      %v1169 = vadd.f32 %v503, %v1168
      %v1170 = vpop.f32.mrf.mxu0
      %v1171 = vadd.f32 %v507, %v1170
      %v1172 = vpop.f32.mrf.mxu0
      %v1173 = vadd.f32 %v503, %v1172
      %v1174 = vpop.f32.mrf.mxu0
      %v1175 = vadd.f32 %v507, %v1174
      %1176 = vmatprep.mubr.bf16.mxu0 %v716
      %1177 = vmatmul.mubr.bf16.gmra.mxu0 %v715
      %v1178 = vpop.f32.mrf.mxu0
      %v1179 = vadd.f32 %v503, %v1178
      %v1180 = vpop.f32.mrf.mxu0
      %v1181 = vadd.f32 %v507, %v1180
      %v1182 = vpop.f32.mrf.mxu0
      %v1183 = vadd.f32 %v503, %v1182
      %v1184 = vpop.f32.mrf.mxu0
      %v1185 = vadd.f32 %v507, %v1184
      %1186 = vdwg.mxu0
      %1187 = vmatprep.subr.bf16.mxu0 0
      %1188 = vmatpush1.bf16.msra.mxu0 0
      %1189 = vmatprep.subr.bf16.mxu0 0
      %1190 = vmatpush1.bf16.msra.mxu0 0
      %1191 = vmatprep.subr.bf16.mxu0 0
      %1192 = vmatpush1.bf16.msra.mxu0 0
      %1193 = vmatprep.subr.bf16.mxu0 0
      %1194 = vmatpush1.bf16.msra.mxu0 0
      %1195 = vmatprep.subr.bf16.mxu0 0
      %1196 = vmatpush1.bf16.msra.mxu0 0
      %1197 = vmatprep.subr.bf16.mxu0 %v992
      %1198 = vmatpush1.bf16.msra.mxu0 %v989
      %1199 = vmatprep.subr.bf16.mxu0 %v899
      %1200 = vmatpush1.bf16.msra.mxu0 %v898
      %1201 = vmatprep.subr.bf16.mxu0 %v897
      %1202 = vmatpush1.bf16.msra.mxu0 %v896
      %1203 = vmatprep.subr.bf16.mxu0 0
      %1204 = vmatpush2.bf16.msra.mxu0 0
      %1205 = vmatprep.subr.bf16.mxu0 0
      %1206 = vmatpush2.bf16.msra.mxu0 0
      %1207 = vmatprep.subr.bf16.mxu0 0
      %1208 = vmatpush2.bf16.msra.mxu0 0
      %1209 = vmatprep.subr.bf16.mxu0 0
      %1210 = vmatpush2.bf16.msra.mxu0 0
      %1211 = vmatprep.subr.bf16.mxu0 0
      %1212 = vmatpush2.bf16.msra.mxu0 0
      %1213 = vmatprep.subr.bf16.mxu0 0
      %1214 = vmatpush2.bf16.msra.mxu0 0
      %1215 = vmatprep.subr.bf16.mxu0 0
      %1216 = vmatpush2.bf16.msra.mxu0 0
      %1217 = vmatprep.subr.bf16.mxu0 0
      %1218 = vmatpush2.bf16.msra.mxu0 0
      %1219 = vmatprep.mubr.bf16.mxu0 0
      %1220 = vmatmul.mubr.bf16.gmra.mxu0 %v940
      %v1221 = vpop.f32.mrf.mxu0
      %v1222 = vadd.f32 %v1029, %v1221
      %v1223 = vpop.f32.mrf.mxu0
      %v1224 = vadd.f32 %v1031, %v1223
      %v1225 = vpop.f32.mrf.mxu0
      %v1226 = vadd.f32 %v1033, %v1225
      %v1227 = vpop.f32.mrf.mxu0
      %v1228 = vadd.f32 %v1035, %v1227
      %1229 = vmatprep.mubr.bf16.mxu0 0
      %1230 = vmatmul.mubr.bf16.gmra.mxu0 %v943
      %v1231 = vpop.f32.mrf.mxu0
      %v1232 = vadd.f32 %v1039, %v1231
      %v1233 = vpop.f32.mrf.mxu0
      %v1234 = vadd.f32 %v1041, %v1233
      %v1235 = vpop.f32.mrf.mxu0
      %v1236 = vadd.f32 %v1043, %v1235
      %v1237 = vpop.f32.mrf.mxu0
      %v1238 = vadd.f32 %v1045, %v1237
      %1239 = vmatprep.mubr.bf16.mxu0 0
      %1240 = vmatmul.mubr.bf16.gmra.mxu0 %v946
      %v1241 = vpop.f32.mrf.mxu0
      %v1242 = vadd.f32 %v1049, %v1241
      %v1243 = vpop.f32.mrf.mxu0
      %v1244 = vadd.f32 %v1051, %v1243
      %v1245 = vpop.f32.mrf.mxu0
      %v1246 = vadd.f32 %v1053, %v1245
      %v1247 = vpop.f32.mrf.mxu0
      %v1248 = vadd.f32 %v1055, %v1247
      %1249 = vmatprep.mubr.bf16.mxu0 0
      %1250 = vmatmul.mubr.bf16.gmra.mxu0 %v949
      %v1251 = vpop.f32.mrf.mxu0
      %v1252 = vadd.f32 %v1059, %v1251
      %v1253 = vpop.f32.mrf.mxu0
      %v1254 = vadd.f32 %v1061, %v1253
      %v1255 = vpop.f32.mrf.mxu0
      %v1256 = vadd.f32 %v1063, %v1255
      %v1257 = vpop.f32.mrf.mxu0
      %v1258 = vadd.f32 %v1065, %v1257
      %1259 = vmatprep.mubr.bf16.mxu0 0
      %1260 = vmatmul.mubr.bf16.gmra.mxu0 %v952
      %v1261 = vpop.f32.mrf.mxu0
      %v1262 = vadd.f32 %v1069, %v1261
      %v1263 = vpop.f32.mrf.mxu0
      %v1264 = vadd.f32 %v1071, %v1263
      %v1265 = vpop.f32.mrf.mxu0
      %v1266 = vadd.f32 %v1073, %v1265
      %v1267 = vpop.f32.mrf.mxu0
      %v1268 = vadd.f32 %v1075, %v1267
      %1269 = vmatprep.mubr.bf16.mxu0 0
      %1270 = vmatmul.mubr.bf16.gmra.mxu0 %v955
      %v1271 = vpop.f32.mrf.mxu0
      %v1272 = vadd.f32 %v1079, %v1271
      %v1273 = vpop.f32.mrf.mxu0
      %v1274 = vadd.f32 %v1081, %v1273
      %v1275 = vpop.f32.mrf.mxu0
      %v1276 = vadd.f32 %v1083, %v1275
      %v1277 = vpop.f32.mrf.mxu0
      %v1278 = vadd.f32 %v1085, %v1277
      %1279 = vmatprep.mubr.bf16.mxu0 0
      %1280 = vmatmul.mubr.bf16.gmra.mxu0 %v958
      %v1281 = vpop.f32.mrf.mxu0
      %v1282 = vadd.f32 %v1089, %v1281
      %v1283 = vpop.f32.mrf.mxu0
      %v1284 = vadd.f32 %v1091, %v1283
      %v1285 = vpop.f32.mrf.mxu0
      %v1286 = vadd.f32 %v1093, %v1285
      %v1287 = vpop.f32.mrf.mxu0
      %v1288 = vadd.f32 %v1095, %v1287
      %1289 = vmatprep.mubr.bf16.mxu0 0
      %1290 = vmatmul.mubr.bf16.gmra.mxu0 %v961
      %v1291 = vpop.f32.mrf.mxu0
      %v1292 = vadd.f32 %v1099, %v1291
      %v1293 = vpop.f32.mrf.mxu0
      %v1294 = vadd.f32 %v1101, %v1293
      %v1295 = vpop.f32.mrf.mxu0
      %v1296 = vadd.f32 %v1103, %v1295
      %v1297 = vpop.f32.mrf.mxu0
      %v1298 = vadd.f32 %v1105, %v1297
      %1299 = vmatprep.mubr.bf16.mxu0 0
      %1300 = vmatmul.mubr.bf16.gmra.mxu0 %v964
      %v1301 = vpop.f32.mrf.mxu0
      %v1302 = vadd.f32 %v1109, %v1301
      %v1303 = vpop.f32.mrf.mxu0
      %v1304 = vadd.f32 %v1111, %v1303
      %v1305 = vpop.f32.mrf.mxu0
      %v1306 = vadd.f32 %v1113, %v1305
      %v1307 = vpop.f32.mrf.mxu0
      %v1308 = vadd.f32 %v1115, %v1307
      %1309 = vmatprep.mubr.bf16.mxu0 0
      %1310 = vmatmul.mubr.bf16.gmra.mxu0 %v967
      %v1311 = vpop.f32.mrf.mxu0
      %v1312 = vadd.f32 %v1119, %v1311
      %v1313 = vpop.f32.mrf.mxu0
      %v1314 = vadd.f32 %v1121, %v1313
      %v1315 = vpop.f32.mrf.mxu0
      %v1316 = vadd.f32 %v1123, %v1315
      %v1317 = vpop.f32.mrf.mxu0
      %v1318 = vadd.f32 %v1125, %v1317
      %1319 = vmatprep.mubr.bf16.mxu0 0
      %1320 = vmatmul.mubr.bf16.gmra.mxu0 %v970
      %v1321 = vpop.f32.mrf.mxu0
      %v1322 = vadd.f32 %v1129, %v1321
      %v1323 = vpop.f32.mrf.mxu0
      %v1324 = vadd.f32 %v1131, %v1323
      %v1325 = vpop.f32.mrf.mxu0
      %v1326 = vadd.f32 %v1133, %v1325
      %v1327 = vpop.f32.mrf.mxu0
      %v1328 = vadd.f32 %v1135, %v1327
      %1329 = vmatprep.mubr.bf16.mxu0 0
      %1330 = vmatmul.mubr.bf16.gmra.mxu0 %v973
      %v1331 = vpop.f32.mrf.mxu0
      %v1332 = vadd.f32 %v1139, %v1331
      %v1333 = vpop.f32.mrf.mxu0
      %v1334 = vadd.f32 %v1141, %v1333
      %v1335 = vpop.f32.mrf.mxu0
      %v1336 = vadd.f32 %v1143, %v1335
      %v1337 = vpop.f32.mrf.mxu0
      %v1338 = vadd.f32 %v1145, %v1337
      %1339 = vmatprep.mubr.bf16.mxu0 0
      %1340 = vmatmul.mubr.bf16.gmra.mxu0 %v976
      %v1341 = vpop.f32.mrf.mxu0
      %v1342 = vadd.f32 %v1149, %v1341
      %v1343 = vpop.f32.mrf.mxu0
      %v1344 = vadd.f32 %v1151, %v1343
      %v1345 = vpop.f32.mrf.mxu0
      %v1346 = vadd.f32 %v1153, %v1345
      %v1347 = vpop.f32.mrf.mxu0
      %v1348 = vadd.f32 %v1155, %v1347
      %1349 = vmatprep.mubr.bf16.mxu0 0
      %1350 = vmatmul.mubr.bf16.gmra.mxu0 %v979
      %v1351 = vpop.f32.mrf.mxu0
      %v1352 = vadd.f32 %v1159, %v1351
      %v1353 = vpop.f32.mrf.mxu0
      %v1354 = vadd.f32 %v1161, %v1353
      %v1355 = vpop.f32.mrf.mxu0
      %v1356 = vadd.f32 %v1163, %v1355
      %v1357 = vpop.f32.mrf.mxu0
      %v1358 = vadd.f32 %v1165, %v1357
      %1359 = vmatprep.mubr.bf16.mxu0 0
      %1360 = vmatmul.mubr.bf16.gmra.mxu0 %v982
      %v1361 = vpop.f32.mrf.mxu0
      %v1362 = vadd.f32 %v1169, %v1361
      %v1363 = vpop.f32.mrf.mxu0
      %v1364 = vadd.f32 %v1171, %v1363
      %v1365 = vpop.f32.mrf.mxu0
      %v1366 = vadd.f32 %v1173, %v1365
      %v1367 = vpop.f32.mrf.mxu0
      %v1368 = vadd.f32 %v1175, %v1367
      %1369 = vmatprep.mubr.bf16.mxu0 0
      %1370 = vmatmul.mubr.bf16.gmra.mxu0 %v985
      %v1371 = vpop.f32.mrf.mxu0
      %v1372 = vadd.f32 %v1179, %v1371
      %v1373 = vpop.f32.mrf.mxu0
      %v1374 = vadd.f32 %v1181, %v1373
      %v1375 = vpop.f32.mrf.mxu0
      %v1376 = vadd.f32 %v1183, %v1375
      %v1377 = vpop.f32.mrf.mxu0
      %v1378 = vadd.f32 %v1185, %v1377
      %1379 = vdwg.mxu0
      %v1380 = vmax.f32 %v1222, 0.0
      %v1381 = vmax.f32 %v1224, 0.0
      %v1382 = vmax.f32 %v1226, 0.0
      %v1383 = vmax.f32 %v1228, 0.0
      %v1384 = vmax.f32 %v1232, 0.0
      %v1385 = vmax.f32 %v1234, 0.0
      %v1386 = vmax.f32 %v1236, 0.0
      %v1387 = vmax.f32 %v1238, 0.0
      %v1388 = vmax.f32 %v1242, 0.0
      %v1389 = vmax.f32 %v1244, 0.0
      %v1390 = vmax.f32 %v1246, 0.0
      %v1391 = vmax.f32 %v1248, 0.0
      %v1392 = vmax.f32 %v1252, 0.0
      %v1393 = vmax.f32 %v1254, 0.0
      %v1394 = vmax.f32 %v1256, 0.0
      %v1395 = vmax.f32 %v1258, 0.0
      %v1396 = vmax.f32 %v1262, 0.0
      %v1397 = vmax.f32 %v1264, 0.0
      %v1398 = vmax.f32 %v1266, 0.0
      %v1399 = vmax.f32 %v1268, 0.0
      %v1400 = vmax.f32 %v1272, 0.0
      %v1401 = vmax.f32 %v1274, 0.0
      %v1402 = vmax.f32 %v1276, 0.0
      %v1403 = vmax.f32 %v1278, 0.0
      %v1404 = vmax.f32 %v1282, 0.0
      %v1405 = vmax.f32 %v1284, 0.0
      %v1406 = vmax.f32 %v1286, 0.0
      %v1407 = vmax.f32 %v1288, 0.0
      %v1408 = vmax.f32 %v1292, 0.0
      %v1409 = vmax.f32 %v1294, 0.0
      %v1410 = vmax.f32 %v1296, 0.0
      %v1411 = vmax.f32 %v1298, 0.0
      %v1412 = vmax.f32 %v1302, 0.0
      %v1413 = vmax.f32 %v1304, 0.0
      %v1414 = vmax.f32 %v1306, 0.0
      %v1415 = vmax.f32 %v1308, 0.0
      %v1416 = vmax.f32 %v1312, 0.0
      %v1417 = vmax.f32 %v1314, 0.0
      %v1418 = vmax.f32 %v1316, 0.0
      %v1419 = vmax.f32 %v1318, 0.0
      %v1420 = vmax.f32 %v1322, 0.0
      %v1421 = vmax.f32 %v1324, 0.0
      %v1422 = vmax.f32 %v1326, 0.0
      %v1423 = vmax.f32 %v1328, 0.0
      %v1424 = vmax.f32 %v1332, 0.0
      %v1425 = vmax.f32 %v1334, 0.0
      %v1426 = vmax.f32 %v1336, 0.0
      %v1427 = vmax.f32 %v1338, 0.0
      %v1428 = vmax.f32 %v1342, 0.0
      %v1429 = vmax.f32 %v1344, 0.0
      %v1430 = vmax.f32 %v1346, 0.0
      %v1431 = vmax.f32 %v1348, 0.0
      %v1432 = vmax.f32 %v1352, 0.0
      %v1433 = vmax.f32 %v1354, 0.0
      %v1434 = vmax.f32 %v1356, 0.0
      %v1435 = vmax.f32 %v1358, 0.0
      %v1436 = vmax.f32 %v1362, 0.0
      %v1437 = vmax.f32 %v1364, 0.0
      %v1438 = vmax.f32 %v1366, 0.0
      %v1439 = vmax.f32 %v1368, 0.0
      %v1440 = vmax.f32 %v1372, 0.0
      %v1441 = vmax.f32 %v1374, 0.0
      %v1442 = vmax.f32 %v1376, 0.0
      %v1443 = vmax.f32 %v1378, 0.0
      %v1444 = vpack.c.bf16 %v1382, %v1380
      %v1445 = vpack.c.bf16 %v1383, %v1381
      %v1446 = vpack.c.bf16 %v1386, %v1384
      %v1447 = vpack.c.bf16 %v1387, %v1385
      %v1448 = vpack.c.bf16 %v1390, %v1388
      %v1449 = vpack.c.bf16 %v1391, %v1389
      %v1450 = vpack.c.bf16 %v1394, %v1392
      %v1451 = vpack.c.bf16 %v1395, %v1393
      %v1452 = vpack.c.bf16 %v1398, %v1396
      %v1453 = vpack.c.bf16 %v1399, %v1397
      %v1454 = vpack.c.bf16 %v1402, %v1400
      %v1455 = vpack.c.bf16 %v1403, %v1401
      %v1456 = vpack.c.bf16 %v1406, %v1404
      %v1457 = vpack.c.bf16 %v1407, %v1405
      %v1458 = vpack.c.bf16 %v1410, %v1408
      %v1459 = vpack.c.bf16 %v1411, %v1409
      %v1460 = vpack.c.bf16 %v1414, %v1412
      %v1461 = vpack.c.bf16 %v1415, %v1413
      %v1462 = vpack.c.bf16 %v1418, %v1416
      %v1463 = vpack.c.bf16 %v1419, %v1417
      %v1464 = vpack.c.bf16 %v1422, %v1420
      %v1465 = vpack.c.bf16 %v1423, %v1421
      %v1466 = vpack.c.bf16 %v1426, %v1424
      %v1467 = vpack.c.bf16 %v1427, %v1425
      %v1468 = vpack.c.bf16 %v1430, %v1428
      %v1469 = vpack.c.bf16 %v1431, %v1429
      %v1470 = vpack.c.bf16 %v1434, %v1432
      %v1471 = vpack.c.bf16 %v1435, %v1433
      %v1472 = vpack.c.bf16 %v1438, %v1436
      %v1473 = vpack.c.bf16 %v1439, %v1437
      %v1474 = vpack.c.bf16 %v1442, %v1440
      %v1475 = vpack.c.bf16 %v1443, %v1441
      %v1476 = vld [vmem:[%s3] sm:$0xf]
      %v1477 = vld [vmem:[%s3 + $0x4] sm:$0xf]
      %v1478 = vld [vmem:[%s3 + $0x8] sm:$0xf]
      %v1479 = vld [vmem:[%s3 + $0xc] sm:$0xf]
      %v1480 = vld [vmem:[%s3 + $0x10] sm:$0xf]
      %v1481 = vld [vmem:[%s3 + $0x14] sm:$0xf]
      %v1482 = vld [vmem:[%s3 + $0x18] sm:$0xf]
      %v1483 = vld [vmem:[%s3 + $0x1c] sm:$0xf]
      %v1484 = vld [vmem:[%s3 + $0x20] sm:$0xf]
      %v1485 = vld [vmem:[%s3 + $0x24] sm:$0xf]
      %v1486 = vld [vmem:[%s3 + $0x28] sm:$0xf]
      %v1487 = vld [vmem:[%s3 + $0x2c] sm:$0xf]
      %v1488 = vld [vmem:[%s3 + $0x30] sm:$0xf]
      %v1489 = vld [vmem:[%s3 + $0x34] sm:$0xf]
      %v1490 = vld [vmem:[%s3 + $0x38] sm:$0xf]
      %v1491 = vld [vmem:[%s3 + $0x3c] sm:$0xf]
      %v1492 = vld [vmem:[%s3 + $0x40] sm:$0xf]
      %v1493 = vld [vmem:[%s3 + $0x44] sm:$0xf]
      %v1494 = vld [vmem:[%s3 + $0x48] sm:$0xf]
      %v1495 = vld [vmem:[%s3 + $0x4c] sm:$0xf]
      %v1496 = vld [vmem:[%s3 + $0x50] sm:$0xf]
      %v1497 = vld [vmem:[%s3 + $0x54] sm:$0xf]
      %v1498 = vld [vmem:[%s3 + $0x58] sm:$0xf]
      %v1499 = vld [vmem:[%s3 + $0x5c] sm:$0xf]
      %v1500 = vld [vmem:[%s3 + $0x60] sm:$0xf]
      %v1501 = vld [vmem:[%s3 + $0x64] sm:$0xf]
      %v1502 = vld [vmem:[%s3 + $0x68] sm:$0xf]
      %v1503 = vld [vmem:[%s3 + $0x6c] sm:$0xf]
      %v1504 = vld [vmem:[%s3 + $0x70] sm:$0xf]
      %v1505 = vld [vmem:[%s3 + $0x74] sm:$0xf]
      %v1506 = vld [vmem:[%s3 + $0x78] sm:$0xf]
      %v1507 = vld [vmem:[%s3 + $0x7c] sm:$0xf]
      %v1508 = vld [vmem:[%s4] sm:$0x1]
      %v1510 = vlaneseq
      %v1511 = vshrl.u32 %v1510, 7
      %v1512 = vsub.s32 0, %v1511
      %v1513 = vrot.slane %v1508, %v1512
      %v1547 = vunpack.c.l.b16 %v1476
      %v1548 = vunpack.c.l.b16 %v1477
      %v1549 = vunpack.c.l.b16 %v1478
      %v1550 = vunpack.c.l.b16 %v1479
      %v1551 = vunpack.c.l.b16 %v1480
      %v1552 = vunpack.c.l.b16 %v1481
      %v1553 = vunpack.c.l.b16 %v1482
      %v1554 = vunpack.c.l.b16 %v1483
      %v1555 = vunpack.c.l.b16 %v1484
      %v1556 = vunpack.c.l.b16 %v1485
      %v1557 = vunpack.c.l.b16 %v1486
      %v1558 = vunpack.c.l.b16 %v1487
      %v1559 = vunpack.c.l.b16 %v1488
      %v1560 = vunpack.c.l.b16 %v1489
      %v1561 = vunpack.c.l.b16 %v1490
      %v1562 = vunpack.c.l.b16 %v1491
      %v1563 = vunpack.c.l.b16 %v1492
      %v1564 = vunpack.c.l.b16 %v1493
      %v1565 = vunpack.c.l.b16 %v1494
      %v1566 = vunpack.c.l.b16 %v1495
      %v1567 = vunpack.c.l.b16 %v1496
      %v1568 = vunpack.c.l.b16 %v1497
      %v1569 = vunpack.c.l.b16 %v1498
      %v1570 = vunpack.c.l.b16 %v1499
      %v1571 = vunpack.c.l.b16 %v1500
      %v1572 = vunpack.c.l.b16 %v1501
      %v1573 = vunpack.c.l.b16 %v1502
      %v1574 = vunpack.c.l.b16 %v1503
      %v1575 = vunpack.c.l.b16 %v1504
      %v1576 = vunpack.c.l.b16 %v1505
      %v1577 = vunpack.c.l.b16 %v1506
      %v1578 = vunpack.c.l.b16 %v1507
      %v1579 = vpack.c.b16 %v1548, %v1547
      %v1580 = vpack.c.b16 %v1550, %v1549
      %v1581 = vpack.c.b16 %v1552, %v1551
      %v1582 = vpack.c.b16 %v1554, %v1553
      %v1583 = vpack.c.b16 %v1556, %v1555
      %v1584 = vpack.c.b16 %v1558, %v1557
      %v1585 = vpack.c.b16 %v1560, %v1559
      %v1586 = vpack.c.b16 %v1562, %v1561
      %v1587 = vpack.c.b16 %v1564, %v1563
      %v1588 = vpack.c.b16 %v1566, %v1565
      %v1589 = vpack.c.b16 %v1568, %v1567
      %v1590 = vpack.c.b16 %v1570, %v1569
      %v1591 = vpack.c.b16 %v1572, %v1571
      %v1592 = vpack.c.b16 %v1574, %v1573
      %v1593 = vpack.c.b16 %v1576, %v1575
      %v1594 = vpack.c.b16 %v1578, %v1577
      %1611 = vmatprep.subr.bf16.mxu0 0
      %1612 = vmatpush1.bf16.msra.mxu0 %v1586
      %1613 = vmatprep.subr.bf16.mxu0 0
      %1614 = vmatpush1.bf16.msra.mxu0 %v1585
      %1615 = vmatprep.subr.bf16.mxu0 0
      %1616 = vmatpush1.bf16.msra.mxu0 %v1584
      %1617 = vmatprep.subr.bf16.mxu0 0
      %1618 = vmatpush1.bf16.msra.mxu0 %v1583
      %1619 = vmatprep.subr.bf16.mxu0 0
      %1620 = vmatpush1.bf16.msra.mxu0 %v1582
      %1621 = vmatprep.subr.bf16.mxu0 0
      %1622 = vmatpush1.bf16.msra.mxu0 %v1581
      %1623 = vmatprep.subr.bf16.mxu0 0
      %1624 = vmatpush1.bf16.msra.mxu0 %v1580
      %1625 = vmatprep.subr.bf16.mxu0 0
      %1626 = vmatpush1.bf16.msra.mxu0 %v1579
      %1627 = vmatprep.subr.bf16.mxu0 0
      %1628 = vmatpush2.bf16.msra.mxu0 %v1594
      %1629 = vmatprep.subr.bf16.mxu0 0
      %1630 = vmatpush2.bf16.msra.mxu0 %v1593
      %1631 = vmatprep.subr.bf16.mxu0 0
      %1632 = vmatpush2.bf16.msra.mxu0 %v1592
      %1633 = vmatprep.subr.bf16.mxu0 0
      %1634 = vmatpush2.bf16.msra.mxu0 %v1591
      %1635 = vmatprep.subr.bf16.mxu0 0
      %1636 = vmatpush2.bf16.msra.mxu0 %v1590
      %1637 = vmatprep.subr.bf16.mxu0 0
      %1638 = vmatpush2.bf16.msra.mxu0 %v1589
      %1639 = vmatprep.subr.bf16.mxu0 0
      %1640 = vmatpush2.bf16.msra.mxu0 %v1588
      %1641 = vmatprep.subr.bf16.mxu0 0
      %1642 = vmatpush2.bf16.msra.mxu0 %v1587
      %1643 = vmatprep.mubr.bf16.mxu0 %v1445
      %1644 = vmatmul.mubr.bf16.gmra.mxu0 %v1444
      %v1645 = vpop.f32.mrf.mxu0
      %v1646 = vadd.f32 %v1513, %v1645
      %v1647 = vpop.f32.mrf.mxu0
      %v1648 = vpop.f32.mrf.mxu0
      %v1649 = vadd.f32 %v1513, %v1648
      %v1650 = vpop.f32.mrf.mxu0
      %1651 = vmatprep.mubr.bf16.mxu0 %v1447
      %1652 = vmatmul.mubr.bf16.gmra.mxu0 %v1446
      %v1653 = vpop.f32.mrf.mxu0
      %v1654 = vadd.f32 %v1513, %v1653
      %v1655 = vpop.f32.mrf.mxu0
      %v1656 = vpop.f32.mrf.mxu0
      %v1657 = vadd.f32 %v1513, %v1656
      %v1658 = vpop.f32.mrf.mxu0
      %1659 = vmatprep.mubr.bf16.mxu0 %v1449
      %1660 = vmatmul.mubr.bf16.gmra.mxu0 %v1448
      %v1661 = vpop.f32.mrf.mxu0
      %v1662 = vadd.f32 %v1513, %v1661
      %v1663 = vpop.f32.mrf.mxu0
      %v1664 = vpop.f32.mrf.mxu0
      %v1665 = vadd.f32 %v1513, %v1664
      %v1666 = vpop.f32.mrf.mxu0
      %1667 = vmatprep.mubr.bf16.mxu0 %v1451
      %1668 = vmatmul.mubr.bf16.gmra.mxu0 %v1450
      %v1669 = vpop.f32.mrf.mxu0
      %v1670 = vadd.f32 %v1513, %v1669
      %v1671 = vpop.f32.mrf.mxu0
      %v1672 = vpop.f32.mrf.mxu0
      %v1673 = vadd.f32 %v1513, %v1672
      %v1674 = vpop.f32.mrf.mxu0
      %1675 = vmatprep.mubr.bf16.mxu0 %v1453
      %1676 = vmatmul.mubr.bf16.gmra.mxu0 %v1452
      %v1677 = vpop.f32.mrf.mxu0
      %v1678 = vadd.f32 %v1513, %v1677
      %v1679 = vpop.f32.mrf.mxu0
      %v1680 = vpop.f32.mrf.mxu0
      %v1681 = vadd.f32 %v1513, %v1680
      %v1682 = vpop.f32.mrf.mxu0
      %1683 = vmatprep.mubr.bf16.mxu0 %v1455
      %1684 = vmatmul.mubr.bf16.gmra.mxu0 %v1454
      %v1685 = vpop.f32.mrf.mxu0
      %v1686 = vadd.f32 %v1513, %v1685
      %v1687 = vpop.f32.mrf.mxu0
      %v1688 = vpop.f32.mrf.mxu0
      %v1689 = vadd.f32 %v1513, %v1688
      %v1690 = vpop.f32.mrf.mxu0
      %1691 = vmatprep.mubr.bf16.mxu0 %v1457
      %1692 = vmatmul.mubr.bf16.gmra.mxu0 %v1456
      %v1693 = vpop.f32.mrf.mxu0
      %v1694 = vadd.f32 %v1513, %v1693
      %v1695 = vpop.f32.mrf.mxu0
      %v1696 = vpop.f32.mrf.mxu0
      %v1697 = vadd.f32 %v1513, %v1696
      %v1698 = vpop.f32.mrf.mxu0
      %1699 = vmatprep.mubr.bf16.mxu0 %v1459
      %1700 = vmatmul.mubr.bf16.gmra.mxu0 %v1458
      %v1701 = vpop.f32.mrf.mxu0
      %v1702 = vadd.f32 %v1513, %v1701
      %v1703 = vpop.f32.mrf.mxu0
      %v1704 = vpop.f32.mrf.mxu0
      %v1705 = vadd.f32 %v1513, %v1704
      %v1706 = vpop.f32.mrf.mxu0
      %1707 = vmatprep.mubr.bf16.mxu0 %v1461
      %1708 = vmatmul.mubr.bf16.gmra.mxu0 %v1460
      %v1709 = vpop.f32.mrf.mxu0
      %v1710 = vadd.f32 %v1513, %v1709
      %v1711 = vpop.f32.mrf.mxu0
      %v1712 = vpop.f32.mrf.mxu0
      %v1713 = vadd.f32 %v1513, %v1712
      %v1714 = vpop.f32.mrf.mxu0
      %1715 = vmatprep.mubr.bf16.mxu0 %v1463
      %1716 = vmatmul.mubr.bf16.gmra.mxu0 %v1462
      %v1717 = vpop.f32.mrf.mxu0
      %v1718 = vadd.f32 %v1513, %v1717
      %v1719 = vpop.f32.mrf.mxu0
      %v1720 = vpop.f32.mrf.mxu0
      %v1721 = vadd.f32 %v1513, %v1720
      %v1722 = vpop.f32.mrf.mxu0
      %1723 = vmatprep.mubr.bf16.mxu0 %v1465
      %1724 = vmatmul.mubr.bf16.gmra.mxu0 %v1464
      %v1725 = vpop.f32.mrf.mxu0
      %v1726 = vadd.f32 %v1513, %v1725
      %v1727 = vpop.f32.mrf.mxu0
      %v1728 = vpop.f32.mrf.mxu0
      %v1729 = vadd.f32 %v1513, %v1728
      %v1730 = vpop.f32.mrf.mxu0
      %1731 = vmatprep.mubr.bf16.mxu0 %v1467
      %1732 = vmatmul.mubr.bf16.gmra.mxu0 %v1466
      %v1733 = vpop.f32.mrf.mxu0
      %v1734 = vadd.f32 %v1513, %v1733
      %v1735 = vpop.f32.mrf.mxu0
      %v1736 = vpop.f32.mrf.mxu0
      %v1737 = vadd.f32 %v1513, %v1736
      %v1738 = vpop.f32.mrf.mxu0
      %1739 = vmatprep.mubr.bf16.mxu0 %v1469
      %1740 = vmatmul.mubr.bf16.gmra.mxu0 %v1468
      %v1741 = vpop.f32.mrf.mxu0
      %v1742 = vadd.f32 %v1513, %v1741
      %v1743 = vpop.f32.mrf.mxu0
      %v1744 = vpop.f32.mrf.mxu0
      %v1745 = vadd.f32 %v1513, %v1744
      %v1746 = vpop.f32.mrf.mxu0
      %1747 = vmatprep.mubr.bf16.mxu0 %v1471
      %1748 = vmatmul.mubr.bf16.gmra.mxu0 %v1470
      %v1749 = vpop.f32.mrf.mxu0
      %v1750 = vadd.f32 %v1513, %v1749
      %v1751 = vpop.f32.mrf.mxu0
      %v1752 = vpop.f32.mrf.mxu0
      %v1753 = vadd.f32 %v1513, %v1752
      %v1754 = vpop.f32.mrf.mxu0
      %1755 = vmatprep.mubr.bf16.mxu0 %v1473
      %1756 = vmatmul.mubr.bf16.gmra.mxu0 %v1472
      %v1757 = vpop.f32.mrf.mxu0
      %v1758 = vadd.f32 %v1513, %v1757
      %v1759 = vpop.f32.mrf.mxu0
      %v1760 = vpop.f32.mrf.mxu0
      %v1761 = vadd.f32 %v1513, %v1760
      %v1762 = vpop.f32.mrf.mxu0
      %1763 = vmatprep.mubr.bf16.mxu0 %v1475
      %1764 = vmatmul.mubr.bf16.gmra.mxu0 %v1474
      %v1765 = vpop.f32.mrf.mxu0
      %v1766 = vadd.f32 %v1513, %v1765
      %v1767 = vpop.f32.mrf.mxu0
      %v1768 = vpop.f32.mrf.mxu0
      %v1769 = vadd.f32 %v1513, %v1768
      %v1770 = vpop.f32.mrf.mxu0
      %1771 = vdwg.mxu0
      %v1772 = vmax.f32 %v1646, 0.0
      %v1773 = vmax.f32 %v1649, 0.0
      %v1774 = vmax.f32 %v1654, 0.0
      %v1775 = vmax.f32 %v1657, 0.0
      %v1776 = vmax.f32 %v1662, 0.0
      %v1777 = vmax.f32 %v1665, 0.0
      %v1778 = vmax.f32 %v1670, 0.0
      %v1779 = vmax.f32 %v1673, 0.0
      %v1780 = vmax.f32 %v1678, 0.0
      %v1781 = vmax.f32 %v1681, 0.0
      %v1782 = vmax.f32 %v1686, 0.0
      %v1783 = vmax.f32 %v1689, 0.0
      %v1784 = vmax.f32 %v1694, 0.0
      %v1785 = vmax.f32 %v1697, 0.0
      %v1786 = vmax.f32 %v1702, 0.0
      %v1787 = vmax.f32 %v1705, 0.0
      %v1788 = vmax.f32 %v1710, 0.0
      %v1789 = vmax.f32 %v1713, 0.0
      %v1790 = vmax.f32 %v1718, 0.0
      %v1791 = vmax.f32 %v1721, 0.0
      %v1792 = vmax.f32 %v1726, 0.0
      %v1793 = vmax.f32 %v1729, 0.0
      %v1794 = vmax.f32 %v1734, 0.0
      %v1795 = vmax.f32 %v1737, 0.0
      %v1796 = vmax.f32 %v1742, 0.0
      %v1797 = vmax.f32 %v1745, 0.0
      %v1798 = vmax.f32 %v1750, 0.0
      %v1799 = vmax.f32 %v1753, 0.0
      %v1800 = vmax.f32 %v1758, 0.0
      %v1801 = vmax.f32 %v1761, 0.0
      %v1802 = vmax.f32 %v1766, 0.0
      %v1803 = vmax.f32 %v1769, 0.0
      %v1804 = vpack.c.bf16 %v1773, %v1772
      %v1805 = vpack.c.bf16 %v1775, %v1774
      %v1806 = vpack.c.bf16 %v1777, %v1776
      %v1807 = vpack.c.bf16 %v1779, %v1778
      %v1808 = vpack.c.bf16 %v1781, %v1780
      %v1809 = vpack.c.bf16 %v1783, %v1782
      %v1810 = vpack.c.bf16 %v1785, %v1784
      %v1811 = vpack.c.bf16 %v1787, %v1786
      %v1812 = vpack.c.bf16 %v1789, %v1788
      %v1813 = vpack.c.bf16 %v1791, %v1790
      %v1814 = vpack.c.bf16 %v1793, %v1792
      %v1815 = vpack.c.bf16 %v1795, %v1794
      %v1816 = vpack.c.bf16 %v1797, %v1796
      %v1817 = vpack.c.bf16 %v1799, %v1798
      %v1818 = vpack.c.bf16 %v1801, %v1800
      %v1819 = vpack.c.bf16 %v1803, %v1802
      %v1820 = vld [vmem:[%s5] sm:$0xf]
      %v1821 = vld [vmem:[%s5 + $0x4] sm:$0xf]
      %v1822 = vld [vmem:[%s5 + $0x8] sm:$0xf]
      %v1823 = vld [vmem:[%s5 + $0xc] sm:$0xf]
      %v1824 = vld [vmem:[%s5 + $0x10] sm:$0xf]
      %v1825 = vld [vmem:[%s5 + $0x14] sm:$0xf]
      %v1826 = vld [vmem:[%s5 + $0x18] sm:$0xf]
      %v1827 = vld [vmem:[%s5 + $0x1c] sm:$0xf]
      %v1828 = vld [vmem:[%s5 + $0x20] sm:$0xf]
      %v1829 = vld [vmem:[%s5 + $0x24] sm:$0xf]
      %v1830 = vld [vmem:[%s5 + $0x28] sm:$0xf]
      %v1831 = vld [vmem:[%s5 + $0x2c] sm:$0xf]
      %v1832 = vld [vmem:[%s5 + $0x30] sm:$0xf]
      %v1833 = vld [vmem:[%s5 + $0x34] sm:$0xf]
      %v1834 = vld [vmem:[%s5 + $0x38] sm:$0xf]
      %v1835 = vld [vmem:[%s5 + $0x3c] sm:$0xf]
      %v1836 = vld [vmem:[%s6] sm:$0x1]
      %v1838 = vlaneseq
      %v1839 = vshrl.u32 %v1838, 7
      %v1840 = vsub.s32 0, %v1839
      %v1841 = vrot.slane %v1836, %v1840
      %v1859 = vunpack.c.l.b16 %v1820
      %v1860 = vunpack.c.l.b16 %v1821
      %v1861 = vunpack.c.l.b16 %v1822
      %v1862 = vunpack.c.l.b16 %v1823
      %v1863 = vunpack.c.l.b16 %v1824
      %v1864 = vunpack.c.l.b16 %v1825
      %v1865 = vunpack.c.l.b16 %v1826
      %v1866 = vunpack.c.l.b16 %v1827
      %v1867 = vunpack.c.l.b16 %v1828
      %v1868 = vunpack.c.l.b16 %v1829
      %v1869 = vunpack.c.l.b16 %v1830
      %v1870 = vunpack.c.l.b16 %v1831
      %v1871 = vunpack.c.l.b16 %v1832
      %v1872 = vunpack.c.l.b16 %v1833
      %v1873 = vunpack.c.l.b16 %v1834
      %v1874 = vunpack.c.l.b16 %v1835
      %v1875 = vpack.c.b16 %v1860, %v1859
      %v1876 = vpack.c.b16 %v1862, %v1861
      %v1877 = vpack.c.b16 %v1864, %v1863
      %v1878 = vpack.c.b16 %v1866, %v1865
      %v1879 = vpack.c.b16 %v1868, %v1867
      %v1880 = vpack.c.b16 %v1870, %v1869
      %v1881 = vpack.c.b16 %v1872, %v1871
      %v1882 = vpack.c.b16 %v1874, %v1873
      %1891 = vmatprep.subr.bf16.mxu0 0
      %1892 = vmatpush1.bf16.msra.mxu0 %v1882
      %1893 = vmatprep.subr.bf16.mxu0 0
      %1894 = vmatpush1.bf16.msra.mxu0 %v1881
      %1895 = vmatprep.subr.bf16.mxu0 0
      %1896 = vmatpush1.bf16.msra.mxu0 %v1880
      %1897 = vmatprep.subr.bf16.mxu0 0
      %1898 = vmatpush1.bf16.msra.mxu0 %v1879
      %1899 = vmatprep.subr.bf16.mxu0 0
      %1900 = vmatpush1.bf16.msra.mxu0 %v1878
      %1901 = vmatprep.subr.bf16.mxu0 0
      %1902 = vmatpush1.bf16.msra.mxu0 %v1877
      %1903 = vmatprep.subr.bf16.mxu0 0
      %1904 = vmatpush1.bf16.msra.mxu0 %v1876
      %1905 = vmatprep.subr.bf16.mxu0 0
      %1906 = vmatpush1.bf16.msra.mxu0 %v1875
      %1907 = vmatprep.subr.bf16.mxu0 0
      %1908 = vmatpush2.bf16.msra.mxu0 0
      %1909 = vmatprep.subr.bf16.mxu0 0
      %1910 = vmatpush2.bf16.msra.mxu0 0
      %1911 = vmatprep.subr.bf16.mxu0 0
      %1912 = vmatpush2.bf16.msra.mxu0 0
      %1913 = vmatprep.subr.bf16.mxu0 0
      %1914 = vmatpush2.bf16.msra.mxu0 0
      %1915 = vmatprep.subr.bf16.mxu0 0
      %1916 = vmatpush2.bf16.msra.mxu0 0
      %1917 = vmatprep.subr.bf16.mxu0 0
      %1918 = vmatpush2.bf16.msra.mxu0 0
      %1919 = vmatprep.subr.bf16.mxu0 0
      %1920 = vmatpush2.bf16.msra.mxu0 0
      %1921 = vmatprep.subr.bf16.mxu0 0
      %1922 = vmatpush2.bf16.msra.mxu0 0
      %1923 = vmatprep.mubr.bf16.mxu0 0
      %1924 = vmatmul.mubr.bf16.gmra.mxu0 %v1804
      %v1925 = vpop.f32.mrf.mxu0
      %v1926 = vadd.f32 %v1841, %v1925
      %v1927 = vpop.f32.mrf.mxu0
      %v1928 = vpop.f32.mrf.mxu0
      %v1929 = vadd.f32 %v1841, %v1928
      %v1930 = vpop.f32.mrf.mxu0
      %1931 = vmatprep.mubr.bf16.mxu0 0
      %1932 = vmatmul.mubr.bf16.gmra.mxu0 %v1805
      %v1933 = vpop.f32.mrf.mxu0
      %v1934 = vadd.f32 %v1841, %v1933
      %v1935 = vpop.f32.mrf.mxu0
      %v1936 = vpop.f32.mrf.mxu0
      %v1937 = vadd.f32 %v1841, %v1936
      %v1938 = vpop.f32.mrf.mxu0
      %1939 = vmatprep.mubr.bf16.mxu0 0
      %1940 = vmatmul.mubr.bf16.gmra.mxu0 %v1806
      %v1941 = vpop.f32.mrf.mxu0
      %v1942 = vadd.f32 %v1841, %v1941
      %v1943 = vpop.f32.mrf.mxu0
      %v1944 = vpop.f32.mrf.mxu0
      %v1945 = vadd.f32 %v1841, %v1944
      %v1946 = vpop.f32.mrf.mxu0
      %1947 = vmatprep.mubr.bf16.mxu0 0
      %1948 = vmatmul.mubr.bf16.gmra.mxu0 %v1807
      %v1949 = vpop.f32.mrf.mxu0
      %v1950 = vadd.f32 %v1841, %v1949
      %v1951 = vpop.f32.mrf.mxu0
      %v1952 = vpop.f32.mrf.mxu0
      %v1953 = vadd.f32 %v1841, %v1952
      %v1954 = vpop.f32.mrf.mxu0
      %1955 = vmatprep.mubr.bf16.mxu0 0
      %1956 = vmatmul.mubr.bf16.gmra.mxu0 %v1808
      %v1957 = vpop.f32.mrf.mxu0
      %v1958 = vadd.f32 %v1841, %v1957
      %v1959 = vpop.f32.mrf.mxu0
      %v1960 = vpop.f32.mrf.mxu0
      %v1961 = vadd.f32 %v1841, %v1960
      %v1962 = vpop.f32.mrf.mxu0
      %1963 = vmatprep.mubr.bf16.mxu0 0
      %1964 = vmatmul.mubr.bf16.gmra.mxu0 %v1809
      %v1965 = vpop.f32.mrf.mxu0
      %v1966 = vadd.f32 %v1841, %v1965
      %v1967 = vpop.f32.mrf.mxu0
      %v1968 = vpop.f32.mrf.mxu0
      %v1969 = vadd.f32 %v1841, %v1968
      %v1970 = vpop.f32.mrf.mxu0
      %1971 = vmatprep.mubr.bf16.mxu0 0
      %1972 = vmatmul.mubr.bf16.gmra.mxu0 %v1810
      %v1973 = vpop.f32.mrf.mxu0
      %v1974 = vadd.f32 %v1841, %v1973
      %v1975 = vpop.f32.mrf.mxu0
      %v1976 = vpop.f32.mrf.mxu0
      %v1977 = vadd.f32 %v1841, %v1976
      %v1978 = vpop.f32.mrf.mxu0
      %1979 = vmatprep.mubr.bf16.mxu0 0
      %1980 = vmatmul.mubr.bf16.gmra.mxu0 %v1811
      %v1981 = vpop.f32.mrf.mxu0
      %v1982 = vadd.f32 %v1841, %v1981
      %v1983 = vpop.f32.mrf.mxu0
      %v1984 = vpop.f32.mrf.mxu0
      %v1985 = vadd.f32 %v1841, %v1984
      %v1986 = vpop.f32.mrf.mxu0
      %1987 = vmatprep.mubr.bf16.mxu0 0
      %1988 = vmatmul.mubr.bf16.gmra.mxu0 %v1812
      %v1989 = vpop.f32.mrf.mxu0
      %v1990 = vadd.f32 %v1841, %v1989
      %v1991 = vpop.f32.mrf.mxu0
      %v1992 = vpop.f32.mrf.mxu0
      %v1993 = vadd.f32 %v1841, %v1992
      %v1994 = vpop.f32.mrf.mxu0
      %1995 = vmatprep.mubr.bf16.mxu0 0
      %1996 = vmatmul.mubr.bf16.gmra.mxu0 %v1813
      %v1997 = vpop.f32.mrf.mxu0
      %v1998 = vadd.f32 %v1841, %v1997
      %v1999 = vpop.f32.mrf.mxu0
      %v2000 = vpop.f32.mrf.mxu0
      %v2001 = vadd.f32 %v1841, %v2000
      %v2002 = vpop.f32.mrf.mxu0
      %2003 = vmatprep.mubr.bf16.mxu0 0
      %2004 = vmatmul.mubr.bf16.gmra.mxu0 %v1814
      %v2005 = vpop.f32.mrf.mxu0
      %v2006 = vadd.f32 %v1841, %v2005
      %v2007 = vpop.f32.mrf.mxu0
      %v2008 = vpop.f32.mrf.mxu0
      %v2009 = vadd.f32 %v1841, %v2008
      %v2010 = vpop.f32.mrf.mxu0
      %2011 = vmatprep.mubr.bf16.mxu0 0
      %2012 = vmatmul.mubr.bf16.gmra.mxu0 %v1815
      %v2013 = vpop.f32.mrf.mxu0
      %v2014 = vadd.f32 %v1841, %v2013
      %v2015 = vpop.f32.mrf.mxu0
      %v2016 = vpop.f32.mrf.mxu0
      %v2017 = vadd.f32 %v1841, %v2016
      %v2018 = vpop.f32.mrf.mxu0
      %2019 = vmatprep.mubr.bf16.mxu0 0
      %2020 = vmatmul.mubr.bf16.gmra.mxu0 %v1816
      %v2021 = vpop.f32.mrf.mxu0
      %v2022 = vadd.f32 %v1841, %v2021
      %v2023 = vpop.f32.mrf.mxu0
      %v2024 = vpop.f32.mrf.mxu0
      %v2025 = vadd.f32 %v1841, %v2024
      %v2026 = vpop.f32.mrf.mxu0
      %2027 = vmatprep.mubr.bf16.mxu0 0
      %2028 = vmatmul.mubr.bf16.gmra.mxu0 %v1817
      %v2029 = vpop.f32.mrf.mxu0
      %v2030 = vadd.f32 %v1841, %v2029
      %v2031 = vpop.f32.mrf.mxu0
      %v2032 = vpop.f32.mrf.mxu0
      %v2033 = vadd.f32 %v1841, %v2032
      %v2034 = vpop.f32.mrf.mxu0
      %2035 = vmatprep.mubr.bf16.mxu0 0
      %2036 = vmatmul.mubr.bf16.gmra.mxu0 %v1818
      %v2037 = vpop.f32.mrf.mxu0
      %v2038 = vadd.f32 %v1841, %v2037
      %v2039 = vpop.f32.mrf.mxu0
      %v2040 = vpop.f32.mrf.mxu0
      %v2041 = vadd.f32 %v1841, %v2040
      %v2042 = vpop.f32.mrf.mxu0
      %2043 = vmatprep.mubr.bf16.mxu0 0
      %2044 = vmatmul.mubr.bf16.gmra.mxu0 %v1819
      %v2045 = vpop.f32.mrf.mxu0
      %v2046 = vadd.f32 %v1841, %v2045
      %v2047 = vpop.f32.mrf.mxu0
      %v2048 = vpop.f32.mrf.mxu0
      %v2049 = vadd.f32 %v1841, %v2048
      %v2050 = vpop.f32.mrf.mxu0
      %2051 = vdwg.mxu0
      %v2052 = vmax.f32 %v1926, 0.0
      %v2053 = vmax.f32 %v1929, 0.0
      %v2054 = vmax.f32 %v1934, 0.0
      %v2055 = vmax.f32 %v1937, 0.0
      %v2056 = vmax.f32 %v1942, 0.0
      %v2057 = vmax.f32 %v1945, 0.0
      %v2058 = vmax.f32 %v1950, 0.0
      %v2059 = vmax.f32 %v1953, 0.0
      %v2060 = vmax.f32 %v1958, 0.0
      %v2061 = vmax.f32 %v1961, 0.0
      %v2062 = vmax.f32 %v1966, 0.0
      %v2063 = vmax.f32 %v1969, 0.0
      %v2064 = vmax.f32 %v1974, 0.0
      %v2065 = vmax.f32 %v1977, 0.0
      %v2066 = vmax.f32 %v1982, 0.0
      %v2067 = vmax.f32 %v1985, 0.0
      %v2068 = vmax.f32 %v1990, 0.0
      %v2069 = vmax.f32 %v1993, 0.0
      %v2070 = vmax.f32 %v1998, 0.0
      %v2071 = vmax.f32 %v2001, 0.0
      %v2072 = vmax.f32 %v2006, 0.0
      %v2073 = vmax.f32 %v2009, 0.0
      %v2074 = vmax.f32 %v2014, 0.0
      %v2075 = vmax.f32 %v2017, 0.0
      %v2076 = vmax.f32 %v2022, 0.0
      %v2077 = vmax.f32 %v2025, 0.0
      %v2078 = vmax.f32 %v2030, 0.0
      %v2079 = vmax.f32 %v2033, 0.0
      %v2080 = vmax.f32 %v2038, 0.0
      %v2081 = vmax.f32 %v2041, 0.0
      %v2082 = vmax.f32 %v2046, 0.0
      %v2083 = vmax.f32 %v2049, 0.0
      %v2084 = vpack.c.bf16 %v2053, %v2052
      %v2085 = vpack.c.bf16 %v2055, %v2054
      %v2086 = vpack.c.bf16 %v2057, %v2056
      %v2087 = vpack.c.bf16 %v2059, %v2058
      %v2088 = vpack.c.bf16 %v2061, %v2060
      %v2089 = vpack.c.bf16 %v2063, %v2062
      %v2090 = vpack.c.bf16 %v2065, %v2064
      %v2091 = vpack.c.bf16 %v2067, %v2066
      %v2092 = vpack.c.bf16 %v2069, %v2068
      %v2093 = vpack.c.bf16 %v2071, %v2070
      %v2094 = vpack.c.bf16 %v2073, %v2072
      %v2095 = vpack.c.bf16 %v2075, %v2074
      %v2096 = vpack.c.bf16 %v2077, %v2076
      %v2097 = vpack.c.bf16 %v2079, %v2078
      %v2098 = vpack.c.bf16 %v2081, %v2080
      %v2099 = vpack.c.bf16 %v2083, %v2082
      %v2100 = vld [vmem:[%s7] sm:$0xff]
      %v2101 = vld [vmem:[%s7 + $0x8] sm:$0xff]
      %v2102 = vld [vmem:[%s7 + $0x10] sm:$0xff]
      %v2103 = vld [vmem:[%s7 + $0x18] sm:$0xff]
      %v2104 = vld [vmem:[%s7 + $0x20] sm:$0xff]
      %v2105 = vld [vmem:[%s7 + $0x28] sm:$0xff]
      %v2106 = vld [vmem:[%s7 + $0x30] sm:$0xff]
      %v2107 = vld [vmem:[%s7 + $0x38] sm:$0xff]
      %v2108 = vld [vmem:[%s7 + $0x40] sm:$0xff]
      %v2109 = vld [vmem:[%s7 + $0x48] sm:$0xff]
      %v2110 = vld [vmem:[%s7 + $0x50] sm:$0xff]
      %v2111 = vld [vmem:[%s7 + $0x58] sm:$0xff]
      %v2112 = vld [vmem:[%s7 + $0x60] sm:$0xff]
      %v2113 = vld [vmem:[%s7 + $0x68] sm:$0xff]
      %v2114 = vld [vmem:[%s7 + $0x70] sm:$0xff]
      %v2115 = vld [vmem:[%s7 + $0x78] sm:$0xff]
      %v2116 = vld [vmem:[%s8] sm:$0x3]
      %v2118 = vlaneseq
      %v2119 = vshrl.u32 %v2118, 7
      %v2120 = vsub.s32 0, %v2119
      %v2121 = vrot.slane %v2116, %v2120
      %v2122 = vlaneseq
      %v2123 = vshrl.u32 %v2122, 7
      %v2124 = vsub.s32 1, %v2123
      %v2125 = vrot.slane %v2116, %v2124
      %v2144 = vunpack.c.l.b16 %v2100
      %v2145 = vunpack.c.h.b16 %v2100
      %v2146 = vunpack.c.l.b16 %v2101
      %v2147 = vunpack.c.h.b16 %v2101
      %v2148 = vunpack.c.l.b16 %v2102
      %v2149 = vunpack.c.h.b16 %v2102
      %v2150 = vunpack.c.l.b16 %v2103
      %v2151 = vunpack.c.h.b16 %v2103
      %v2152 = vunpack.c.l.b16 %v2104
      %v2153 = vunpack.c.h.b16 %v2104
      %v2154 = vunpack.c.l.b16 %v2105
      %v2155 = vunpack.c.h.b16 %v2105
      %v2156 = vunpack.c.l.b16 %v2106
      %v2157 = vunpack.c.h.b16 %v2106
      %v2158 = vunpack.c.l.b16 %v2107
      %v2159 = vunpack.c.h.b16 %v2107
      %v2160 = vunpack.c.l.b16 %v2108
      %v2161 = vunpack.c.h.b16 %v2108
      %v2162 = vunpack.c.l.b16 %v2109
      %v2163 = vunpack.c.h.b16 %v2109
      %v2164 = vunpack.c.l.b16 %v2110
      %v2165 = vunpack.c.h.b16 %v2110
      %v2166 = vunpack.c.l.b16 %v2111
      %v2167 = vunpack.c.h.b16 %v2111
      %v2168 = vunpack.c.l.b16 %v2112
      %v2169 = vunpack.c.h.b16 %v2112
      %v2170 = vunpack.c.l.b16 %v2113
      %v2171 = vunpack.c.h.b16 %v2113
      %v2172 = vunpack.c.l.b16 %v2114
      %v2173 = vunpack.c.h.b16 %v2114
      %v2174 = vunpack.c.l.b16 %v2115
      %v2175 = vunpack.c.h.b16 %v2115
      %v2176 = vpack.c.b16 %v2146, %v2144
      %v2177 = vpack.c.b16 %v2147, %v2145
      %v2178 = vpack.c.b16 %v2150, %v2148
      %v2179 = vpack.c.b16 %v2151, %v2149
      %v2180 = vpack.c.b16 %v2154, %v2152
      %v2181 = vpack.c.b16 %v2155, %v2153
      %v2182 = vpack.c.b16 %v2158, %v2156
      %v2183 = vpack.c.b16 %v2159, %v2157
      %v2184 = vpack.c.b16 %v2162, %v2160
      %v2185 = vpack.c.b16 %v2163, %v2161
      %v2186 = vpack.c.b16 %v2166, %v2164
      %v2187 = vpack.c.b16 %v2167, %v2165
      %v2188 = vpack.c.b16 %v2170, %v2168
      %v2189 = vpack.c.b16 %v2171, %v2169
      %v2190 = vpack.c.b16 %v2174, %v2172
      %v2191 = vpack.c.b16 %v2175, %v2173
      %2208 = vmatprep.subr.bf16.mxu0 %v2191
      %2209 = vmatpush1.bf16.msra.mxu0 %v2190
      %2210 = vmatprep.subr.bf16.mxu0 %v2189
      %2211 = vmatpush1.bf16.msra.mxu0 %v2188
      %2212 = vmatprep.subr.bf16.mxu0 %v2187
      %2213 = vmatpush1.bf16.msra.mxu0 %v2186
      %2214 = vmatprep.subr.bf16.mxu0 %v2185
      %2215 = vmatpush1.bf16.msra.mxu0 %v2184
      %2216 = vmatprep.subr.bf16.mxu0 %v2183
      %2217 = vmatpush1.bf16.msra.mxu0 %v2182
      %2218 = vmatprep.subr.bf16.mxu0 %v2181
      %2219 = vmatpush1.bf16.msra.mxu0 %v2180
      %2220 = vmatprep.subr.bf16.mxu0 %v2179
      %2221 = vmatpush1.bf16.msra.mxu0 %v2178
      %2222 = vmatprep.subr.bf16.mxu0 %v2177
      %2223 = vmatpush1.bf16.msra.mxu0 %v2176
      %2224 = vmatprep.subr.bf16.mxu0 0
      %2225 = vmatpush2.bf16.msra.mxu0 0
      %2226 = vmatprep.subr.bf16.mxu0 0
      %2227 = vmatpush2.bf16.msra.mxu0 0
      %2228 = vmatprep.subr.bf16.mxu0 0
      %2229 = vmatpush2.bf16.msra.mxu0 0
      %2230 = vmatprep.subr.bf16.mxu0 0
      %2231 = vmatpush2.bf16.msra.mxu0 0
      %2232 = vmatprep.subr.bf16.mxu0 0
      %2233 = vmatpush2.bf16.msra.mxu0 0
      %2234 = vmatprep.subr.bf16.mxu0 0
      %2235 = vmatpush2.bf16.msra.mxu0 0
      %2236 = vmatprep.subr.bf16.mxu0 0
      %2237 = vmatpush2.bf16.msra.mxu0 0
      %2238 = vmatprep.subr.bf16.mxu0 0
      %2239 = vmatpush2.bf16.msra.mxu0 0
      %2240 = vmatprep.mubr.bf16.mxu0 0
      %2241 = vmatmul.mubr.bf16.gmra.mxu0 %v2084
      %v2242 = vpop.f32.mrf.mxu0
      %v2243 = vadd.f32 %v2121, %v2242
      %v2244 = vpop.f32.mrf.mxu0
      %v2245 = vadd.f32 %v2125, %v2244
      %v2246 = vpop.f32.mrf.mxu0
      %v2247 = vadd.f32 %v2121, %v2246
      %v2248 = vpop.f32.mrf.mxu0
      %v2249 = vadd.f32 %v2125, %v2248
      %2250 = vmatprep.mubr.bf16.mxu0 0
      %2251 = vmatmul.mubr.bf16.gmra.mxu0 %v2085
      %v2252 = vpop.f32.mrf.mxu0
      %v2253 = vadd.f32 %v2121, %v2252
      %v2254 = vpop.f32.mrf.mxu0
      %v2255 = vadd.f32 %v2125, %v2254
      %v2256 = vpop.f32.mrf.mxu0
      %v2257 = vadd.f32 %v2121, %v2256
      %v2258 = vpop.f32.mrf.mxu0
      %v2259 = vadd.f32 %v2125, %v2258
      %2260 = vmatprep.mubr.bf16.mxu0 0
      %2261 = vmatmul.mubr.bf16.gmra.mxu0 %v2086
      %v2262 = vpop.f32.mrf.mxu0
      %v2263 = vadd.f32 %v2121, %v2262
      %v2264 = vpop.f32.mrf.mxu0
      %v2265 = vadd.f32 %v2125, %v2264
      %v2266 = vpop.f32.mrf.mxu0
      %v2267 = vadd.f32 %v2121, %v2266
      %v2268 = vpop.f32.mrf.mxu0
      %v2269 = vadd.f32 %v2125, %v2268
      %2270 = vmatprep.mubr.bf16.mxu0 0
      %2271 = vmatmul.mubr.bf16.gmra.mxu0 %v2087
      %v2272 = vpop.f32.mrf.mxu0
      %v2273 = vadd.f32 %v2121, %v2272
      %v2274 = vpop.f32.mrf.mxu0
      %v2275 = vadd.f32 %v2125, %v2274
      %v2276 = vpop.f32.mrf.mxu0
      %v2277 = vadd.f32 %v2121, %v2276
      %v2278 = vpop.f32.mrf.mxu0
      %v2279 = vadd.f32 %v2125, %v2278
      %2280 = vmatprep.mubr.bf16.mxu0 0
      %2281 = vmatmul.mubr.bf16.gmra.mxu0 %v2088
      %v2282 = vpop.f32.mrf.mxu0
      %v2283 = vadd.f32 %v2121, %v2282
      %v2284 = vpop.f32.mrf.mxu0
      %v2285 = vadd.f32 %v2125, %v2284
      %v2286 = vpop.f32.mrf.mxu0
      %v2287 = vadd.f32 %v2121, %v2286
      %v2288 = vpop.f32.mrf.mxu0
      %v2289 = vadd.f32 %v2125, %v2288
      %2290 = vmatprep.mubr.bf16.mxu0 0
      %2291 = vmatmul.mubr.bf16.gmra.mxu0 %v2089
      %v2292 = vpop.f32.mrf.mxu0
      %v2293 = vadd.f32 %v2121, %v2292
      %v2294 = vpop.f32.mrf.mxu0
      %v2295 = vadd.f32 %v2125, %v2294
      %v2296 = vpop.f32.mrf.mxu0
      %v2297 = vadd.f32 %v2121, %v2296
      %v2298 = vpop.f32.mrf.mxu0
      %v2299 = vadd.f32 %v2125, %v2298
      %2300 = vmatprep.mubr.bf16.mxu0 0
      %2301 = vmatmul.mubr.bf16.gmra.mxu0 %v2090
      %v2302 = vpop.f32.mrf.mxu0
      %v2303 = vadd.f32 %v2121, %v2302
      %v2304 = vpop.f32.mrf.mxu0
      %v2305 = vadd.f32 %v2125, %v2304
      %v2306 = vpop.f32.mrf.mxu0
      %v2307 = vadd.f32 %v2121, %v2306
      %v2308 = vpop.f32.mrf.mxu0
      %v2309 = vadd.f32 %v2125, %v2308
      %2310 = vmatprep.mubr.bf16.mxu0 0
      %2311 = vmatmul.mubr.bf16.gmra.mxu0 %v2091
      %v2312 = vpop.f32.mrf.mxu0
      %v2313 = vadd.f32 %v2121, %v2312
      %v2314 = vpop.f32.mrf.mxu0
      %v2315 = vadd.f32 %v2125, %v2314
      %v2316 = vpop.f32.mrf.mxu0
      %v2317 = vadd.f32 %v2121, %v2316
      %v2318 = vpop.f32.mrf.mxu0
      %v2319 = vadd.f32 %v2125, %v2318
      %2320 = vmatprep.mubr.bf16.mxu0 0
      %2321 = vmatmul.mubr.bf16.gmra.mxu0 %v2092
      %v2322 = vpop.f32.mrf.mxu0
      %v2323 = vadd.f32 %v2121, %v2322
      %v2324 = vpop.f32.mrf.mxu0
      %v2325 = vadd.f32 %v2125, %v2324
      %v2326 = vpop.f32.mrf.mxu0
      %v2327 = vadd.f32 %v2121, %v2326
      %v2328 = vpop.f32.mrf.mxu0
      %v2329 = vadd.f32 %v2125, %v2328
      %2330 = vmatprep.mubr.bf16.mxu0 0
      %2331 = vmatmul.mubr.bf16.gmra.mxu0 %v2093
      %v2332 = vpop.f32.mrf.mxu0
      %v2333 = vadd.f32 %v2121, %v2332
      %v2334 = vpop.f32.mrf.mxu0
      %v2335 = vadd.f32 %v2125, %v2334
      %v2336 = vpop.f32.mrf.mxu0
      %v2337 = vadd.f32 %v2121, %v2336
      %v2338 = vpop.f32.mrf.mxu0
      %v2339 = vadd.f32 %v2125, %v2338
      %2340 = vmatprep.mubr.bf16.mxu0 0
      %2341 = vmatmul.mubr.bf16.gmra.mxu0 %v2094
      %v2342 = vpop.f32.mrf.mxu0
      %v2343 = vadd.f32 %v2121, %v2342
      %v2344 = vpop.f32.mrf.mxu0
      %v2345 = vadd.f32 %v2125, %v2344
      %v2346 = vpop.f32.mrf.mxu0
      %v2347 = vadd.f32 %v2121, %v2346
      %v2348 = vpop.f32.mrf.mxu0
      %v2349 = vadd.f32 %v2125, %v2348
      %2350 = vmatprep.mubr.bf16.mxu0 0
      %2351 = vmatmul.mubr.bf16.gmra.mxu0 %v2095
      %v2352 = vpop.f32.mrf.mxu0
      %v2353 = vadd.f32 %v2121, %v2352
      %v2354 = vpop.f32.mrf.mxu0
      %v2355 = vadd.f32 %v2125, %v2354
      %v2356 = vpop.f32.mrf.mxu0
      %v2357 = vadd.f32 %v2121, %v2356
      %v2358 = vpop.f32.mrf.mxu0
      %v2359 = vadd.f32 %v2125, %v2358
      %2360 = vmatprep.mubr.bf16.mxu0 0
      %2361 = vmatmul.mubr.bf16.gmra.mxu0 %v2096
      %v2362 = vpop.f32.mrf.mxu0
      %v2363 = vadd.f32 %v2121, %v2362
      %v2364 = vpop.f32.mrf.mxu0
      %v2365 = vadd.f32 %v2125, %v2364
      %v2366 = vpop.f32.mrf.mxu0
      %v2367 = vadd.f32 %v2121, %v2366
      %v2368 = vpop.f32.mrf.mxu0
      %v2369 = vadd.f32 %v2125, %v2368
      %2370 = vmatprep.mubr.bf16.mxu0 0
      %2371 = vmatmul.mubr.bf16.gmra.mxu0 %v2097
      %v2372 = vpop.f32.mrf.mxu0
      %v2373 = vadd.f32 %v2121, %v2372
      %v2374 = vpop.f32.mrf.mxu0
      %v2375 = vadd.f32 %v2125, %v2374
      %v2376 = vpop.f32.mrf.mxu0
      %v2377 = vadd.f32 %v2121, %v2376
      %v2378 = vpop.f32.mrf.mxu0
      %v2379 = vadd.f32 %v2125, %v2378
      %2380 = vmatprep.mubr.bf16.mxu0 0
      %2381 = vmatmul.mubr.bf16.gmra.mxu0 %v2098
      %v2382 = vpop.f32.mrf.mxu0
      %v2383 = vadd.f32 %v2121, %v2382
      %v2384 = vpop.f32.mrf.mxu0
      %v2385 = vadd.f32 %v2125, %v2384
      %v2386 = vpop.f32.mrf.mxu0
      %v2387 = vadd.f32 %v2121, %v2386
      %v2388 = vpop.f32.mrf.mxu0
      %v2389 = vadd.f32 %v2125, %v2388
      %2390 = vmatprep.mubr.bf16.mxu0 0
      %2391 = vmatmul.mubr.bf16.gmra.mxu0 %v2099
      %v2392 = vpop.f32.mrf.mxu0
      %v2393 = vadd.f32 %v2121, %v2392
      %v2394 = vpop.f32.mrf.mxu0
      %v2395 = vadd.f32 %v2125, %v2394
      %v2396 = vpop.f32.mrf.mxu0
      %v2397 = vadd.f32 %v2121, %v2396
      %v2398 = vpop.f32.mrf.mxu0
      %v2399 = vadd.f32 %v2125, %v2398
      %2400 = vdwg.mxu0
      %v2401 = vmax.f32 %v2243, 0.0
      %v2402 = vmax.f32 %v2245, 0.0
      %v2403 = vmax.f32 %v2247, 0.0
      %v2404 = vmax.f32 %v2249, 0.0
      %v2405 = vmax.f32 %v2253, 0.0
      %v2406 = vmax.f32 %v2255, 0.0
      %v2407 = vmax.f32 %v2257, 0.0
      %v2408 = vmax.f32 %v2259, 0.0
      %v2409 = vmax.f32 %v2263, 0.0
      %v2410 = vmax.f32 %v2265, 0.0
      %v2411 = vmax.f32 %v2267, 0.0
      %v2412 = vmax.f32 %v2269, 0.0
      %v2413 = vmax.f32 %v2273, 0.0
      %v2414 = vmax.f32 %v2275, 0.0
      %v2415 = vmax.f32 %v2277, 0.0
      %v2416 = vmax.f32 %v2279, 0.0
      %v2417 = vmax.f32 %v2283, 0.0
      %v2418 = vmax.f32 %v2285, 0.0
      %v2419 = vmax.f32 %v2287, 0.0
      %v2420 = vmax.f32 %v2289, 0.0
      %v2421 = vmax.f32 %v2293, 0.0
      %v2422 = vmax.f32 %v2295, 0.0
      %v2423 = vmax.f32 %v2297, 0.0
      %v2424 = vmax.f32 %v2299, 0.0
      %v2425 = vmax.f32 %v2303, 0.0
      %v2426 = vmax.f32 %v2305, 0.0
      %v2427 = vmax.f32 %v2307, 0.0
      %v2428 = vmax.f32 %v2309, 0.0
      %v2429 = vmax.f32 %v2313, 0.0
      %v2430 = vmax.f32 %v2315, 0.0
      %v2431 = vmax.f32 %v2317, 0.0
      %v2432 = vmax.f32 %v2319, 0.0
      %v2433 = vmax.f32 %v2323, 0.0
      %v2434 = vmax.f32 %v2325, 0.0
      %v2435 = vmax.f32 %v2327, 0.0
      %v2436 = vmax.f32 %v2329, 0.0
      %v2437 = vmax.f32 %v2333, 0.0
      %v2438 = vmax.f32 %v2335, 0.0
      %v2439 = vmax.f32 %v2337, 0.0
      %v2440 = vmax.f32 %v2339, 0.0
      %v2441 = vmax.f32 %v2343, 0.0
      %v2442 = vmax.f32 %v2345, 0.0
      %v2443 = vmax.f32 %v2347, 0.0
      %v2444 = vmax.f32 %v2349, 0.0
      %v2445 = vmax.f32 %v2353, 0.0
      %v2446 = vmax.f32 %v2355, 0.0
      %v2447 = vmax.f32 %v2357, 0.0
      %v2448 = vmax.f32 %v2359, 0.0
      %v2449 = vmax.f32 %v2363, 0.0
      %v2450 = vmax.f32 %v2365, 0.0
      %v2451 = vmax.f32 %v2367, 0.0
      %v2452 = vmax.f32 %v2369, 0.0
      %v2453 = vmax.f32 %v2373, 0.0
      %v2454 = vmax.f32 %v2375, 0.0
      %v2455 = vmax.f32 %v2377, 0.0
      %v2456 = vmax.f32 %v2379, 0.0
      %v2457 = vmax.f32 %v2383, 0.0
      %v2458 = vmax.f32 %v2385, 0.0
      %v2459 = vmax.f32 %v2387, 0.0
      %v2460 = vmax.f32 %v2389, 0.0
      %v2461 = vmax.f32 %v2393, 0.0
      %v2462 = vmax.f32 %v2395, 0.0
      %v2463 = vmax.f32 %v2397, 0.0
      %v2464 = vmax.f32 %v2399, 0.0
      %v2465 = vpack.c.bf16 %v2403, %v2401
      %v2466 = vpack.c.bf16 %v2404, %v2402
      %v2467 = vpack.c.bf16 %v2407, %v2405
      %v2468 = vpack.c.bf16 %v2408, %v2406
      %v2469 = vpack.c.bf16 %v2411, %v2409
      %v2470 = vpack.c.bf16 %v2412, %v2410
      %v2471 = vpack.c.bf16 %v2415, %v2413
      %v2472 = vpack.c.bf16 %v2416, %v2414
      %v2473 = vpack.c.bf16 %v2419, %v2417
      %v2474 = vpack.c.bf16 %v2420, %v2418
      %v2475 = vpack.c.bf16 %v2423, %v2421
      %v2476 = vpack.c.bf16 %v2424, %v2422
      %v2477 = vpack.c.bf16 %v2427, %v2425
      %v2478 = vpack.c.bf16 %v2428, %v2426
      %v2479 = vpack.c.bf16 %v2431, %v2429
      %v2480 = vpack.c.bf16 %v2432, %v2430
      %v2481 = vpack.c.bf16 %v2435, %v2433
      %v2482 = vpack.c.bf16 %v2436, %v2434
      %v2483 = vpack.c.bf16 %v2439, %v2437
      %v2484 = vpack.c.bf16 %v2440, %v2438
      %v2485 = vpack.c.bf16 %v2443, %v2441
      %v2486 = vpack.c.bf16 %v2444, %v2442
      %v2487 = vpack.c.bf16 %v2447, %v2445
      %v2488 = vpack.c.bf16 %v2448, %v2446
      %v2489 = vpack.c.bf16 %v2451, %v2449
      %v2490 = vpack.c.bf16 %v2452, %v2450
      %v2491 = vpack.c.bf16 %v2455, %v2453
      %v2492 = vpack.c.bf16 %v2456, %v2454
      %v2493 = vpack.c.bf16 %v2459, %v2457
      %v2494 = vpack.c.bf16 %v2460, %v2458
      %v2495 = vpack.c.bf16 %v2463, %v2461
      %v2496 = vpack.c.bf16 %v2464, %v2462
      %v2497 = vld [vmem:[%s9] sm:$0xff]
      %v2498 = vld [vmem:[%s9 + $0x8] sm:$0xf]
      %v2499 = vld [vmem:[%s9 + $0xc] sm:$0xff]
      %v2500 = vld [vmem:[%s9 + $0x14] sm:$0xf]
      %v2501 = vld [vmem:[%s9 + $0x18] sm:$0xff]
      %v2502 = vld [vmem:[%s9 + $0x20] sm:$0xf]
      %v2503 = vld [vmem:[%s9 + $0x24] sm:$0xff]
      %v2504 = vld [vmem:[%s9 + $0x2c] sm:$0xf]
      %v2505 = vld [vmem:[%s9 + $0x30] sm:$0xff]
      %v2506 = vld [vmem:[%s9 + $0x38] sm:$0xf]
      %v2507 = vld [vmem:[%s9 + $0x3c] sm:$0xff]
      %v2508 = vld [vmem:[%s9 + $0x44] sm:$0xf]
      %v2509 = vld [vmem:[%s9 + $0x48] sm:$0xff]
      %v2510 = vld [vmem:[%s9 + $0x50] sm:$0xf]
      %v2511 = vld [vmem:[%s9 + $0x54] sm:$0xff]
      %v2512 = vld [vmem:[%s9 + $0x5c] sm:$0xf]
      %v2513 = vld [vmem:[%s9 + $0x60] sm:$0xff]
      %v2514 = vld [vmem:[%s9 + $0x68] sm:$0xf]
      %v2515 = vld [vmem:[%s9 + $0x6c] sm:$0xff]
      %v2516 = vld [vmem:[%s9 + $0x74] sm:$0xf]
      %v2517 = vld [vmem:[%s9 + $0x78] sm:$0xff]
      %v2518 = vld [vmem:[%s9 + $0x80] sm:$0xf]
      %v2519 = vld [vmem:[%s9 + $0x84] sm:$0xff]
      %v2520 = vld [vmem:[%s9 + $0x8c] sm:$0xf]
      %v2521 = vld [vmem:[%s9 + $0x90] sm:$0xff]
      %v2522 = vld [vmem:[%s9 + $0x98] sm:$0xf]
      %v2523 = vld [vmem:[%s9 + $0x9c] sm:$0xff]
      %v2524 = vld [vmem:[%s9 + $0xa4] sm:$0xf]
      %v2525 = vld [vmem:[%s9 + $0xa8] sm:$0xff]
      %v2526 = vld [vmem:[%s9 + $0xb0] sm:$0xf]
      %v2527 = vld [vmem:[%s9 + $0xb4] sm:$0xff]
      %v2528 = vld [vmem:[%s9 + $0xbc] sm:$0xf]
      %v2529 = vld [vmem:[%s9 + $0xc0] sm:$0xff]
      %v2530 = vld [vmem:[%s9 + $0xc8] sm:$0xf]
      %v2531 = vld [vmem:[%s9 + $0xcc] sm:$0xff]
      %v2532 = vld [vmem:[%s9 + $0xd4] sm:$0xf]
      %v2533 = vld [vmem:[%s9 + $0xd8] sm:$0xff]
      %v2534 = vld [vmem:[%s9 + $0xe0] sm:$0xf]
      %v2535 = vld [vmem:[%s9 + $0xe4] sm:$0xff]
      %v2536 = vld [vmem:[%s9 + $0xec] sm:$0xf]
      %v2537 = vld [vmem:[%s9 + $0xf0] sm:$0xff]
      %v2538 = vld [vmem:[%s9 + $0xf8] sm:$0xf]
      %v2539 = vld [vmem:[%s9 + $0xfc] sm:$0xff]
      %v2540 = vld [vmem:[%s9 + $0x104] sm:$0xf]
      %v2541 = vld [vmem:[%s9 + $0x108] sm:$0xff]
      %v2542 = vld [vmem:[%s9 + $0x110] sm:$0xf]
      %v2543 = vld [vmem:[%s9 + $0x114] sm:$0xff]
      %v2544 = vld [vmem:[%s9 + $0x11c] sm:$0xf]
      %v2545 = vld [vmem:[%s9 + $0x120] sm:$0xff]
      %v2546 = vld [vmem:[%s9 + $0x128] sm:$0xf]
      %v2547 = vld [vmem:[%s9 + $0x12c] sm:$0xff]
      %v2548 = vld [vmem:[%s9 + $0x134] sm:$0xf]
      %v2549 = vld [vmem:[%s9 + $0x138] sm:$0xff]
      %v2550 = vld [vmem:[%s9 + $0x140] sm:$0xf]
      %v2551 = vld [vmem:[%s9 + $0x144] sm:$0xff]
      %v2552 = vld [vmem:[%s9 + $0x14c] sm:$0xf]
      %v2553 = vld [vmem:[%s9 + $0x150] sm:$0xff]
      %v2554 = vld [vmem:[%s9 + $0x158] sm:$0xf]
      %v2555 = vld [vmem:[%s9 + $0x15c] sm:$0xff]
      %v2556 = vld [vmem:[%s9 + $0x164] sm:$0xf]
      %v2557 = vld [vmem:[%s9 + $0x168] sm:$0xff]
      %v2558 = vld [vmem:[%s9 + $0x170] sm:$0xf]
      %v2559 = vld [vmem:[%s9 + $0x174] sm:$0xff]
      %v2560 = vld [vmem:[%s9 + $0x17c] sm:$0xf]
      %v2561 = vld [vmem:[%s10] sm:$0x7]
      %v2563 = vlaneseq
      %v2564 = vshrl.u32 %v2563, 7
      %v2565 = vsub.s32 0, %v2564
      %v2566 = vrot.slane %v2561, %v2565
      %v2567 = vlaneseq
      %v2568 = vshrl.u32 %v2567, 7
      %v2569 = vsub.s32 1, %v2568
      %v2570 = vrot.slane %v2561, %v2569
      %v2571 = vlaneseq
      %v2572 = vshrl.u32 %v2571, 7
      %v2573 = vsub.s32 2, %v2572
      %v2574 = vrot.slane %v2561, %v2573
      %v2642 = vunpack.c.l.b16 %v2497
      %v2643 = vunpack.c.h.b16 %v2497
      %v2644 = vunpack.c.l.b16 %v2498
      %v2645 = vunpack.c.l.b16 %v2499
      %v2646 = vunpack.c.h.b16 %v2499
      %v2647 = vunpack.c.l.b16 %v2500
      %v2648 = vunpack.c.l.b16 %v2501
      %v2649 = vunpack.c.h.b16 %v2501
      %v2650 = vunpack.c.l.b16 %v2502
      %v2651 = vunpack.c.l.b16 %v2503
      %v2652 = vunpack.c.h.b16 %v2503
      %v2653 = vunpack.c.l.b16 %v2504
      %v2654 = vunpack.c.l.b16 %v2505
      %v2655 = vunpack.c.h.b16 %v2505
      %v2656 = vunpack.c.l.b16 %v2506
      %v2657 = vunpack.c.l.b16 %v2507
      %v2658 = vunpack.c.h.b16 %v2507
      %v2659 = vunpack.c.l.b16 %v2508
      %v2660 = vunpack.c.l.b16 %v2509
      %v2661 = vunpack.c.h.b16 %v2509
      %v2662 = vunpack.c.l.b16 %v2510
      %v2663 = vunpack.c.l.b16 %v2511
      %v2664 = vunpack.c.h.b16 %v2511
      %v2665 = vunpack.c.l.b16 %v2512
      %v2666 = vunpack.c.l.b16 %v2513
      %v2667 = vunpack.c.h.b16 %v2513
      %v2668 = vunpack.c.l.b16 %v2514
      %v2669 = vunpack.c.l.b16 %v2515
      %v2670 = vunpack.c.h.b16 %v2515
      %v2671 = vunpack.c.l.b16 %v2516
      %v2672 = vunpack.c.l.b16 %v2517
      %v2673 = vunpack.c.h.b16 %v2517
      %v2674 = vunpack.c.l.b16 %v2518
      %v2675 = vunpack.c.l.b16 %v2519
      %v2676 = vunpack.c.h.b16 %v2519
      %v2677 = vunpack.c.l.b16 %v2520
      %v2678 = vunpack.c.l.b16 %v2521
      %v2679 = vunpack.c.h.b16 %v2521
      %v2680 = vunpack.c.l.b16 %v2522
      %v2681 = vunpack.c.l.b16 %v2523
      %v2682 = vunpack.c.h.b16 %v2523
      %v2683 = vunpack.c.l.b16 %v2524
      %v2684 = vunpack.c.l.b16 %v2525
      %v2685 = vunpack.c.h.b16 %v2525
      %v2686 = vunpack.c.l.b16 %v2526
      %v2687 = vunpack.c.l.b16 %v2527
      %v2688 = vunpack.c.h.b16 %v2527
      %v2689 = vunpack.c.l.b16 %v2528
      %v2690 = vunpack.c.l.b16 %v2529
      %v2691 = vunpack.c.h.b16 %v2529
      %v2692 = vunpack.c.l.b16 %v2530
      %v2693 = vunpack.c.l.b16 %v2531
      %v2694 = vunpack.c.h.b16 %v2531
      %v2695 = vunpack.c.l.b16 %v2532
      %v2696 = vunpack.c.l.b16 %v2533
      %v2697 = vunpack.c.h.b16 %v2533
      %v2698 = vunpack.c.l.b16 %v2534
      %v2699 = vunpack.c.l.b16 %v2535
      %v2700 = vunpack.c.h.b16 %v2535
      %v2701 = vunpack.c.l.b16 %v2536
      %v2702 = vunpack.c.l.b16 %v2537
      %v2703 = vunpack.c.h.b16 %v2537
      %v2704 = vunpack.c.l.b16 %v2538
      %v2705 = vunpack.c.l.b16 %v2539
      %v2706 = vunpack.c.h.b16 %v2539
      %v2707 = vunpack.c.l.b16 %v2540
      %v2708 = vunpack.c.l.b16 %v2541
      %v2709 = vunpack.c.h.b16 %v2541
      %v2710 = vunpack.c.l.b16 %v2542
      %v2711 = vunpack.c.l.b16 %v2543
      %v2712 = vunpack.c.h.b16 %v2543
      %v2713 = vunpack.c.l.b16 %v2544
      %v2714 = vunpack.c.l.b16 %v2545
      %v2715 = vunpack.c.h.b16 %v2545
      %v2716 = vunpack.c.l.b16 %v2546
      %v2717 = vunpack.c.l.b16 %v2547
      %v2718 = vunpack.c.h.b16 %v2547
      %v2719 = vunpack.c.l.b16 %v2548
      %v2720 = vunpack.c.l.b16 %v2549
      %v2721 = vunpack.c.h.b16 %v2549
      %v2722 = vunpack.c.l.b16 %v2550
      %v2723 = vunpack.c.l.b16 %v2551
      %v2724 = vunpack.c.h.b16 %v2551
      %v2725 = vunpack.c.l.b16 %v2552
      %v2726 = vunpack.c.l.b16 %v2553
      %v2727 = vunpack.c.h.b16 %v2553
      %v2728 = vunpack.c.l.b16 %v2554
      %v2729 = vunpack.c.l.b16 %v2555
      %v2730 = vunpack.c.h.b16 %v2555
      %v2731 = vunpack.c.l.b16 %v2556
      %v2732 = vunpack.c.l.b16 %v2557
      %v2733 = vunpack.c.h.b16 %v2557
      %v2734 = vunpack.c.l.b16 %v2558
      %v2735 = vunpack.c.l.b16 %v2559
      %v2736 = vunpack.c.h.b16 %v2559
      %v2737 = vunpack.c.l.b16 %v2560
      %v2738 = vpack.c.b16 %v2645, %v2642
      %v2739 = vpack.c.b16 %v2646, %v2643
      %v2740 = vpack.c.b16 %v2647, %v2644
      %v2741 = vpack.c.b16 %v2651, %v2648
      %v2742 = vpack.c.b16 %v2652, %v2649
      %v2743 = vpack.c.b16 %v2653, %v2650
      %v2744 = vpack.c.b16 %v2657, %v2654
      %v2745 = vpack.c.b16 %v2658, %v2655
      %v2746 = vpack.c.b16 %v2659, %v2656
      %v2747 = vpack.c.b16 %v2663, %v2660
      %v2748 = vpack.c.b16 %v2664, %v2661
      %v2749 = vpack.c.b16 %v2665, %v2662
      %v2750 = vpack.c.b16 %v2669, %v2666
      %v2751 = vpack.c.b16 %v2670, %v2667
      %v2752 = vpack.c.b16 %v2671, %v2668
      %v2753 = vpack.c.b16 %v2675, %v2672
      %v2754 = vpack.c.b16 %v2676, %v2673
      %v2755 = vpack.c.b16 %v2677, %v2674
      %v2756 = vpack.c.b16 %v2681, %v2678
      %v2757 = vpack.c.b16 %v2682, %v2679
      %v2758 = vpack.c.b16 %v2683, %v2680
      %v2759 = vpack.c.b16 %v2687, %v2684
      %v2760 = vpack.c.b16 %v2688, %v2685
      %v2761 = vpack.c.b16 %v2689, %v2686
      %v2762 = vpack.c.b16 %v2693, %v2690
      %v2763 = vpack.c.b16 %v2694, %v2691
      %v2764 = vpack.c.b16 %v2695, %v2692
      %v2765 = vpack.c.b16 %v2699, %v2696
      %v2766 = vpack.c.b16 %v2700, %v2697
      %v2767 = vpack.c.b16 %v2701, %v2698
      %v2768 = vpack.c.b16 %v2705, %v2702
      %v2769 = vpack.c.b16 %v2706, %v2703
      %v2770 = vpack.c.b16 %v2707, %v2704
      %v2771 = vpack.c.b16 %v2711, %v2708
      %v2772 = vpack.c.b16 %v2712, %v2709
      %v2773 = vpack.c.b16 %v2713, %v2710
      %v2774 = vpack.c.b16 %v2717, %v2714
      %v2775 = vpack.c.b16 %v2718, %v2715
      %v2776 = vpack.c.b16 %v2719, %v2716
      %v2777 = vpack.c.b16 %v2723, %v2720
      %v2778 = vpack.c.b16 %v2724, %v2721
      %v2779 = vpack.c.b16 %v2725, %v2722
      %v2780 = vpack.c.b16 %v2729, %v2726
      %v2781 = vpack.c.b16 %v2730, %v2727
      %v2782 = vpack.c.b16 %v2731, %v2728
      %v2783 = vpack.c.b16 %v2735, %v2732
      %v2784 = vpack.c.b16 %v2736, %v2733
      %v2785 = vpack.c.b16 %v2737, %v2734
      %2834 = vmatprep.subr.bf16.mxu0 %v2760
      %2835 = vmatpush1.bf16.msra.mxu0 %v2759
      %2836 = vmatprep.subr.bf16.mxu0 %v2757
      %2837 = vmatpush1.bf16.msra.mxu0 %v2756
      %2838 = vmatprep.subr.bf16.mxu0 %v2754
      %2839 = vmatpush1.bf16.msra.mxu0 %v2753
      %2840 = vmatprep.subr.bf16.mxu0 %v2751
      %2841 = vmatpush1.bf16.msra.mxu0 %v2750
      %2842 = vmatprep.subr.bf16.mxu0 %v2748
      %2843 = vmatpush1.bf16.msra.mxu0 %v2747
      %2844 = vmatprep.subr.bf16.mxu0 %v2745
      %2845 = vmatpush1.bf16.msra.mxu0 %v2744
      %2846 = vmatprep.subr.bf16.mxu0 %v2742
      %2847 = vmatpush1.bf16.msra.mxu0 %v2741
      %2848 = vmatprep.subr.bf16.mxu0 %v2739
      %2849 = vmatpush1.bf16.msra.mxu0 %v2738
      %2850 = vmatprep.subr.bf16.mxu0 %v2784
      %2851 = vmatpush2.bf16.msra.mxu0 %v2783
      %2852 = vmatprep.subr.bf16.mxu0 %v2781
      %2853 = vmatpush2.bf16.msra.mxu0 %v2780
      %2854 = vmatprep.subr.bf16.mxu0 %v2778
      %2855 = vmatpush2.bf16.msra.mxu0 %v2777
      %2856 = vmatprep.subr.bf16.mxu0 %v2775
      %2857 = vmatpush2.bf16.msra.mxu0 %v2774
      %2858 = vmatprep.subr.bf16.mxu0 %v2772
      %2859 = vmatpush2.bf16.msra.mxu0 %v2771
      %2860 = vmatprep.subr.bf16.mxu0 %v2769
      %2861 = vmatpush2.bf16.msra.mxu0 %v2768
      %2862 = vmatprep.subr.bf16.mxu0 %v2766
      %2863 = vmatpush2.bf16.msra.mxu0 %v2765
      %2864 = vmatprep.subr.bf16.mxu0 %v2763
      %2865 = vmatpush2.bf16.msra.mxu0 %v2762
      %2866 = vmatprep.mubr.bf16.mxu0 %v2466
      %2867 = vmatmul.mubr.bf16.gmra.mxu0 %v2465
      %v2868 = vpop.f32.mrf.mxu0
      %v2869 = vadd.f32 %v2566, %v2868
      %v2870 = vpop.f32.mrf.mxu0
      %v2871 = vadd.f32 %v2570, %v2870
      %v2872 = vpop.f32.mrf.mxu0
      %v2873 = vadd.f32 %v2566, %v2872
      %v2874 = vpop.f32.mrf.mxu0
      %v2875 = vadd.f32 %v2570, %v2874
      %2876 = vmatprep.mubr.bf16.mxu0 %v2468
      %2877 = vmatmul.mubr.bf16.gmra.mxu0 %v2467
      %v2878 = vpop.f32.mrf.mxu0
      %v2879 = vadd.f32 %v2566, %v2878
      %v2880 = vpop.f32.mrf.mxu0
      %v2881 = vadd.f32 %v2570, %v2880
      %v2882 = vpop.f32.mrf.mxu0
      %v2883 = vadd.f32 %v2566, %v2882
      %v2884 = vpop.f32.mrf.mxu0
      %v2885 = vadd.f32 %v2570, %v2884
      %2886 = vmatprep.mubr.bf16.mxu0 %v2470
      %2887 = vmatmul.mubr.bf16.gmra.mxu0 %v2469
      %v2888 = vpop.f32.mrf.mxu0
      %v2889 = vadd.f32 %v2566, %v2888
      %v2890 = vpop.f32.mrf.mxu0
      %v2891 = vadd.f32 %v2570, %v2890
      %v2892 = vpop.f32.mrf.mxu0
      %v2893 = vadd.f32 %v2566, %v2892
      %v2894 = vpop.f32.mrf.mxu0
      %v2895 = vadd.f32 %v2570, %v2894
      %2896 = vmatprep.mubr.bf16.mxu0 %v2472
      %2897 = vmatmul.mubr.bf16.gmra.mxu0 %v2471
      %v2898 = vpop.f32.mrf.mxu0
      %v2899 = vadd.f32 %v2566, %v2898
      %v2900 = vpop.f32.mrf.mxu0
      %v2901 = vadd.f32 %v2570, %v2900
      %v2902 = vpop.f32.mrf.mxu0
      %v2903 = vadd.f32 %v2566, %v2902
      %v2904 = vpop.f32.mrf.mxu0
      %v2905 = vadd.f32 %v2570, %v2904
      %2906 = vmatprep.mubr.bf16.mxu0 %v2474
      %2907 = vmatmul.mubr.bf16.gmra.mxu0 %v2473
      %v2908 = vpop.f32.mrf.mxu0
      %v2909 = vadd.f32 %v2566, %v2908
      %v2910 = vpop.f32.mrf.mxu0
      %v2911 = vadd.f32 %v2570, %v2910
      %v2912 = vpop.f32.mrf.mxu0
      %v2913 = vadd.f32 %v2566, %v2912
      %v2914 = vpop.f32.mrf.mxu0
      %v2915 = vadd.f32 %v2570, %v2914
      %2916 = vmatprep.mubr.bf16.mxu0 %v2476
      %2917 = vmatmul.mubr.bf16.gmra.mxu0 %v2475
      %v2918 = vpop.f32.mrf.mxu0
      %v2919 = vadd.f32 %v2566, %v2918
      %v2920 = vpop.f32.mrf.mxu0
      %v2921 = vadd.f32 %v2570, %v2920
      %v2922 = vpop.f32.mrf.mxu0
      %v2923 = vadd.f32 %v2566, %v2922
      %v2924 = vpop.f32.mrf.mxu0
      %v2925 = vadd.f32 %v2570, %v2924
      %2926 = vmatprep.mubr.bf16.mxu0 %v2478
      %2927 = vmatmul.mubr.bf16.gmra.mxu0 %v2477
      %v2928 = vpop.f32.mrf.mxu0
      %v2929 = vadd.f32 %v2566, %v2928
      %v2930 = vpop.f32.mrf.mxu0
      %v2931 = vadd.f32 %v2570, %v2930
      %v2932 = vpop.f32.mrf.mxu0
      %v2933 = vadd.f32 %v2566, %v2932
      %v2934 = vpop.f32.mrf.mxu0
      %v2935 = vadd.f32 %v2570, %v2934
      %2936 = vmatprep.mubr.bf16.mxu0 %v2480
      %2937 = vmatmul.mubr.bf16.gmra.mxu0 %v2479
      %v2938 = vpop.f32.mrf.mxu0
      %v2939 = vadd.f32 %v2566, %v2938
      %v2940 = vpop.f32.mrf.mxu0
      %v2941 = vadd.f32 %v2570, %v2940
      %v2942 = vpop.f32.mrf.mxu0
      %v2943 = vadd.f32 %v2566, %v2942
      %v2944 = vpop.f32.mrf.mxu0
      %v2945 = vadd.f32 %v2570, %v2944
      %2946 = vmatprep.mubr.bf16.mxu0 %v2482
      %2947 = vmatmul.mubr.bf16.gmra.mxu0 %v2481
      %v2948 = vpop.f32.mrf.mxu0
      %v2949 = vadd.f32 %v2566, %v2948
      %v2950 = vpop.f32.mrf.mxu0
      %v2951 = vadd.f32 %v2570, %v2950
      %v2952 = vpop.f32.mrf.mxu0
      %v2953 = vadd.f32 %v2566, %v2952
      %v2954 = vpop.f32.mrf.mxu0
      %v2955 = vadd.f32 %v2570, %v2954
      %2956 = vmatprep.mubr.bf16.mxu0 %v2484
      %2957 = vmatmul.mubr.bf16.gmra.mxu0 %v2483
      %v2958 = vpop.f32.mrf.mxu0
      %v2959 = vadd.f32 %v2566, %v2958
      %v2960 = vpop.f32.mrf.mxu0
      %v2961 = vadd.f32 %v2570, %v2960
      %v2962 = vpop.f32.mrf.mxu0
      %v2963 = vadd.f32 %v2566, %v2962
      %v2964 = vpop.f32.mrf.mxu0
      %v2965 = vadd.f32 %v2570, %v2964
      %2966 = vmatprep.mubr.bf16.mxu0 %v2486
      %2967 = vmatmul.mubr.bf16.gmra.mxu0 %v2485
      %v2968 = vpop.f32.mrf.mxu0
      %v2969 = vadd.f32 %v2566, %v2968
      %v2970 = vpop.f32.mrf.mxu0
      %v2971 = vadd.f32 %v2570, %v2970
      %v2972 = vpop.f32.mrf.mxu0
      %v2973 = vadd.f32 %v2566, %v2972
      %v2974 = vpop.f32.mrf.mxu0
      %v2975 = vadd.f32 %v2570, %v2974
      %2976 = vmatprep.mubr.bf16.mxu0 %v2488
      %2977 = vmatmul.mubr.bf16.gmra.mxu0 %v2487
      %v2978 = vpop.f32.mrf.mxu0
      %v2979 = vadd.f32 %v2566, %v2978
      %v2980 = vpop.f32.mrf.mxu0
      %v2981 = vadd.f32 %v2570, %v2980
      %v2982 = vpop.f32.mrf.mxu0
      %v2983 = vadd.f32 %v2566, %v2982
      %v2984 = vpop.f32.mrf.mxu0
      %v2985 = vadd.f32 %v2570, %v2984
      %2986 = vmatprep.mubr.bf16.mxu0 %v2490
      %2987 = vmatmul.mubr.bf16.gmra.mxu0 %v2489
      %v2988 = vpop.f32.mrf.mxu0
      %v2989 = vadd.f32 %v2566, %v2988
      %v2990 = vpop.f32.mrf.mxu0
      %v2991 = vadd.f32 %v2570, %v2990
      %v2992 = vpop.f32.mrf.mxu0
      %v2993 = vadd.f32 %v2566, %v2992
      %v2994 = vpop.f32.mrf.mxu0
      %v2995 = vadd.f32 %v2570, %v2994
      %2996 = vmatprep.mubr.bf16.mxu0 %v2492
      %2997 = vmatmul.mubr.bf16.gmra.mxu0 %v2491
      %v2998 = vpop.f32.mrf.mxu0
      %v2999 = vadd.f32 %v2566, %v2998
      %v3000 = vpop.f32.mrf.mxu0
      %v3001 = vadd.f32 %v2570, %v3000
      %v3002 = vpop.f32.mrf.mxu0
      %v3003 = vadd.f32 %v2566, %v3002
      %v3004 = vpop.f32.mrf.mxu0
      %v3005 = vadd.f32 %v2570, %v3004
      %3006 = vmatprep.mubr.bf16.mxu0 %v2494
      %3007 = vmatmul.mubr.bf16.gmra.mxu0 %v2493
      %v3008 = vpop.f32.mrf.mxu0
      %v3009 = vadd.f32 %v2566, %v3008
      %v3010 = vpop.f32.mrf.mxu0
      %v3011 = vadd.f32 %v2570, %v3010
      %v3012 = vpop.f32.mrf.mxu0
      %v3013 = vadd.f32 %v2566, %v3012
      %v3014 = vpop.f32.mrf.mxu0
      %v3015 = vadd.f32 %v2570, %v3014
      %3016 = vmatprep.mubr.bf16.mxu0 %v2496
      %3017 = vmatmul.mubr.bf16.gmra.mxu0 %v2495
      %v3018 = vpop.f32.mrf.mxu0
      %v3019 = vadd.f32 %v2566, %v3018
      %v3020 = vpop.f32.mrf.mxu0
      %v3021 = vadd.f32 %v2570, %v3020
      %v3022 = vpop.f32.mrf.mxu0
      %v3023 = vadd.f32 %v2566, %v3022
      %v3024 = vpop.f32.mrf.mxu0
      %v3025 = vadd.f32 %v2570, %v3024
      %3026 = vdwg.mxu0
      %3027 = vmatprep.subr.bf16.mxu0 0
      %3028 = vmatpush1.bf16.msra.mxu0 %v2761
      %3029 = vmatprep.subr.bf16.mxu0 0
      %3030 = vmatpush1.bf16.msra.mxu0 %v2758
      %3031 = vmatprep.subr.bf16.mxu0 0
      %3032 = vmatpush1.bf16.msra.mxu0 %v2755
      %3033 = vmatprep.subr.bf16.mxu0 0
      %3034 = vmatpush1.bf16.msra.mxu0 %v2752
      %3035 = vmatprep.subr.bf16.mxu0 0
      %3036 = vmatpush1.bf16.msra.mxu0 %v2749
      %3037 = vmatprep.subr.bf16.mxu0 0
      %3038 = vmatpush1.bf16.msra.mxu0 %v2746
      %3039 = vmatprep.subr.bf16.mxu0 0
      %3040 = vmatpush1.bf16.msra.mxu0 %v2743
      %3041 = vmatprep.subr.bf16.mxu0 0
      %3042 = vmatpush1.bf16.msra.mxu0 %v2740
      %3043 = vmatprep.subr.bf16.mxu0 0
      %3044 = vmatpush2.bf16.msra.mxu0 %v2785
      %3045 = vmatprep.subr.bf16.mxu0 0
      %3046 = vmatpush2.bf16.msra.mxu0 %v2782
      %3047 = vmatprep.subr.bf16.mxu0 0
      %3048 = vmatpush2.bf16.msra.mxu0 %v2779
      %3049 = vmatprep.subr.bf16.mxu0 0
      %3050 = vmatpush2.bf16.msra.mxu0 %v2776
      %3051 = vmatprep.subr.bf16.mxu0 0
      %3052 = vmatpush2.bf16.msra.mxu0 %v2773
      %3053 = vmatprep.subr.bf16.mxu0 0
      %3054 = vmatpush2.bf16.msra.mxu0 %v2770
      %3055 = vmatprep.subr.bf16.mxu0 0
      %3056 = vmatpush2.bf16.msra.mxu0 %v2767
      %3057 = vmatprep.subr.bf16.mxu0 0
      %3058 = vmatpush2.bf16.msra.mxu0 %v2764
      %3059 = vmatprep.mubr.bf16.mxu0 %v2466
      %3060 = vmatmul.mubr.bf16.gmra.mxu0 %v2465
      %v3061 = vpop.f32.mrf.mxu0
      %v3062 = vadd.f32 %v2574, %v3061
      %v3063 = vpop.f32.mrf.mxu0
      %v3064 = vpop.f32.mrf.mxu0
      %v3065 = vadd.f32 %v2574, %v3064
      %v3066 = vpop.f32.mrf.mxu0
      %3067 = vmatprep.mubr.bf16.mxu0 %v2468
      %3068 = vmatmul.mubr.bf16.gmra.mxu0 %v2467
      %v3069 = vpop.f32.mrf.mxu0
      %v3070 = vadd.f32 %v2574, %v3069
      %v3071 = vpop.f32.mrf.mxu0
      %v3072 = vpop.f32.mrf.mxu0
      %v3073 = vadd.f32 %v2574, %v3072
      %v3074 = vpop.f32.mrf.mxu0
      %3075 = vmatprep.mubr.bf16.mxu0 %v2470
      %3076 = vmatmul.mubr.bf16.gmra.mxu0 %v2469
      %v3077 = vpop.f32.mrf.mxu0
      %v3078 = vadd.f32 %v2574, %v3077
      %v3079 = vpop.f32.mrf.mxu0
      %v3080 = vpop.f32.mrf.mxu0
      %v3081 = vadd.f32 %v2574, %v3080
      %v3082 = vpop.f32.mrf.mxu0
      %3083 = vmatprep.mubr.bf16.mxu0 %v2472
      %3084 = vmatmul.mubr.bf16.gmra.mxu0 %v2471
      %v3085 = vpop.f32.mrf.mxu0
      %v3086 = vadd.f32 %v2574, %v3085
      %v3087 = vpop.f32.mrf.mxu0
      %v3088 = vpop.f32.mrf.mxu0
      %v3089 = vadd.f32 %v2574, %v3088
      %v3090 = vpop.f32.mrf.mxu0
      %3091 = vmatprep.mubr.bf16.mxu0 %v2474
      %3092 = vmatmul.mubr.bf16.gmra.mxu0 %v2473
      %v3093 = vpop.f32.mrf.mxu0
      %v3094 = vadd.f32 %v2574, %v3093
      %v3095 = vpop.f32.mrf.mxu0
      %v3096 = vpop.f32.mrf.mxu0
      %v3097 = vadd.f32 %v2574, %v3096
      %v3098 = vpop.f32.mrf.mxu0
      %3099 = vmatprep.mubr.bf16.mxu0 %v2476
      %3100 = vmatmul.mubr.bf16.gmra.mxu0 %v2475
      %v3101 = vpop.f32.mrf.mxu0
      %v3102 = vadd.f32 %v2574, %v3101
      %v3103 = vpop.f32.mrf.mxu0
      %v3104 = vpop.f32.mrf.mxu0
      %v3105 = vadd.f32 %v2574, %v3104
      %v3106 = vpop.f32.mrf.mxu0
      %3107 = vmatprep.mubr.bf16.mxu0 %v2478
      %3108 = vmatmul.mubr.bf16.gmra.mxu0 %v2477
      %v3109 = vpop.f32.mrf.mxu0
      %v3110 = vadd.f32 %v2574, %v3109
      %v3111 = vpop.f32.mrf.mxu0
      %v3112 = vpop.f32.mrf.mxu0
      %v3113 = vadd.f32 %v2574, %v3112
      %v3114 = vpop.f32.mrf.mxu0
      %3115 = vmatprep.mubr.bf16.mxu0 %v2480
      %3116 = vmatmul.mubr.bf16.gmra.mxu0 %v2479
      %v3117 = vpop.f32.mrf.mxu0
      %v3118 = vadd.f32 %v2574, %v3117
      %v3119 = vpop.f32.mrf.mxu0
      %v3120 = vpop.f32.mrf.mxu0
      %v3121 = vadd.f32 %v2574, %v3120
      %v3122 = vpop.f32.mrf.mxu0
      %3123 = vmatprep.mubr.bf16.mxu0 %v2482
      %3124 = vmatmul.mubr.bf16.gmra.mxu0 %v2481
      %v3125 = vpop.f32.mrf.mxu0
      %v3126 = vadd.f32 %v2574, %v3125
      %v3127 = vpop.f32.mrf.mxu0
      %v3128 = vpop.f32.mrf.mxu0
      %v3129 = vadd.f32 %v2574, %v3128
      %v3130 = vpop.f32.mrf.mxu0
      %3131 = vmatprep.mubr.bf16.mxu0 %v2484
      %3132 = vmatmul.mubr.bf16.gmra.mxu0 %v2483
      %v3133 = vpop.f32.mrf.mxu0
      %v3134 = vadd.f32 %v2574, %v3133
      %v3135 = vpop.f32.mrf.mxu0
      %v3136 = vpop.f32.mrf.mxu0
      %v3137 = vadd.f32 %v2574, %v3136
      %v3138 = vpop.f32.mrf.mxu0
      %3139 = vmatprep.mubr.bf16.mxu0 %v2486
      %3140 = vmatmul.mubr.bf16.gmra.mxu0 %v2485
      %v3141 = vpop.f32.mrf.mxu0
      %v3142 = vadd.f32 %v2574, %v3141
      %v3143 = vpop.f32.mrf.mxu0
      %v3144 = vpop.f32.mrf.mxu0
      %v3145 = vadd.f32 %v2574, %v3144
      %v3146 = vpop.f32.mrf.mxu0
      %3147 = vmatprep.mubr.bf16.mxu0 %v2488
      %3148 = vmatmul.mubr.bf16.gmra.mxu0 %v2487
      %v3149 = vpop.f32.mrf.mxu0
      %v3150 = vadd.f32 %v2574, %v3149
      %v3151 = vpop.f32.mrf.mxu0
      %v3152 = vpop.f32.mrf.mxu0
      %v3153 = vadd.f32 %v2574, %v3152
      %v3154 = vpop.f32.mrf.mxu0
      %3155 = vmatprep.mubr.bf16.mxu0 %v2490
      %3156 = vmatmul.mubr.bf16.gmra.mxu0 %v2489
      %v3157 = vpop.f32.mrf.mxu0
      %v3158 = vadd.f32 %v2574, %v3157
      %v3159 = vpop.f32.mrf.mxu0
      %v3160 = vpop.f32.mrf.mxu0
      %v3161 = vadd.f32 %v2574, %v3160
      %v3162 = vpop.f32.mrf.mxu0
      %3163 = vmatprep.mubr.bf16.mxu0 %v2492
      %3164 = vmatmul.mubr.bf16.gmra.mxu0 %v2491
      %v3165 = vpop.f32.mrf.mxu0
      %v3166 = vadd.f32 %v2574, %v3165
      %v3167 = vpop.f32.mrf.mxu0
      %v3168 = vpop.f32.mrf.mxu0
      %v3169 = vadd.f32 %v2574, %v3168
      %v3170 = vpop.f32.mrf.mxu0
      %3171 = vmatprep.mubr.bf16.mxu0 %v2494
      %3172 = vmatmul.mubr.bf16.gmra.mxu0 %v2493
      %v3173 = vpop.f32.mrf.mxu0
      %v3174 = vadd.f32 %v2574, %v3173
      %v3175 = vpop.f32.mrf.mxu0
      %v3176 = vpop.f32.mrf.mxu0
      %v3177 = vadd.f32 %v2574, %v3176
      %v3178 = vpop.f32.mrf.mxu0
      %3179 = vmatprep.mubr.bf16.mxu0 %v2496
      %3180 = vmatmul.mubr.bf16.gmra.mxu0 %v2495
      %v3181 = vpop.f32.mrf.mxu0
      %v3182 = vadd.f32 %v2574, %v3181
      %v3183 = vpop.f32.mrf.mxu0
      %v3184 = vpop.f32.mrf.mxu0
      %v3185 = vadd.f32 %v2574, %v3184
      %v3186 = vpop.f32.mrf.mxu0
      %3187 = vdwg.mxu0
      %v3188 = vtanh.pop %v2869
      %v3189 = vtanh.pop %v2871
      %v3190 = vtanh.pop %v3062
      %v3191 = vtanh.pop %v2873
      %v3192 = vtanh.pop %v2875
      %v3193 = vtanh.pop %v3065
      %v3194 = vtanh.pop %v2879
      %v3195 = vtanh.pop %v2881
      %v3196 = vtanh.pop %v3070
      %v3197 = vtanh.pop %v2883
      %v3198 = vtanh.pop %v2885
      %v3199 = vtanh.pop %v3073
      %v3200 = vtanh.pop %v2889
      %v3201 = vtanh.pop %v2891
      %v3202 = vtanh.pop %v3078
      %v3203 = vtanh.pop %v2893
      %v3204 = vtanh.pop %v2895
      %v3205 = vtanh.pop %v3081
      %v3206 = vtanh.pop %v2899
      %v3207 = vtanh.pop %v2901
      %v3208 = vtanh.pop %v3086
      %v3209 = vtanh.pop %v2903
      %v3210 = vtanh.pop %v2905
      %v3211 = vtanh.pop %v3089
      %v3212 = vtanh.pop %v2909
      %v3213 = vtanh.pop %v2911
      %v3214 = vtanh.pop %v3094
      %v3215 = vtanh.pop %v2913
      %v3216 = vtanh.pop %v2915
      %v3217 = vtanh.pop %v3097
      %v3218 = vtanh.pop %v2919
      %v3219 = vtanh.pop %v2921
      %v3220 = vtanh.pop %v3102
      %v3221 = vtanh.pop %v2923
      %v3222 = vtanh.pop %v2925
      %v3223 = vtanh.pop %v3105
      %v3224 = vtanh.pop %v2929
      %v3225 = vtanh.pop %v2931
      %v3226 = vtanh.pop %v3110
      %v3227 = vtanh.pop %v2933
      %v3228 = vtanh.pop %v2935
      %v3229 = vtanh.pop %v3113
      %v3230 = vtanh.pop %v2939
      %v3231 = vtanh.pop %v2941
      %v3232 = vtanh.pop %v3118
      %v3233 = vtanh.pop %v2943
      %v3234 = vtanh.pop %v2945
      %v3235 = vtanh.pop %v3121
      %v3236 = vtanh.pop %v2949
      %v3237 = vtanh.pop %v2951
      %v3238 = vtanh.pop %v3126
      %v3239 = vtanh.pop %v2953
      %v3240 = vtanh.pop %v2955
      %v3241 = vtanh.pop %v3129
      %v3242 = vtanh.pop %v2959
      %v3243 = vtanh.pop %v2961
      %v3244 = vtanh.pop %v3134
      %v3245 = vtanh.pop %v2963
      %v3246 = vtanh.pop %v2965
      %v3247 = vtanh.pop %v3137
      %v3248 = vtanh.pop %v2969
      %v3249 = vtanh.pop %v2971
      %v3250 = vtanh.pop %v3142
      %v3251 = vtanh.pop %v2973
      %v3252 = vtanh.pop %v2975
      %v3253 = vtanh.pop %v3145
      %v3254 = vtanh.pop %v2979
      %v3255 = vtanh.pop %v2981
      %v3256 = vtanh.pop %v3150
      %v3257 = vtanh.pop %v2983
      %v3258 = vtanh.pop %v2985
      %v3259 = vtanh.pop %v3153
      %v3260 = vtanh.pop %v2989
      %v3261 = vtanh.pop %v2991
      %v3262 = vtanh.pop %v3158
      %v3263 = vtanh.pop %v2993
      %v3264 = vtanh.pop %v2995
      %v3265 = vtanh.pop %v3161
      %v3266 = vtanh.pop %v2999
      %v3267 = vtanh.pop %v3001
      %v3268 = vtanh.pop %v3166
      %v3269 = vtanh.pop %v3003
      %v3270 = vtanh.pop %v3005
      %v3271 = vtanh.pop %v3169
      %v3272 = vtanh.pop %v3009
      %v3273 = vtanh.pop %v3011
      %v3274 = vtanh.pop %v3174
      %v3275 = vtanh.pop %v3013
      %v3276 = vtanh.pop %v3015
      %v3277 = vtanh.pop %v3177
      %v3278 = vtanh.pop %v3019
      %v3279 = vtanh.pop %v3021
      %v3280 = vtanh.pop %v3182
      %v3281 = vtanh.pop %v3023
      %v3282 = vtanh.pop %v3025
      %v3283 = vtanh.pop %v3185
      %v3284 = vpack.c.bf16 %v3191, %v3188
      %v3285 = vpack.c.bf16 %v3192, %v3189
      %v3286 = vpack.c.bf16 %v3193, %v3190
      %v3287 = vpack.c.bf16 %v3197, %v3194
      %v3288 = vpack.c.bf16 %v3198, %v3195
      %v3289 = vpack.c.bf16 %v3199, %v3196
      %v3290 = vpack.c.bf16 %v3203, %v3200
      %v3291 = vpack.c.bf16 %v3204, %v3201
      %v3292 = vpack.c.bf16 %v3205, %v3202
      %v3293 = vpack.c.bf16 %v3209, %v3206
      %v3294 = vpack.c.bf16 %v3210, %v3207
      %v3295 = vpack.c.bf16 %v3211, %v3208
      %v3296 = vpack.c.bf16 %v3215, %v3212
      %v3297 = vpack.c.bf16 %v3216, %v3213
      %v3298 = vpack.c.bf16 %v3217, %v3214
      %v3299 = vpack.c.bf16 %v3221, %v3218
      %v3300 = vpack.c.bf16 %v3222, %v3219
      %v3301 = vpack.c.bf16 %v3223, %v3220
      %v3302 = vpack.c.bf16 %v3227, %v3224
      %v3303 = vpack.c.bf16 %v3228, %v3225
      %v3304 = vpack.c.bf16 %v3229, %v3226
      %v3305 = vpack.c.bf16 %v3233, %v3230
      %v3306 = vpack.c.bf16 %v3234, %v3231
      %v3307 = vpack.c.bf16 %v3235, %v3232
      %v3308 = vpack.c.bf16 %v3239, %v3236
      %v3309 = vpack.c.bf16 %v3240, %v3237
      %v3310 = vpack.c.bf16 %v3241, %v3238
      %v3311 = vpack.c.bf16 %v3245, %v3242
      %v3312 = vpack.c.bf16 %v3246, %v3243
      %v3313 = vpack.c.bf16 %v3247, %v3244
      %v3314 = vpack.c.bf16 %v3251, %v3248
      %v3315 = vpack.c.bf16 %v3252, %v3249
      %v3316 = vpack.c.bf16 %v3253, %v3250
      %v3317 = vpack.c.bf16 %v3257, %v3254
      %v3318 = vpack.c.bf16 %v3258, %v3255
      %v3319 = vpack.c.bf16 %v3259, %v3256
      %v3320 = vpack.c.bf16 %v3263, %v3260
      %v3321 = vpack.c.bf16 %v3264, %v3261
      %v3322 = vpack.c.bf16 %v3265, %v3262
      %v3323 = vpack.c.bf16 %v3269, %v3266
      %v3324 = vpack.c.bf16 %v3270, %v3267
      %v3325 = vpack.c.bf16 %v3271, %v3268
      %v3326 = vpack.c.bf16 %v3275, %v3272
      %v3327 = vpack.c.bf16 %v3276, %v3273
      %v3328 = vpack.c.bf16 %v3277, %v3274
      %v3329 = vpack.c.bf16 %v3281, %v3278
      %v3330 = vpack.c.bf16 %v3282, %v3279
      %v3331 = vpack.c.bf16 %v3283, %v3280
      %v3380 = vunpack.c.l.b16 %v3284
      %v3381 = vunpack.c.l.b16 %v3285
      %v3382 = vunpack.c.l.b16 %v3286
      %v3383 = vunpack.c.h.b16 %v3284
      %v3384 = vunpack.c.h.b16 %v3285
      %v3385 = vunpack.c.h.b16 %v3286
      %v3386 = vunpack.c.l.b16 %v3287
      %v3387 = vunpack.c.l.b16 %v3288
      %v3388 = vunpack.c.l.b16 %v3289
      %v3389 = vunpack.c.h.b16 %v3287
      %v3390 = vunpack.c.h.b16 %v3288
      %v3391 = vunpack.c.h.b16 %v3289
      %v3392 = vunpack.c.l.b16 %v3290
      %v3393 = vunpack.c.l.b16 %v3291
      %v3394 = vunpack.c.l.b16 %v3292
      %v3395 = vunpack.c.h.b16 %v3290
      %v3396 = vunpack.c.h.b16 %v3291
      %v3397 = vunpack.c.h.b16 %v3292
      %v3398 = vunpack.c.l.b16 %v3293
      %v3399 = vunpack.c.l.b16 %v3294
      %v3400 = vunpack.c.l.b16 %v3295
      %v3401 = vunpack.c.h.b16 %v3293
      %v3402 = vunpack.c.h.b16 %v3294
      %v3403 = vunpack.c.h.b16 %v3295
      %v3404 = vunpack.c.l.b16 %v3296
      %v3405 = vunpack.c.l.b16 %v3297
      %v3406 = vunpack.c.l.b16 %v3298
      %v3407 = vunpack.c.h.b16 %v3296
      %v3408 = vunpack.c.h.b16 %v3297
      %v3409 = vunpack.c.h.b16 %v3298
      %v3410 = vunpack.c.l.b16 %v3299
      %v3411 = vunpack.c.l.b16 %v3300
      %v3412 = vunpack.c.l.b16 %v3301
      %v3413 = vunpack.c.h.b16 %v3299
      %v3414 = vunpack.c.h.b16 %v3300
      %v3415 = vunpack.c.h.b16 %v3301
      %v3416 = vunpack.c.l.b16 %v3302
      %v3417 = vunpack.c.l.b16 %v3303
      %v3418 = vunpack.c.l.b16 %v3304
      %v3419 = vunpack.c.h.b16 %v3302
      %v3420 = vunpack.c.h.b16 %v3303
      %v3421 = vunpack.c.h.b16 %v3304
      %v3422 = vunpack.c.l.b16 %v3305
      %v3423 = vunpack.c.l.b16 %v3306
      %v3424 = vunpack.c.l.b16 %v3307
      %v3425 = vunpack.c.h.b16 %v3305
      %v3426 = vunpack.c.h.b16 %v3306
      %v3427 = vunpack.c.h.b16 %v3307
      %v3428 = vunpack.c.l.b16 %v3308
      %v3429 = vunpack.c.l.b16 %v3309
      %v3430 = vunpack.c.l.b16 %v3310
      %v3431 = vunpack.c.h.b16 %v3308
      %v3432 = vunpack.c.h.b16 %v3309
      %v3433 = vunpack.c.h.b16 %v3310
      %v3434 = vunpack.c.l.b16 %v3311
      %v3435 = vunpack.c.l.b16 %v3312
      %v3436 = vunpack.c.l.b16 %v3313
      %v3437 = vunpack.c.h.b16 %v3311
      %v3438 = vunpack.c.h.b16 %v3312
      %v3439 = vunpack.c.h.b16 %v3313
      %v3440 = vunpack.c.l.b16 %v3314
      %v3441 = vunpack.c.l.b16 %v3315
      %v3442 = vunpack.c.l.b16 %v3316
      %v3443 = vunpack.c.h.b16 %v3314
      %v3444 = vunpack.c.h.b16 %v3315
      %v3445 = vunpack.c.h.b16 %v3316
      %v3446 = vunpack.c.l.b16 %v3317
      %v3447 = vunpack.c.l.b16 %v3318
      %v3448 = vunpack.c.l.b16 %v3319
      %v3449 = vunpack.c.h.b16 %v3317
      %v3450 = vunpack.c.h.b16 %v3318
      %v3451 = vunpack.c.h.b16 %v3319
      %v3452 = vunpack.c.l.b16 %v3320
      %v3453 = vunpack.c.l.b16 %v3321
      %v3454 = vunpack.c.l.b16 %v3322
      %v3455 = vunpack.c.h.b16 %v3320
      %v3456 = vunpack.c.h.b16 %v3321
      %v3457 = vunpack.c.h.b16 %v3322
      %v3458 = vunpack.c.l.b16 %v3323
      %v3459 = vunpack.c.l.b16 %v3324
      %v3460 = vunpack.c.l.b16 %v3325
      %v3461 = vunpack.c.h.b16 %v3323
      %v3462 = vunpack.c.h.b16 %v3324
      %v3463 = vunpack.c.h.b16 %v3325
      %v3464 = vunpack.c.l.b16 %v3326
      %v3465 = vunpack.c.l.b16 %v3327
      %v3466 = vunpack.c.l.b16 %v3328
      %v3467 = vunpack.c.h.b16 %v3326
      %v3468 = vunpack.c.h.b16 %v3327
      %v3469 = vunpack.c.h.b16 %v3328
      %v3470 = vunpack.c.l.b16 %v3329
      %v3471 = vunpack.c.l.b16 %v3330
      %v3472 = vunpack.c.l.b16 %v3331
      %v3473 = vunpack.c.h.b16 %v3329
      %v3474 = vunpack.c.h.b16 %v3330
      %v3475 = vunpack.c.h.b16 %v3331
      %v3476 = vpack.c.b16 %v3381, %v3380
      %v3477 = vpack.c.b16 %v3382, %v3382
      %v3478 = vpack.c.b16 %v3384, %v3383
      %v3479 = vpack.c.b16 %v3385, %v3385
      %v3480 = vpack.c.b16 %v3387, %v3386
      %v3481 = vpack.c.b16 %v3388, %v3388
      %v3482 = vpack.c.b16 %v3390, %v3389
      %v3483 = vpack.c.b16 %v3391, %v3391
      %v3484 = vpack.c.b16 %v3393, %v3392
      %v3485 = vpack.c.b16 %v3394, %v3394
      %v3486 = vpack.c.b16 %v3396, %v3395
      %v3487 = vpack.c.b16 %v3397, %v3397
      %v3488 = vpack.c.b16 %v3399, %v3398
      %v3489 = vpack.c.b16 %v3400, %v3400
      %v3490 = vpack.c.b16 %v3402, %v3401
      %v3491 = vpack.c.b16 %v3403, %v3403
      %v3492 = vpack.c.b16 %v3405, %v3404
      %v3493 = vpack.c.b16 %v3406, %v3406
      %v3494 = vpack.c.b16 %v3408, %v3407
      %v3495 = vpack.c.b16 %v3409, %v3409
      %v3496 = vpack.c.b16 %v3411, %v3410
      %v3497 = vpack.c.b16 %v3412, %v3412
      %v3498 = vpack.c.b16 %v3414, %v3413
      %v3499 = vpack.c.b16 %v3415, %v3415
      %v3500 = vpack.c.b16 %v3417, %v3416
      %v3501 = vpack.c.b16 %v3418, %v3418
      %v3502 = vpack.c.b16 %v3420, %v3419
      %v3503 = vpack.c.b16 %v3421, %v3421
      %v3504 = vpack.c.b16 %v3423, %v3422
      %v3505 = vpack.c.b16 %v3424, %v3424
      %v3506 = vpack.c.b16 %v3426, %v3425
      %v3507 = vpack.c.b16 %v3427, %v3427
      %v3508 = vpack.c.b16 %v3429, %v3428
      %v3509 = vpack.c.b16 %v3430, %v3430
      %v3510 = vpack.c.b16 %v3432, %v3431
      %v3511 = vpack.c.b16 %v3433, %v3433
      %v3512 = vpack.c.b16 %v3435, %v3434
      %v3513 = vpack.c.b16 %v3436, %v3436
      %v3514 = vpack.c.b16 %v3438, %v3437
      %v3515 = vpack.c.b16 %v3439, %v3439
      %v3516 = vpack.c.b16 %v3441, %v3440
      %v3517 = vpack.c.b16 %v3442, %v3442
      %v3518 = vpack.c.b16 %v3444, %v3443
      %v3519 = vpack.c.b16 %v3445, %v3445
      %v3520 = vpack.c.b16 %v3447, %v3446
      %v3521 = vpack.c.b16 %v3448, %v3448
      %v3522 = vpack.c.b16 %v3450, %v3449
      %v3523 = vpack.c.b16 %v3451, %v3451
      %v3524 = vpack.c.b16 %v3453, %v3452
      %v3525 = vpack.c.b16 %v3454, %v3454
      %v3526 = vpack.c.b16 %v3456, %v3455
      %v3527 = vpack.c.b16 %v3457, %v3457
      %v3528 = vpack.c.b16 %v3459, %v3458
      %v3529 = vpack.c.b16 %v3460, %v3460
      %v3530 = vpack.c.b16 %v3462, %v3461
      %v3531 = vpack.c.b16 %v3463, %v3463
      %v3532 = vpack.c.b16 %v3465, %v3464
      %v3533 = vpack.c.b16 %v3466, %v3466
      %v3534 = vpack.c.b16 %v3468, %v3467
      %v3535 = vpack.c.b16 %v3469, %v3469
      %v3536 = vpack.c.b16 %v3471, %v3470
      %v3537 = vpack.c.b16 %v3472, %v3472
      %v3538 = vpack.c.b16 %v3474, %v3473
      %v3539 = vpack.c.b16 %v3475, %v3475
      %3604 = vst [vmem:[%s393] sm:$0xff] %v3476
      %vm3605 = vcmask 355328
      %3606 = vst.msk [vmem:[%s393 + $0x8] sm:$0xf] %vm3605, %v3477
      %3607 = vst [vmem:[%s393 + $0xc] sm:$0xff] %v3478
      %3608 = vst.msk [vmem:[%s393 + $0x14] sm:$0xf] %vm3605, %v3479
      %3609 = vst [vmem:[%s393 + $0x18] sm:$0xff] %v3480
      %3610 = vst.msk [vmem:[%s393 + $0x20] sm:$0xf] %vm3605, %v3481
      %3611 = vst [vmem:[%s393 + $0x24] sm:$0xff] %v3482
      %3612 = vst.msk [vmem:[%s393 + $0x2c] sm:$0xf] %vm3605, %v3483
      %3613 = vst [vmem:[%s393 + $0x30] sm:$0xff] %v3484
      %3614 = vst.msk [vmem:[%s393 + $0x38] sm:$0xf] %vm3605, %v3485
      %3615 = vst [vmem:[%s393 + $0x3c] sm:$0xff] %v3486
      %3616 = vst.msk [vmem:[%s393 + $0x44] sm:$0xf] %vm3605, %v3487
      %3617 = vst [vmem:[%s393 + $0x48] sm:$0xff] %v3488
      %3618 = vst.msk [vmem:[%s393 + $0x50] sm:$0xf] %vm3605, %v3489
      %3619 = vst [vmem:[%s393 + $0x54] sm:$0xff] %v3490
      %3620 = vst.msk [vmem:[%s393 + $0x5c] sm:$0xf] %vm3605, %v3491
      %3621 = vst [vmem:[%s393 + $0x60] sm:$0xff] %v3492
      %3622 = vst.msk [vmem:[%s393 + $0x68] sm:$0xf] %vm3605, %v3493
      %3623 = vst [vmem:[%s393 + $0x6c] sm:$0xff] %v3494
      %3624 = vst.msk [vmem:[%s393 + $0x74] sm:$0xf] %vm3605, %v3495
      %3625 = vst [vmem:[%s393 + $0x78] sm:$0xff] %v3496
      %3626 = vst.msk [vmem:[%s393 + $0x80] sm:$0xf] %vm3605, %v3497
      %3627 = vst [vmem:[%s393 + $0x84] sm:$0xff] %v3498
      %3628 = vst.msk [vmem:[%s393 + $0x8c] sm:$0xf] %vm3605, %v3499
      %3629 = vst [vmem:[%s393 + $0x90] sm:$0xff] %v3500
      %3630 = vst.msk [vmem:[%s393 + $0x98] sm:$0xf] %vm3605, %v3501
      %3631 = vst [vmem:[%s393 + $0x9c] sm:$0xff] %v3502
      %3632 = vst.msk [vmem:[%s393 + $0xa4] sm:$0xf] %vm3605, %v3503
      %3633 = vst [vmem:[%s393 + $0xa8] sm:$0xff] %v3504
      %3634 = vst.msk [vmem:[%s393 + $0xb0] sm:$0xf] %vm3605, %v3505
      %3635 = vst [vmem:[%s393 + $0xb4] sm:$0xff] %v3506
      %3636 = vst.msk [vmem:[%s393 + $0xbc] sm:$0xf] %vm3605, %v3507
      %3637 = vst [vmem:[%s393 + $0xc0] sm:$0xff] %v3508
      %3638 = vst.msk [vmem:[%s393 + $0xc8] sm:$0xf] %vm3605, %v3509
      %3639 = vst [vmem:[%s393 + $0xcc] sm:$0xff] %v3510
      %3640 = vst.msk [vmem:[%s393 + $0xd4] sm:$0xf] %vm3605, %v3511
      %3641 = vst [vmem:[%s393 + $0xd8] sm:$0xff] %v3512
      %3642 = vst.msk [vmem:[%s393 + $0xe0] sm:$0xf] %vm3605, %v3513
      %3643 = vst [vmem:[%s393 + $0xe4] sm:$0xff] %v3514
      %3644 = vst.msk [vmem:[%s393 + $0xec] sm:$0xf] %vm3605, %v3515
      %3645 = vst [vmem:[%s393 + $0xf0] sm:$0xff] %v3516
      %3646 = vst.msk [vmem:[%s393 + $0xf8] sm:$0xf] %vm3605, %v3517
      %3647 = vst [vmem:[%s393 + $0xfc] sm:$0xff] %v3518
      %3648 = vst.msk [vmem:[%s393 + $0x104] sm:$0xf] %vm3605, %v3519
      %3649 = vst [vmem:[%s393 + $0x108] sm:$0xff] %v3520
      %3650 = vst.msk [vmem:[%s393 + $0x110] sm:$0xf] %vm3605, %v3521
      %3651 = vst [vmem:[%s393 + $0x114] sm:$0xff] %v3522
      %3652 = vst.msk [vmem:[%s393 + $0x11c] sm:$0xf] %vm3605, %v3523
      %3653 = vst [vmem:[%s393 + $0x120] sm:$0xff] %v3524
      %3654 = vst.msk [vmem:[%s393 + $0x128] sm:$0xf] %vm3605, %v3525
      %3655 = vst [vmem:[%s393 + $0x12c] sm:$0xff] %v3526
      %3656 = vst.msk [vmem:[%s393 + $0x134] sm:$0xf] %vm3605, %v3527
      %3657 = vst [vmem:[%s393 + $0x138] sm:$0xff] %v3528
      %3658 = vst.msk [vmem:[%s393 + $0x140] sm:$0xf] %vm3605, %v3529
      %3659 = vst [vmem:[%s393 + $0x144] sm:$0xff] %v3530
      %3660 = vst.msk [vmem:[%s393 + $0x14c] sm:$0xf] %vm3605, %v3531
      %3661 = vst [vmem:[%s393 + $0x150] sm:$0xff] %v3532
      %3662 = vst.msk [vmem:[%s393 + $0x158] sm:$0xf] %vm3605, %v3533
      %3663 = vst [vmem:[%s393 + $0x15c] sm:$0xff] %v3534
      %3664 = vst.msk [vmem:[%s393 + $0x164] sm:$0xf] %vm3605, %v3535
      %3665 = vst [vmem:[%s393 + $0x168] sm:$0xff] %v3536
      %3666 = vst.msk [vmem:[%s393 + $0x170] sm:$0xf] %vm3605, %v3537
      %3667 = vst [vmem:[%s393 + $0x174] sm:$0xff] %v3538
      %3668 = vst.msk [vmem:[%s393 + $0x17c] sm:$0xf] %vm3605, %v3539
      %s3669 = smul.u32 32, %s22
      %p3670 = scmp.lt.s32.totalorder %s3669, 63
      %s3671 = scalar_select %p3670, %s3669, 63
      %s3672 = smul.addr %s3671, 3
      %s3673 = smul.addr %s3672, 4
      %s3674 = scalar_lea.vmem %s11, %s3673
      // Predicated region
      $region65: #{tpu_custom_call.1} parent=63 // pred_check
        %p3675 = pneg %p276
      $region66: #{tpu_custom_call.1} parent=63 // pred_check_branch
        %3677 = sbr.rel (%p3675) target = $region68
      $region67: #{tpu_custom_call.1} parent=63 // pred_region
        %s3678 = smul.u32 32, %s22
      $region68: #{tpu_custom_call.1} parent=63 // pred_fallthru
        _
    $region64: #{tpu_custom_call.1} parent=5 // pred_fallthru
      _
    %p3679 = scmp.le.s32.totalorder 2, %s17
    // Predicated region
    $region69: #{tpu_custom_call.1} parent=5 // pred_check
      %p3680 = pneg %p3679
    $region70: #{tpu_custom_call.1} parent=5 // pred_check_branch
      %3682 = sbr.rel (%p3680) target = $region72
    $region71: #{tpu_custom_call.1} parent=5 // pred_region
      %s3683 = ssub.s32 %s17, 2
      // Predicated region
      $region73: #{tpu_custom_call.1} parent=71 // pred_check
        %p3684 = pneg %p282
      $region74: #{tpu_custom_call.1} parent=71 // pred_check_branch
        %3686 = sbr.rel (%p3684) target = $region76
      $region75: #{tpu_custom_call.1} parent=71 // pred_region
        %s3687 = smul.u32 32, %s23
        %p3688 = scmp.lt.s32.totalorder %s3687, 63
        %s3689 = scalar_select %p3688, %s3687, 63
        %s3690 = smul.addr %s3689, 3
        %s3691 = smul.addr %s3690, 4
        %s3692 = scalar_lea.vmem %s11, %s3691
      $region76: #{tpu_custom_call.1} parent=71 // pred_fallthru
        _
    $region72: #{tpu_custom_call.1} parent=5 // pred_fallthru
      _
  $region6: #{tpu_custom_call.1} parent=0 // loop_footer
    %s21 = sadd.s32 1, %s17
  $region7: #{tpu_custom_call.1} parent=0 // loop_footer_branch
    %16 = sbr.rel target = $region3
  $region8: #{tpu_custom_call.1} parent=0 // loop_exit
    _

</llo_original>
